<compile_context>
chip_gen: v6e
topology: v6e:2x2x1
jax: 0.10.0
libtpu: 0.0.40
codegen_flags: <defaults>
</compile_context>

<pallas_src>
import functools

import jax
import jax.numpy as jnp
from jax import lax
from jax.experimental import pallas as pl
from jax.experimental.pallas import tpu as pltpu

_VMEM = pl.BlockSpec(memory_space=pltpu.MemorySpace.VMEM)


def _round_up(x, m):
    return ((x + m - 1) // m) * m


# --------------------- Fused GAT + LSTM + FC kernel (single launch) --------------------- #
def _gat_lstm_kernel(nft_ref, eat_ref, ewt_ref, ebt_ref, pmat_ref, dstmask_ref,
                     srcmask_ref, sel_ref, linw_ref, linew_ref, amsrc_ref,
                     amdst_ref, amedge_ref, gbias_ref, wg_ref, seq_ref,
                     wih0s_ref, wihr_ref, whh_ref, b_ref, fcw_ref, fcb_ref,
                     out_ref, gin_ref,
                     *, num_heads, c_out, hd, t_len, b_pad, num_layers,
                     num_gat_layers):
    # nft:     [F, N]          node features, transposed
    # eat:     [De, Ep]        edge attrs, transposed, lane padded (pad cols zero)
    # ewt/ebt: [C, De]/[C, 1]  edge_attr_transform Linear
    # pmat:    [Ep, E2p]       placement matrix (identity | self-loop mean | zero pad)
    # dstmask: [N, E2p]        dstmask[n,e]=1 iff dst(e)==n (incl. self loops)
    # srcmask: [N, E2p]        srcmask[n,e]=1 iff src(e)==n
    # sel:     [Bp, N]         node_indices one-hot (padded rows zero)
    # linw:    [2, H*C, F]     GAT lin weights (PyG layout, no bias)
    # linew:   [2, H*C, C]     GAT lin_edge weights
    # am*:     [2, H, H*C]     "transposed block-diag" attention vectors
    # gbias:   [2, 1, C]
    # wg:      [2, C, 4H]      layer-0 W_ih slices for the two GAT feature blocks
    # seq:     [T*Bp, S]       time-major sequences, batch zero-padded, flattened
    # wih0s:   [S, 4H]         layer-0 W_ih (sequence part, transposed)
    # wihr:    [max(L-1,1), 4H, 4H]  layers>=1 W_ih (transposed, rows >= hd zero)
    # whh:     [L, 4H, 4H]     W_hh (transposed, rows >= hd zero)
    # b:       [L, 1, 4H]      b_ih + b_hh
    # fcw/fcb: [4H, OUTW]/[1, OUTW]  fc (rows >= hd / cols >= 1 zero)
    # out:     [Bp, OUTW]      lane-dense final output
    # gin:     VMEM scratch [T*Bp, 4H]
    f32 = jnp.float32
    g4 = 4 * hd
    n_nodes = dstmask_ref.shape[0]
    e2p = dstmask_ref.shape[1]

    nft = nft_ref[...]
    dstmask = dstmask_ref[...]
    srcmask = srcmask_ref[...]

    # -------------------------------- GAT pipeline -------------------------------- #
    # edge_attr_transform Linear (bias leaks into padded columns; pmat's zero rows
    # null them in the very next matmul).
    teat = jnp.dot(ewt_ref[...], eat_ref[...], preferred_element_type=f32) + ebt_ref[...]
    # add_self_loops(fill_value='mean') + edge-axis padding as ONE placement matmul.
    ea2t = jnp.dot(teat, pmat_ref[...], preferred_element_type=f32)          # [C, E2p]

    gat_nodes = jnp.zeros((n_nodes, g4), f32)
    for l in range(num_gat_layers):                                          # static (2)
        xpt = jnp.dot(linw_ref[l], nft, preferred_element_type=f32)          # [HC, N]
        ept = jnp.dot(linew_ref[l], ea2t, preferred_element_type=f32)        # [HC, E2p]
        a_src = jnp.dot(amsrc_ref[l], xpt, preferred_element_type=f32)       # [H, N]
        a_dst = jnp.dot(amdst_ref[l], xpt, preferred_element_type=f32)       # [H, N]
        a_edge = jnp.dot(amedge_ref[l], ept, preferred_element_type=f32)     # [H, E2p]
        # gather-free per-edge logits: alpha_src[src] + alpha_dst[dst] + alpha_edge
        logits = (jnp.dot(a_src, srcmask, preferred_element_type=f32)
                  + jnp.dot(a_dst, dstmask, preferred_element_type=f32)
                  + a_edge)                                                  # [H, E2p]
        lrelu = jnp.where(logits > 0, logits, 0.2 * logits)                  # LeakyReLU(0.2)
        # masked softmax per destination node (single masking mechanism: -1e30 fill;
        # every node has a self loop, so each row has >= 1 valid entry -> no NaN).
        masked = jnp.where(dstmask[None, :, :] > 0, lrelu[:, None, :], -1e30)
        mx = jnp.max(masked, axis=-1, keepdims=True)
        p = jnp.exp(masked - mx)                                             # pads underflow to 0
        wgt = p * pl.reciprocal(jnp.sum(p, axis=-1, keepdims=True), approx=True)
        # gather-free per-edge source features: one matmul + tile-aligned reshape
        xet = jnp.dot(xpt, srcmask, preferred_element_type=f32
                      ).reshape(num_heads, c_out, e2p)                       # [H, C, E2p]
        ctx = jnp.einsum('hne,hce->hnc', wgt, xet,
                         preferred_element_type=f32)                         # [H, N, C]
        g = jnp.maximum(ctx.sum(axis=0) * (1.0 / num_heads) + gbias_ref[l], 0.0)
        # fold the (ReLU'd) GAT output straight into the lane-dense layer-0 gate term
        gat_nodes = gat_nodes + jnp.dot(g, wg_ref[l], preferred_element_type=f32)

    # node_indices selection fused (sel is one-hot); includes the layer-0 LSTM bias.
    gat_term = jnp.dot(sel_ref[...], gat_nodes, preferred_element_type=f32) + b_ref[0]

    # ----------------------------- LSTM stack + FC ----------------------------- #
    # Layer-0 input projection hoisted out of the recurrence (the GAT part of the
    # input is time-invariant and already in gat_term).
    gin_ref[...] = jnp.dot(seq_ref[...], wih0s_ref[...], preferred_element_type=f32)

    lane = lax.broadcasted_iota(jnp.int32, (b_pad, g4), 1)
    gmask = (lane >= 2 * hd) & (lane < 3 * hd)            # cell ('g') gate lanes
    gate_scale = jnp.where(gmask, 1.0, 0.5).astype(f32)
    zeros_bg = jnp.zeros((b_pad, g4), f32)

    def cell(gates, c):
        # single tanh pass per step: sigmoid(x) = 0.5*tanh(0.5*x) + 0.5
        t_act = jnp.tanh(gates * gate_scale)
        act = jnp.where(gmask, t_act, 0.5 * t_act + 0.5)
        f_al = pltpu.roll(act, 3 * hd, 1)                 # f gate -> lanes [0:hd)
        g_al = pltpu.roll(act, 2 * hd, 1)                 # g gate -> lanes [0:hd)
        o_al = pltpu.roll(act, hd, 1)                     # o gate -> lanes [0:hd)
        c_new = f_al * c + act * g_al                     # i gate already at lanes [0:hd)
        h_new = o_al * jnp.tanh(c_new)
        return h_new, c_new

    # Wavefront schedule: at global step s, layer l processes timestep s - l.  Inside
    # a step every layer reads only the previous step's carries, so the per-layer cell
    # updates are independent (HW can overlap them); serial chain = T + L - 1 steps.
    hs = [zeros_bg] * num_layers
    cs = [zeros_bg] * num_layers
    for s in range(t_len + num_layers - 1):               # fully unrolled, static slices
        new_hs = list(hs)
        new_cs = list(cs)
        for l in range(num_layers):
            if not (l <= s < l + t_len):
                continue
            if l == 0:
                gates = (gin_ref[pl.ds(s * b_pad, b_pad), :] + gat_term
                         + jnp.dot(hs[0], whh_ref[0], preferred_element_type=f32))
            else:
                gates = (jnp.dot(hs[l - 1], wihr_ref[l - 1], preferred_element_type=f32)
                         + jnp.dot(hs[l], whh_ref[l], preferred_element_type=f32)
                         + b_ref[l])
            new_hs[l], new_cs[l] = cell(gates, cs[l])
        hs, cs = new_hs, new_cs

    # final FC fused in (lstm_dropout is identity in eval); lane-dense padded output
    out_ref[...] = (jnp.dot(hs[num_layers - 1], fcw_ref[...], preferred_element_type=f32)
                    + fcb_ref[...])


# ------------------------------------ Parameter init ------------------------------------ #
def init_params(key, f_dim, s_dim, c_out, heads, hd, layers, edge_dim):
    ks = jax.random.split(key, 8 + layers)

    def nrm(k, shape, scale=0.1):
        return scale * jax.random.normal(k, shape, jnp.float32)

    def gat_p(k):
        g = jax.random.split(k, 6)
        return {
            "lin_W": nrm(g[0], (heads * c_out, f_dim)),        # no bias (PyG)
            "lin_edge_W": nrm(g[1], (heads * c_out, c_out)),   # no bias (PyG)
            "att_src": nrm(g[2], (1, heads, c_out)),
            "att_dst": nrm(g[3], (1, heads, c_out)),
            "att_edge": nrm(g[4], (1, heads, c_out)),
            "bias": nrm(g[5], (c_out,)),
        }

    params = {
        "edge_W": nrm(ks[0], (c_out, edge_dim)),
        "edge_b": nrm(ks[1], (c_out,)),
        "fc_W": nrm(ks[2], (1, hd)),
        "fc_b": nrm(ks[3], (1,)),
        "gat1": gat_p(ks[4]),
        "gat2": gat_p(ks[5]),
    }
    lstm = []
    for layer in range(layers):
        in_dim = (s_dim + 2 * c_out) if layer == 0 else hd
        lk = jax.random.split(ks[6 + layer], 4)
        lstm.append({
            "W_ih": nrm(lk[0], (4 * hd, in_dim)),
            "W_hh": nrm(lk[1], (4 * hd, hd)),
            "b_ih": nrm(lk[2], (4 * hd,)),
            "b_hh": nrm(lk[3], (4 * hd,)),
        })
    params["lstm"] = lstm
    return params


# ------------------- Static graph structures (hoisted out of the jitted forward) ------------------- #
def build_graph(edge_index, node_indices, n_nodes, b_pad):
    f32 = jnp.float32
    n_edges = edge_index.shape[1]
    batch = node_indices.shape[0]
    e2 = n_edges + n_nodes
    e2p = _round_up(max(e2, 128), 128)       # edge axis (incl. self loops) padded to 128 lanes
    ep = _round_up(max(n_edges, 128), 128)   # original-edge axis padded to 128 lanes

    src = edge_index[0].astype(jnp.int32)
    dst = edge_index[1].astype(jnp.int32)
    loop_idx = jnp.arange(n_nodes, dtype=jnp.int32)
    src2 = jnp.concatenate([src, loop_idx])
    dst2 = jnp.concatenate([dst, loop_idx])
    pad_e = e2p - e2
    src2p = jnp.concatenate([src2, jnp.zeros((pad_e,), jnp.int32)])
    dst2p = jnp.concatenate([dst2, jnp.zeros((pad_e,), jnp.int32)])
    valid = jnp.arange(e2p) < e2
    node_ids = jnp.arange(n_nodes)

    srcmask = ((node_ids[:, None] == src2p[None, :]) & valid[None, :]).astype(f32)
    dstmask = ((node_ids[:, None] == dst2p[None, :]) & valid[None, :]).astype(f32)

    # Placement matrix: identity columns for real edges, per-destination mean columns
    # for the appended self loops (add_self_loops(fill_value='mean')), zeros for pad.
    dst1h = (dst[:, None] == node_ids[None, :]).astype(f32)                  # [E, N]
    deg = jnp.maximum(jnp.sum(dst1h, axis=0, keepdims=True), 1.0)            # [1, N]
    pmat = jnp.zeros((ep, e2p), f32)
    pmat = pmat.at[:n_edges, :n_edges].set(jnp.eye(n_edges, dtype=f32))
    pmat = pmat.at[:n_edges, n_edges:n_edges + n_nodes].set(dst1h / deg)

    sel_b = (node_indices[:, None] == node_ids[None, :]).astype(f32)         # [B, N]
    sel = jnp.zeros((b_pad, n_nodes), f32).at[:batch].set(sel_b)
    return srcmask, dstmask, pmat, sel


# ---------------------------------------- Forward ---------------------------------------- #
@jax.jit
def gat_lstm_forward(params, sequences, edge_attr, node_features,
                     srcmask, dstmask, pmat, sel):
    f32 = jnp.float32
    c_out = params["edge_b"].shape[0]
    heads = params["gat1"]["att_src"].shape[1]
    hd = params["fc_W"].shape[1]
    num_lstm = len(params["lstm"])
    b_sz, t_len, s_dim = sequences.shape

    b_pad = sel.shape[0]
    ep = pmat.shape[0]
    g4 = 4 * hd
    out_w = 128                                   # lane-dense final output

    # -------- GAT parameters packed per layer -------- #
    def att_mat_t(att):  # [1, H, C] -> [H, H*C]  (transposed block-diag)
        a = att.reshape(heads, c_out).astype(f32)
        return (jnp.eye(heads, dtype=f32)[:, :, None] * a[None, :, :]
                ).reshape(heads, heads * c_out)

    g1, g2 = params["gat1"], params["gat2"]
    linw = jnp.stack([g1["lin_W"], g2["lin_W"]]).astype(f32)
    linew = jnp.stack([g1["lin_edge_W"], g2["lin_edge_W"]]).astype(f32)
    amsrc = jnp.stack([att_mat_t(g1["att_src"]), att_mat_t(g2["att_src"])])
    amdst = jnp.stack([att_mat_t(g1["att_dst"]), att_mat_t(g2["att_dst"])])
    amedge = jnp.stack([att_mat_t(g1["att_edge"]), att_mat_t(g2["att_edge"])])
    gbias = jnp.stack([g1["bias"].reshape(1, c_out),
                       g2["bias"].reshape(1, c_out)]).astype(f32)

    # edge attrs: transposed + lane padded (pad columns zero, nulled by pmat rows)
    n_edges, edge_dim = edge_attr.shape
    eat_p = jnp.zeros((edge_dim, ep), f32).at[:, :n_edges].set(edge_attr.T.astype(f32))

    # -------- LSTM / FC parameters packed -------- #
    seq_p = jnp.zeros((b_pad, t_len, s_dim), f32).at[:b_sz].set(sequences.astype(f32))
    seq_flat = jnp.transpose(seq_p, (1, 0, 2)).reshape(t_len * b_pad, s_dim)

    l0 = params["lstm"][0]
    wih0 = l0["W_ih"].astype(f32)                                    # [4H, S + 2C]
    wih0_seq = wih0[:, :s_dim].T                                     # [S, 4H]
    wg = jnp.stack([wih0[:, s_dim:s_dim + c_out].T,
                    wih0[:, s_dim + c_out:s_dim + 2 * c_out].T])     # [2, C, 4H]
    whh_all = jnp.stack([
        jnp.zeros((g4, g4), f32).at[:hd].set(lp["W_hh"].astype(f32).T)
        for lp in params["lstm"]])                                   # [L, 4H, 4H]
    b_all = jnp.stack([
        (lp["b_ih"] + lp["b_hh"]).astype(f32).reshape(1, g4)
        for lp in params["lstm"]])                                   # [L, 1, 4H]
    if num_lstm > 1:
        wih_rest = jnp.stack([
            jnp.zeros((g4, g4), f32).at[:hd].set(
                params["lstm"][l]["W_ih"].astype(f32).T)
            for l in range(1, num_lstm)])                            # [L-1, 4H, 4H]
    else:
        wih_rest = jnp.zeros((1, g4, g4), f32)                       # dummy (unused)

    fcw = jnp.zeros((g4, out_w), f32).at[:hd, :1].set(params["fc_W"].astype(f32).T)
    fcb = jnp.zeros((1, out_w), f32).at[0, 0].set(params["fc_b"].astype(f32)[0])

    out = pl.pallas_call(
        functools.partial(_gat_lstm_kernel, num_heads=heads, c_out=c_out, hd=hd,
                          t_len=t_len, b_pad=b_pad, num_layers=num_lstm,
                          num_gat_layers=2),
        out_shape=jax.ShapeDtypeStruct((b_pad, out_w), f32),
        in_specs=[_VMEM] * 22,
        out_specs=_VMEM,
        scratch_shapes=[pltpu.VMEM((t_len * b_pad, g4), f32)],
    )(node_features.T.astype(f32), eat_p,
      params["edge_W"].astype(f32), params["edge_b"].reshape(c_out, 1).astype(f32),
      pmat, dstmask, srcmask, sel,
      linw, linew, amsrc, amdst, amedge, gbias, wg,
      seq_flat, wih0_seq, wih_rest, whh_all, b_all, fcw, fcb)

    return out[:b_sz, :1]


# -------------------------------------------- Main -------------------------------------------- #
if __name__ == "__main__":
    F_DIM, S_DIM, C_OUT, HEADS, HID, LAYERS, EDGE_DIM = 8, 6, 8, 2, 32, 2, 4
    N_NODES, N_EDGES, BATCH, SEQ = 16, 32, 2, 8

    key = jax.random.PRNGKey(0)
    ks = jax.random.split(key, 8)

    params = init_params(ks[0], F_DIM, S_DIM, C_OUT, HEADS, HID, LAYERS, EDGE_DIM)

    node_features = jax.random.normal(ks[1], (N_NODES, F_DIM), jnp.float32)
    edge_attr = jax.random.normal(ks[2], (N_EDGES, EDGE_DIM), jnp.float32)
    src = jax.random.randint(ks[3], (N_EDGES,), 0, N_NODES)
    dst = jax.random.randint(ks[4], (N_EDGES,), 0, N_NODES)
    dst = jnp.where(dst == src, (dst + 1) % N_NODES, dst)   # no self loops in input
    edge_index = jnp.stack([src, dst]).astype(jnp.int32)
    sequences = jax.random.normal(ks[5], (BATCH, SEQ, S_DIM), jnp.float32)
    node_indices = jnp.array([3, 10], dtype=jnp.int32)

    b_pad = _round_up(max(BATCH, 8), 8)
    srcmask, dstmask, pmat, sel = build_graph(edge_index, node_indices, N_NODES, b_pad)

    out = gat_lstm_forward(params, sequences, edge_attr, node_features,
                           srcmask, dstmask, pmat, sel)
    out = jax.block_until_ready(out)
    assert out.shape == (BATCH, 1), out.shape
    assert bool(jnp.all(jnp.isfinite(out)))
    print("KERNEL_OK")
</pallas_src>

<mosaic_0001>
module attributes {stable_mosaic.version = 11 : i64} {
  func.func @_gat_lstm_kernel(%arg0: memref<8x16xf32, #tpu.memory_space<vmem>>, %arg1: memref<4x128xf32, #tpu.memory_space<vmem>>, %arg2: memref<8x4xf32, #tpu.memory_space<vmem>>, %arg3: memref<8x1xf32, #tpu.memory_space<vmem>>, %arg4: memref<128x128xf32, #tpu.memory_space<vmem>>, %arg5: memref<16x128xf32, #tpu.memory_space<vmem>>, %arg6: memref<16x128xf32, #tpu.memory_space<vmem>>, %arg7: memref<8x16xf32, #tpu.memory_space<vmem>>, %arg8: memref<2x16x8xf32, #tpu.memory_space<vmem>>, %arg9: memref<2x16x8xf32, #tpu.memory_space<vmem>>, %arg10: memref<2x2x16xf32, #tpu.memory_space<vmem>>, %arg11: memref<2x2x16xf32, #tpu.memory_space<vmem>>, %arg12: memref<2x2x16xf32, #tpu.memory_space<vmem>>, %arg13: memref<2x1x8xf32, #tpu.memory_space<vmem>>, %arg14: memref<2x8x128xf32, #tpu.memory_space<vmem>>, %arg15: memref<64x6xf32, #tpu.memory_space<vmem>>, %arg16: memref<6x128xf32, #tpu.memory_space<vmem>>, %arg17: memref<1x128x128xf32, #tpu.memory_space<vmem>>, %arg18: memref<2x128x128xf32, #tpu.memory_space<vmem>>, %arg19: memref<2x1x128xf32, #tpu.memory_space<vmem>>, %arg20: memref<128x128xf32, #tpu.memory_space<vmem>>, %arg21: memref<1x128xf32, #tpu.memory_space<vmem>>, %arg22: memref<8x128xf32, #tpu.memory_space<vmem>>, %arg23: memref<64x128xf32, #tpu.memory_space<vmem>>) attributes {dimension_semantics = [], scalar_prefetch = 0 : i64, scratch_operands = 1 : i64, tpu.core_type = #tpu.core_type<tc>} {
    %c0 = arith.constant 0 : index
    %c0_0 = arith.constant 0 : index
    %0 = vector.load %arg0[%c0, %c0_0] : memref<8x16xf32, #tpu.memory_space<vmem>>, vector<8x16xf32>
    %c0_1 = arith.constant 0 : index
    %c0_2 = arith.constant 0 : index
    %1 = vector.load %arg5[%c0_1, %c0_2] : memref<16x128xf32, #tpu.memory_space<vmem>>, vector<16x128xf32>
    %c0_3 = arith.constant 0 : index
    %c0_4 = arith.constant 0 : index
    %2 = vector.load %arg6[%c0_3, %c0_4] : memref<16x128xf32, #tpu.memory_space<vmem>>, vector<16x128xf32>
    %c0_5 = arith.constant 0 : index
    %c0_6 = arith.constant 0 : index
    %3 = vector.load %arg2[%c0_5, %c0_6] : memref<8x4xf32, #tpu.memory_space<vmem>>, vector<8x4xf32>
    %c0_7 = arith.constant 0 : index
    %c0_8 = arith.constant 0 : index
    %4 = vector.load %arg1[%c0_7, %c0_8] : memref<4x128xf32, #tpu.memory_space<vmem>>, vector<4x128xf32>
    %cst = arith.constant dense<0.000000e+00> : vector<8x128xf32>
    %5 = tpu.matmul %3, %4, %cst {dimension_numbers = #tpu.dot_dimension_numbers<[1], [0], [0], [1], [0, 0, 1, 1], [], []>} : vector<8x4xf32>, vector<4x128xf32>, vector<8x128xf32> -> vector<8x128xf32>
    %c0_9 = arith.constant 0 : index
    %c0_10 = arith.constant 0 : index
    %6 = vector.load %arg3[%c0_9, %c0_10] : memref<8x1xf32, #tpu.memory_space<vmem>>, vector<8x1xf32>
    %7 = vector.broadcast %6 : vector<8x1xf32> to vector<8x128xf32>
    %8 = arith.addf %5, %7 : vector<8x128xf32>
    %c0_11 = arith.constant 0 : index
    %c0_12 = arith.constant 0 : index
    %9 = vector.load %arg4[%c0_11, %c0_12] : memref<128x128xf32, #tpu.memory_space<vmem>>, vector<128x128xf32>
    %cst_13 = arith.constant dense<0.000000e+00> : vector<8x128xf32>
    %10 = tpu.matmul %8, %9, %cst_13 {dimension_numbers = #tpu.dot_dimension_numbers<[1], [0], [0], [1], [0, 0, 1, 1], [], []>} : vector<8x128xf32>, vector<128x128xf32>, vector<8x128xf32> -> vector<8x128xf32>
    %cst_14 = arith.constant 0.000000e+00 : f32
    %11 = vector.broadcast %cst_14 : f32 to vector<16x128xf32>
    %c0_15 = arith.constant 0 : index
    %c0_16 = arith.constant 0 : index
    %c0_17 = arith.constant 0 : index
    %12 = vector.load %arg8[%c0_15, %c0_16, %c0_17] : memref<2x16x8xf32, #tpu.memory_space<vmem>>, vector<1x16x8xf32>
    %13 = vector.shape_cast %12 : vector<1x16x8xf32> to vector<16x8xf32>
    %cst_18 = arith.constant dense<0.000000e+00> : vector<16x16xf32>
    %14 = tpu.matmul %13, %0, %cst_18 {dimension_numbers = #tpu.dot_dimension_numbers<[1], [0], [0], [1], [0, 0, 1, 1], [], []>} : vector<16x8xf32>, vector<8x16xf32>, vector<16x16xf32> -> vector<16x16xf32>
    %c0_19 = arith.constant 0 : index
    %c0_20 = arith.constant 0 : index
    %c0_21 = arith.constant 0 : index
    %15 = vector.load %arg9[%c0_19, %c0_20, %c0_21] : memref<2x16x8xf32, #tpu.memory_space<vmem>>, vector<1x16x8xf32>
    %16 = vector.shape_cast %15 : vector<1x16x8xf32> to vector<16x8xf32>
    %cst_22 = arith.constant dense<0.000000e+00> : vector<16x128xf32>
    %17 = tpu.matmul %16, %10, %cst_22 {dimension_numbers = #tpu.dot_dimension_numbers<[1], [0], [0], [1], [0, 0, 1, 1], [], []>} : vector<16x8xf32>, vector<8x128xf32>, vector<16x128xf32> -> vector<16x128xf32>
    %c0_23 = arith.constant 0 : index
    %c0_24 = arith.constant 0 : index
    %c0_25 = arith.constant 0 : index
    %18 = vector.load %arg10[%c0_23, %c0_24, %c0_25] : memref<2x2x16xf32, #tpu.memory_space<vmem>>, vector<1x2x16xf32>
    %19 = vector.shape_cast %18 : vector<1x2x16xf32> to vector<2x16xf32>
    %cst_26 = arith.constant dense<0.000000e+00> : vector<2x16xf32>
    %20 = tpu.matmul %19, %14, %cst_26 {dimension_numbers = #tpu.dot_dimension_numbers<[1], [0], [0], [1], [0, 0, 1, 1], [], []>} : vector<2x16xf32>, vector<16x16xf32>, vector<2x16xf32> -> vector<2x16xf32>
    %c0_27 = arith.constant 0 : index
    %c0_28 = arith.constant 0 : index
    %c0_29 = arith.constant 0 : index
    %21 = vector.load %arg11[%c0_27, %c0_28, %c0_29] : memref<2x2x16xf32, #tpu.memory_space<vmem>>, vector<1x2x16xf32>
    %22 = vector.shape_cast %21 : vector<1x2x16xf32> to vector<2x16xf32>
    %cst_30 = arith.constant dense<0.000000e+00> : vector<2x16xf32>
    %23 = tpu.matmul %22, %14, %cst_30 {dimension_numbers = #tpu.dot_dimension_numbers<[1], [0], [0], [1], [0, 0, 1, 1], [], []>} : vector<2x16xf32>, vector<16x16xf32>, vector<2x16xf32> -> vector<2x16xf32>
    %c0_31 = arith.constant 0 : index
    %c0_32 = arith.constant 0 : index
    %c0_33 = arith.constant 0 : index
    %24 = vector.load %arg12[%c0_31, %c0_32, %c0_33] : memref<2x2x16xf32, #tpu.memory_space<vmem>>, vector<1x2x16xf32>
    %25 = vector.shape_cast %24 : vector<1x2x16xf32> to vector<2x16xf32>
    %cst_34 = arith.constant dense<0.000000e+00> : vector<2x128xf32>
    %26 = tpu.matmul %25, %17, %cst_34 {dimension_numbers = #tpu.dot_dimension_numbers<[1], [0], [0], [1], [0, 0, 1, 1], [], []>} : vector<2x16xf32>, vector<16x128xf32>, vector<2x128xf32> -> vector<2x128xf32>
    %cst_35 = arith.constant dense<0.000000e+00> : vector<2x128xf32>
    %27 = tpu.matmul %20, %2, %cst_35 {dimension_numbers = #tpu.dot_dimension_numbers<[1], [0], [0], [1], [0, 0, 1, 1], [], []>} : vector<2x16xf32>, vector<16x128xf32>, vector<2x128xf32> -> vector<2x128xf32>
    %cst_36 = arith.constant dense<0.000000e+00> : vector<2x128xf32>
    %28 = tpu.matmul %23, %1, %cst_36 {dimension_numbers = #tpu.dot_dimension_numbers<[1], [0], [0], [1], [0, 0, 1, 1], [], []>} : vector<2x16xf32>, vector<16x128xf32>, vector<2x128xf32> -> vector<2x128xf32>
    %29 = arith.addf %27, %28 : vector<2x128xf32>
    %30 = arith.addf %29, %26 : vector<2x128xf32>
    %cst_37 = arith.constant 0.000000e+00 : f32
    %31 = vector.broadcast %cst_37 : f32 to vector<2x128xf32>
    %32 = arith.cmpf ogt, %30, %31 : vector<2x128xf32>
    %cst_38 = arith.constant 2.000000e-01 : f32
    %33 = vector.broadcast %cst_38 : f32 to vector<2x128xf32>
    %34 = arith.mulf %33, %30 : vector<2x128xf32>
    %35 = arith.select %32, %30, %34 : vector<2x128xi1>, vector<2x128xf32>
    %36 = vector.shape_cast %1 : vector<16x128xf32> to vector<1x16x128xf32>
    %cst_39 = arith.constant 0.000000e+00 : f32
    %37 = vector.broadcast %cst_39 : f32 to vector<1x16x128xf32>
    %38 = arith.cmpf ogt, %36, %37 : vector<1x16x128xf32>
    %39 = vector.shape_cast %35 : vector<2x128xf32> to vector<2x1x128xf32>
    %cst_40 = arith.constant -1.000000e+30 : f32
    %40 = vector.shape_cast %38 : vector<1x16x128xi1> to vector<1x16x128xi1>
    %41 = vector.broadcast %40 : vector<1x16x128xi1> to vector<2x16x128xi1>
    %42 = vector.shape_cast %39 : vector<2x1x128xf32> to vector<2x1x128xf32>
    %43 = vector.broadcast %42 : vector<2x1x128xf32> to vector<2x16x128xf32>
    %44 = vector.broadcast %cst_40 : f32 to vector<2x16x128xf32>
    %45 = arith.select %41, %43, %44 : vector<2x16x128xi1>, vector<2x16x128xf32>
    %cst_41 = arith.constant dense<0xFF800000> : vector<2x16xf32>
    %46 = vector.multi_reduction <maximumf>, %45, %cst_41 [2] : vector<2x16x128xf32> to vector<2x16xf32>
    %47 = vector.shape_cast %46 : vector<2x16xf32> to vector<2x16x1xf32>
    %48 = vector.broadcast %47 : vector<2x16x1xf32> to vector<2x16x128xf32>
    %49 = arith.subf %45, %48 : vector<2x16x128xf32>
    %50 = math.exp %49 : vector<2x16x128xf32>
    %cst_42 = arith.constant dense<0.000000e+00> : vector<2x16xf32>
    %51 = vector.multi_reduction <add>, %50, %cst_42 [2] : vector<2x16x128xf32> to vector<2x16xf32>
    %52 = vector.shape_cast %51 : vector<2x16xf32> to vector<2x16x1xf32>
    %53 = tpu.reciprocal %52 {approx = true} : vector<2x16x1xf32> -> vector<2x16x1xf32>
    %54 = vector.broadcast %53 : vector<2x16x1xf32> to vector<2x16x128xf32>
    %55 = arith.mulf %50, %54 : vector<2x16x128xf32>
    %cst_43 = arith.constant dense<0.000000e+00> : vector<16x128xf32>
    %56 = tpu.matmul %14, %2, %cst_43 {dimension_numbers = #tpu.dot_dimension_numbers<[1], [0], [0], [1], [0, 0, 1, 1], [], []>} : vector<16x16xf32>, vector<16x128xf32>, vector<16x128xf32> -> vector<16x128xf32>
    %57 = vector.shape_cast %56 : vector<16x128xf32> to vector<2x8x128xf32>
    "tpu.trace_start"() <{level = 10 : i32, message = "hne,hce->hnc"}> : () -> ()
    %cst_44 = arith.constant dense<0.000000e+00> : vector<2x16x8xf32>
    %58 = tpu.matmul %55, %57, %cst_44 {dimension_numbers = #tpu.dot_dimension_numbers<[2], [2], [1], [1], [0, 0, 0, 1, 1, 1], [0], [0]>} : vector<2x16x128xf32>, vector<2x8x128xf32>, vector<2x16x8xf32> -> vector<2x16x8xf32>
    "tpu.trace_stop"() : () -> ()
    %cst_45 = arith.constant dense<0.000000e+00> : vector<16x8xf32>
    %59 = vector.multi_reduction <add>, %58, %cst_45 [0] : vector<2x16x8xf32> to vector<16x8xf32>
    %cst_46 = arith.constant 5.000000e-01 : f32
    %60 = vector.broadcast %cst_46 : f32 to vector<16x8xf32>
    %61 = arith.mulf %59, %60 : vector<16x8xf32>
    %c0_47 = arith.constant 0 : index
    %c0_48 = arith.constant 0 : index
    %c0_49 = arith.constant 0 : index
    %62 = vector.load %arg13[%c0_47, %c0_48, %c0_49] : memref<2x1x8xf32, #tpu.memory_space<vmem>>, vector<1x1x8xf32>
    %63 = vector.shape_cast %62 : vector<1x1x8xf32> to vector<1x8xf32>
    %64 = vector.broadcast %63 : vector<1x8xf32> to vector<16x8xf32>
    %65 = arith.addf %61, %64 : vector<16x8xf32>
    %cst_50 = arith.constant 0.000000e+00 : f32
    %66 = vector.broadcast %cst_50 : f32 to vector<16x8xf32>
    %67 = arith.maximumf %65, %66 : vector<16x8xf32>
    %c0_51 = arith.constant 0 : index
    %c0_52 = arith.constant 0 : index
    %c0_53 = arith.constant 0 : index
    %68 = vector.load %arg14[%c0_51, %c0_52, %c0_53] : memref<2x8x128xf32, #tpu.memory_space<vmem>>, vector<1x8x128xf32>
    %69 = vector.shape_cast %68 : vector<1x8x128xf32> to vector<8x128xf32>
    %cst_54 = arith.constant dense<0.000000e+00> : vector<16x128xf32>
    %70 = tpu.matmul %67, %69, %cst_54 {dimension_numbers = #tpu.dot_dimension_numbers<[1], [0], [0], [1], [0, 0, 1, 1], [], []>} : vector<16x8xf32>, vector<8x128xf32>, vector<16x128xf32> -> vector<16x128xf32>
    %71 = arith.addf %11, %70 : vector<16x128xf32>
    %c1 = arith.constant 1 : index
    %c0_55 = arith.constant 0 : index
    %c0_56 = arith.constant 0 : index
    %72 = vector.load %arg8[%c1, %c0_55, %c0_56] : memref<2x16x8xf32, #tpu.memory_space<vmem>>, vector<1x16x8xf32>
    %73 = vector.shape_cast %72 : vector<1x16x8xf32> to vector<16x8xf32>
    %cst_57 = arith.constant dense<0.000000e+00> : vector<16x16xf32>
    %74 = tpu.matmul %73, %0, %cst_57 {dimension_numbers = #tpu.dot_dimension_numbers<[1], [0], [0], [1], [0, 0, 1, 1], [], []>} : vector<16x8xf32>, vector<8x16xf32>, vector<16x16xf32> -> vector<16x16xf32>
    %c1_58 = arith.constant 1 : index
    %c0_59 = arith.constant 0 : index
    %c0_60 = arith.constant 0 : index
    %75 = vector.load %arg9[%c1_58, %c0_59, %c0_60] : memref<2x16x8xf32, #tpu.memory_space<vmem>>, vector<1x16x8xf32>
    %76 = vector.shape_cast %75 : vector<1x16x8xf32> to vector<16x8xf32>
    %cst_61 = arith.constant dense<0.000000e+00> : vector<16x128xf32>
    %77 = tpu.matmul %76, %10, %cst_61 {dimension_numbers = #tpu.dot_dimension_numbers<[1], [0], [0], [1], [0, 0, 1, 1], [], []>} : vector<16x8xf32>, vector<8x128xf32>, vector<16x128xf32> -> vector<16x128xf32>
    %c1_62 = arith.constant 1 : index
    %c0_63 = arith.constant 0 : index
    %c0_64 = arith.constant 0 : index
    %78 = vector.load %arg10[%c1_62, %c0_63, %c0_64] : memref<2x2x16xf32, #tpu.memory_space<vmem>>, vector<1x2x16xf32>
    %79 = vector.shape_cast %78 : vector<1x2x16xf32> to vector<2x16xf32>
    %cst_65 = arith.constant dense<0.000000e+00> : vector<2x16xf32>
    %80 = tpu.matmul %79, %74, %cst_65 {dimension_numbers = #tpu.dot_dimension_numbers<[1], [0], [0], [1], [0, 0, 1, 1], [], []>} : vector<2x16xf32>, vector<16x16xf32>, vector<2x16xf32> -> vector<2x16xf32>
    %c1_66 = arith.constant 1 : index
    %c0_67 = arith.constant 0 : index
    %c0_68 = arith.constant 0 : index
    %81 = vector.load %arg11[%c1_66, %c0_67, %c0_68] : memref<2x2x16xf32, #tpu.memory_space<vmem>>, vector<1x2x16xf32>
    %82 = vector.shape_cast %81 : vector<1x2x16xf32> to vector<2x16xf32>
    %cst_69 = arith.constant dense<0.000000e+00> : vector<2x16xf32>
    %83 = tpu.matmul %82, %74, %cst_69 {dimension_numbers = #tpu.dot_dimension_numbers<[1], [0], [0], [1], [0, 0, 1, 1], [], []>} : vector<2x16xf32>, vector<16x16xf32>, vector<2x16xf32> -> vector<2x16xf32>
    %c1_70 = arith.constant 1 : index
    %c0_71 = arith.constant 0 : index
    %c0_72 = arith.constant 0 : index
    %84 = vector.load %arg12[%c1_70, %c0_71, %c0_72] : memref<2x2x16xf32, #tpu.memory_space<vmem>>, vector<1x2x16xf32>
    %85 = vector.shape_cast %84 : vector<1x2x16xf32> to vector<2x16xf32>
    %cst_73 = arith.constant dense<0.000000e+00> : vector<2x128xf32>
    %86 = tpu.matmul %85, %77, %cst_73 {dimension_numbers = #tpu.dot_dimension_numbers<[1], [0], [0], [1], [0, 0, 1, 1], [], []>} : vector<2x16xf32>, vector<16x128xf32>, vector<2x128xf32> -> vector<2x128xf32>
    %cst_74 = arith.constant dense<0.000000e+00> : vector<2x128xf32>
    %87 = tpu.matmul %80, %2, %cst_74 {dimension_numbers = #tpu.dot_dimension_numbers<[1], [0], [0], [1], [0, 0, 1, 1], [], []>} : vector<2x16xf32>, vector<16x128xf32>, vector<2x128xf32> -> vector<2x128xf32>
    %cst_75 = arith.constant dense<0.000000e+00> : vector<2x128xf32>
    %88 = tpu.matmul %83, %1, %cst_75 {dimension_numbers = #tpu.dot_dimension_numbers<[1], [0], [0], [1], [0, 0, 1, 1], [], []>} : vector<2x16xf32>, vector<16x128xf32>, vector<2x128xf32> -> vector<2x128xf32>
    %89 = arith.addf %87, %88 : vector<2x128xf32>
    %90 = arith.addf %89, %86 : vector<2x128xf32>
    %cst_76 = arith.constant 0.000000e+00 : f32
    %91 = vector.broadcast %cst_76 : f32 to vector<2x128xf32>
    %92 = arith.cmpf ogt, %90, %91 : vector<2x128xf32>
    %cst_77 = arith.constant 2.000000e-01 : f32
    %93 = vector.broadcast %cst_77 : f32 to vector<2x128xf32>
    %94 = arith.mulf %93, %90 : vector<2x128xf32>
    %95 = arith.select %92, %90, %94 : vector<2x128xi1>, vector<2x128xf32>
    %96 = vector.shape_cast %1 : vector<16x128xf32> to vector<1x16x128xf32>
    %cst_78 = arith.constant 0.000000e+00 : f32
    %97 = vector.broadcast %cst_78 : f32 to vector<1x16x128xf32>
    %98 = arith.cmpf ogt, %96, %97 : vector<1x16x128xf32>
    %99 = vector.shape_cast %95 : vector<2x128xf32> to vector<2x1x128xf32>
    %cst_79 = arith.constant -1.000000e+30 : f32
    %100 = vector.shape_cast %98 : vector<1x16x128xi1> to vector<1x16x128xi1>
    %101 = vector.broadcast %100 : vector<1x16x128xi1> to vector<2x16x128xi1>
    %102 = vector.shape_cast %99 : vector<2x1x128xf32> to vector<2x1x128xf32>
    %103 = vector.broadcast %102 : vector<2x1x128xf32> to vector<2x16x128xf32>
    %104 = vector.broadcast %cst_79 : f32 to vector<2x16x128xf32>
    %105 = arith.select %101, %103, %104 : vector<2x16x128xi1>, vector<2x16x128xf32>
    %cst_80 = arith.constant dense<0xFF800000> : vector<2x16xf32>
    %106 = vector.multi_reduction <maximumf>, %105, %cst_80 [2] : vector<2x16x128xf32> to vector<2x16xf32>
    %107 = vector.shape_cast %106 : vector<2x16xf32> to vector<2x16x1xf32>
    %108 = vector.broadcast %107 : vector<2x16x1xf32> to vector<2x16x128xf32>
    %109 = arith.subf %105, %108 : vector<2x16x128xf32>
    %110 = math.exp %109 : vector<2x16x128xf32>
    %cst_81 = arith.constant dense<0.000000e+00> : vector<2x16xf32>
    %111 = vector.multi_reduction <add>, %110, %cst_81 [2] : vector<2x16x128xf32> to vector<2x16xf32>
    %112 = vector.shape_cast %111 : vector<2x16xf32> to vector<2x16x1xf32>
    %113 = tpu.reciprocal %112 {approx = true} : vector<2x16x1xf32> -> vector<2x16x1xf32>
    %114 = vector.broadcast %113 : vector<2x16x1xf32> to vector<2x16x128xf32>
    %115 = arith.mulf %110, %114 : vector<2x16x128xf32>
    %cst_82 = arith.constant dense<0.000000e+00> : vector<16x128xf32>
    %116 = tpu.matmul %74, %2, %cst_82 {dimension_numbers = #tpu.dot_dimension_numbers<[1], [0], [0], [1], [0, 0, 1, 1], [], []>} : vector<16x16xf32>, vector<16x128xf32>, vector<16x128xf32> -> vector<16x128xf32>
    %117 = vector.shape_cast %116 : vector<16x128xf32> to vector<2x8x128xf32>
    "tpu.trace_start"() <{level = 10 : i32, message = "hne,hce->hnc"}> : () -> ()
    %cst_83 = arith.constant dense<0.000000e+00> : vector<2x16x8xf32>
    %118 = tpu.matmul %115, %117, %cst_83 {dimension_numbers = #tpu.dot_dimension_numbers<[2], [2], [1], [1], [0, 0, 0, 1, 1, 1], [0], [0]>} : vector<2x16x128xf32>, vector<2x8x128xf32>, vector<2x16x8xf32> -> vector<2x16x8xf32>
    "tpu.trace_stop"() : () -> ()
    %cst_84 = arith.constant dense<0.000000e+00> : vector<16x8xf32>
    %119 = vector.multi_reduction <add>, %118, %cst_84 [0] : vector<2x16x8xf32> to vector<16x8xf32>
    %cst_85 = arith.constant 5.000000e-01 : f32
    %120 = vector.broadcast %cst_85 : f32 to vector<16x8xf32>
    %121 = arith.mulf %119, %120 : vector<16x8xf32>
    %c1_86 = arith.constant 1 : index
    %c0_87 = arith.constant 0 : index
    %c0_88 = arith.constant 0 : index
    %122 = vector.load %arg13[%c1_86, %c0_87, %c0_88] : memref<2x1x8xf32, #tpu.memory_space<vmem>>, vector<1x1x8xf32>
    %123 = vector.shape_cast %122 : vector<1x1x8xf32> to vector<1x8xf32>
    %124 = vector.broadcast %123 : vector<1x8xf32> to vector<16x8xf32>
    %125 = arith.addf %121, %124 : vector<16x8xf32>
    %cst_89 = arith.constant 0.000000e+00 : f32
    %126 = vector.broadcast %cst_89 : f32 to vector<16x8xf32>
    %127 = arith.maximumf %125, %126 : vector<16x8xf32>
    %c1_90 = arith.constant 1 : index
    %c0_91 = arith.constant 0 : index
    %c0_92 = arith.constant 0 : index
    %128 = vector.load %arg14[%c1_90, %c0_91, %c0_92] : memref<2x8x128xf32, #tpu.memory_space<vmem>>, vector<1x8x128xf32>
    %129 = vector.shape_cast %128 : vector<1x8x128xf32> to vector<8x128xf32>
    %cst_93 = arith.constant dense<0.000000e+00> : vector<16x128xf32>
    %130 = tpu.matmul %127, %129, %cst_93 {dimension_numbers = #tpu.dot_dimension_numbers<[1], [0], [0], [1], [0, 0, 1, 1], [], []>} : vector<16x8xf32>, vector<8x128xf32>, vector<16x128xf32> -> vector<16x128xf32>
    %131 = arith.addf %71, %130 : vector<16x128xf32>
    %c0_94 = arith.constant 0 : index
    %c0_95 = arith.constant 0 : index
    %132 = vector.load %arg7[%c0_94, %c0_95] : memref<8x16xf32, #tpu.memory_space<vmem>>, vector<8x16xf32>
    %cst_96 = arith.constant dense<0.000000e+00> : vector<8x128xf32>
    %133 = tpu.matmul %132, %131, %cst_96 {dimension_numbers = #tpu.dot_dimension_numbers<[1], [0], [0], [1], [0, 0, 1, 1], [], []>} : vector<8x16xf32>, vector<16x128xf32>, vector<8x128xf32> -> vector<8x128xf32>
    %c0_97 = arith.constant 0 : index
    %c0_98 = arith.constant 0 : index
    %c0_99 = arith.constant 0 : index
    %134 = vector.load %arg19[%c0_97, %c0_98, %c0_99] : memref<2x1x128xf32, #tpu.memory_space<vmem>>, vector<1x1x128xf32>
    %135 = vector.shape_cast %134 : vector<1x1x128xf32> to vector<1x128xf32>
    %136 = vector.broadcast %135 : vector<1x128xf32> to vector<8x128xf32>
    %137 = arith.addf %133, %136 : vector<8x128xf32>
    %c0_100 = arith.constant 0 : index
    %c0_101 = arith.constant 0 : index
    %138 = vector.load %arg15[%c0_100, %c0_101] : memref<64x6xf32, #tpu.memory_space<vmem>>, vector<64x6xf32>
    %c0_102 = arith.constant 0 : index
    %c0_103 = arith.constant 0 : index
    %139 = vector.load %arg16[%c0_102, %c0_103] : memref<6x128xf32, #tpu.memory_space<vmem>>, vector<6x128xf32>
    %cst_104 = arith.constant dense<0.000000e+00> : vector<64x128xf32>
    %140 = tpu.matmul %138, %139, %cst_104 {dimension_numbers = #tpu.dot_dimension_numbers<[1], [0], [0], [1], [0, 0, 1, 1], [], []>} : vector<64x6xf32>, vector<6x128xf32>, vector<64x128xf32> -> vector<64x128xf32>
    %c0_105 = arith.constant 0 : index
    %c0_106 = arith.constant 0 : index
    %141 = vector.load %arg23[%c0_105, %c0_106] : memref<64x128xf32, #tpu.memory_space<vmem>>, vector<64x128xf32>
    tpu.vector_store %arg23[%c0_105, %c0_106], %140 {strides = array<i32>} : memref<64x128xf32, #tpu.memory_space<vmem>>, vector<64x128xf32>,
    %142 = tpu.iota {dimensions = array<i32: 1>} : vector<8x128xi32>
    %c64_i32 = arith.constant 64 : i32
    %143 = vector.broadcast %c64_i32 : i32 to vector<8x128xi32>
    %144 = arith.cmpi sge, %142, %143 : vector<8x128xi32>
    %c96_i32 = arith.constant 96 : i32
    %145 = vector.broadcast %c96_i32 : i32 to vector<8x128xi32>
    %146 = arith.cmpi slt, %142, %145 : vector<8x128xi32>
    %147 = arith.andi %144, %146 : vector<8x128xi1>
    %cst_107 = arith.constant 1.000000e+00 : f32
    %cst_108 = arith.constant 5.000000e-01 : f32
    %148 = vector.broadcast %cst_107 : f32 to vector<8x128xf32>
    %149 = vector.broadcast %cst_108 : f32 to vector<8x128xf32>
    %150 = arith.select %147, %148, %149 : vector<8x128xi1>, vector<8x128xf32>
    %cst_109 = arith.constant 0.000000e+00 : f32
    %151 = vector.broadcast %cst_109 : f32 to vector<8x128xf32>
    %c0_110 = arith.constant 0 : index
    %c0_111 = arith.constant 0 : index
    %152 = vector.load %arg23[%c0_110, %c0_111] : memref<64x128xf32, #tpu.memory_space<vmem>>, vector<8x128xf32>
    %153 = arith.addf %152, %137 : vector<8x128xf32>
    %c0_112 = arith.constant 0 : index
    %c0_113 = arith.constant 0 : index
    %c0_114 = arith.constant 0 : index
    %154 = vector.load %arg18[%c0_112, %c0_113, %c0_114] : memref<2x128x128xf32, #tpu.memory_space<vmem>>, vector<1x128x128xf32>
    %155 = vector.shape_cast %154 : vector<1x128x128xf32> to vector<128x128xf32>
    %cst_115 = arith.constant dense<0.000000e+00> : vector<8x128xf32>
    %156 = tpu.matmul %151, %155, %cst_115 {dimension_numbers = #tpu.dot_dimension_numbers<[1], [0], [0], [1], [0, 0, 1, 1], [], []>} : vector<8x128xf32>, vector<128x128xf32>, vector<8x128xf32> -> vector<8x128xf32>
    %157 = arith.addf %153, %156 : vector<8x128xf32>
    %158 = arith.mulf %157, %150 : vector<8x128xf32>
    %159 = math.tanh %158 : vector<8x128xf32>
    %cst_116 = arith.constant 5.000000e-01 : f32
    %160 = vector.broadcast %cst_116 : f32 to vector<8x128xf32>
    %161 = arith.mulf %160, %159 : vector<8x128xf32>
    %cst_117 = arith.constant 5.000000e-01 : f32
    %162 = vector.broadcast %cst_117 : f32 to vector<8x128xf32>
    %163 = arith.addf %161, %162 : vector<8x128xf32>
    %164 = arith.select %147, %159, %163 : vector<8x128xi1>, vector<8x128xf32>
    %c96_i32_118 = arith.constant 96 : i32
    %165 = tpu.dynamic_rotate %164 by %c96_i32_118 dim 1 : vector<8x128xf32>, i32 -> vector<8x128xf32>
    %c64_i32_119 = arith.constant 64 : i32
    %166 = tpu.dynamic_rotate %164 by %c64_i32_119 dim 1 : vector<8x128xf32>, i32 -> vector<8x128xf32>
    %c32_i32 = arith.constant 32 : i32
    %167 = tpu.dynamic_rotate %164 by %c32_i32 dim 1 : vector<8x128xf32>, i32 -> vector<8x128xf32>
    %168 = arith.mulf %165, %151 : vector<8x128xf32>
    %169 = arith.mulf %164, %166 : vector<8x128xf32>
    %170 = arith.addf %168, %169 : vector<8x128xf32>
    %171 = math.tanh %170 : vector<8x128xf32>
    %172 = arith.mulf %167, %171 : vector<8x128xf32>
    %c8 = arith.constant 8 : index
    %c0_120 = arith.constant 0 : index
    %173 = vector.load %arg23[%c8, %c0_120] : memref<64x128xf32, #tpu.memory_space<vmem>>, vector<8x128xf32>
    %174 = arith.addf %173, %137 : vector<8x128xf32>
    %c0_121 = arith.constant 0 : index
    %c0_122 = arith.constant 0 : index
    %c0_123 = arith.constant 0 : index
    %175 = vector.load %arg18[%c0_121, %c0_122, %c0_123] : memref<2x128x128xf32, #tpu.memory_space<vmem>>, vector<1x128x128xf32>
    %176 = vector.shape_cast %175 : vector<1x128x128xf32> to vector<128x128xf32>
    %cst_124 = arith.constant dense<0.000000e+00> : vector<8x128xf32>
    %177 = tpu.matmul %172, %176, %cst_124 {dimension_numbers = #tpu.dot_dimension_numbers<[1], [0], [0], [1], [0, 0, 1, 1], [], []>} : vector<8x128xf32>, vector<128x128xf32>, vector<8x128xf32> -> vector<8x128xf32>
    %178 = arith.addf %174, %177 : vector<8x128xf32>
    %179 = arith.mulf %178, %150 : vector<8x128xf32>
    %180 = math.tanh %179 : vector<8x128xf32>
    %cst_125 = arith.constant 5.000000e-01 : f32
    %181 = vector.broadcast %cst_125 : f32 to vector<8x128xf32>
    %182 = arith.mulf %181, %180 : vector<8x128xf32>
    %cst_126 = arith.constant 5.000000e-01 : f32
    %183 = vector.broadcast %cst_126 : f32 to vector<8x128xf32>
    %184 = arith.addf %182, %183 : vector<8x128xf32>
    %185 = arith.select %147, %180, %184 : vector<8x128xi1>, vector<8x128xf32>
    %c96_i32_127 = arith.constant 96 : i32
    %186 = tpu.dynamic_rotate %185 by %c96_i32_127 dim 1 : vector<8x128xf32>, i32 -> vector<8x128xf32>
    %c64_i32_128 = arith.constant 64 : i32
    %187 = tpu.dynamic_rotate %185 by %c64_i32_128 dim 1 : vector<8x128xf32>, i32 -> vector<8x128xf32>
    %c32_i32_129 = arith.constant 32 : i32
    %188 = tpu.dynamic_rotate %185 by %c32_i32_129 dim 1 : vector<8x128xf32>, i32 -> vector<8x128xf32>
    %189 = arith.mulf %186, %170 : vector<8x128xf32>
    %190 = arith.mulf %185, %187 : vector<8x128xf32>
    %191 = arith.addf %189, %190 : vector<8x128xf32>
    %192 = math.tanh %191 : vector<8x128xf32>
    %193 = arith.mulf %188, %192 : vector<8x128xf32>
    %c0_130 = arith.constant 0 : index
    %c0_131 = arith.constant 0 : index
    %c0_132 = arith.constant 0 : index
    %194 = vector.load %arg17[%c0_130, %c0_131, %c0_132] : memref<1x128x128xf32, #tpu.memory_space<vmem>>, vector<1x128x128xf32>
    %195 = vector.shape_cast %194 : vector<1x128x128xf32> to vector<128x128xf32>
    %cst_133 = arith.constant dense<0.000000e+00> : vector<8x128xf32>
    %196 = tpu.matmul %172, %195, %cst_133 {dimension_numbers = #tpu.dot_dimension_numbers<[1], [0], [0], [1], [0, 0, 1, 1], [], []>} : vector<8x128xf32>, vector<128x128xf32>, vector<8x128xf32> -> vector<8x128xf32>
    %c1_134 = arith.constant 1 : index
    %c0_135 = arith.constant 0 : index
    %c0_136 = arith.constant 0 : index
    %197 = vector.load %arg18[%c1_134, %c0_135, %c0_136] : memref<2x128x128xf32, #tpu.memory_space<vmem>>, vector<1x128x128xf32>
    %198 = vector.shape_cast %197 : vector<1x128x128xf32> to vector<128x128xf32>
    %cst_137 = arith.constant dense<0.000000e+00> : vector<8x128xf32>
    %199 = tpu.matmul %151, %198, %cst_137 {dimension_numbers = #tpu.dot_dimension_numbers<[1], [0], [0], [1], [0, 0, 1, 1], [], []>} : vector<8x128xf32>, vector<128x128xf32>, vector<8x128xf32> -> vector<8x128xf32>
    %200 = arith.addf %196, %199 : vector<8x128xf32>
    %c1_138 = arith.constant 1 : index
    %c0_139 = arith.constant 0 : index
    %c0_140 = arith.constant 0 : index
    %201 = vector.load %arg19[%c1_138, %c0_139, %c0_140] : memref<2x1x128xf32, #tpu.memory_space<vmem>>, vector<1x1x128xf32>
    %202 = vector.shape_cast %201 : vector<1x1x128xf32> to vector<1x128xf32>
    %203 = vector.broadcast %202 : vector<1x128xf32> to vector<8x128xf32>
    %204 = arith.addf %200, %203 : vector<8x128xf32>
    %205 = arith.mulf %204, %150 : vector<8x128xf32>
    %206 = math.tanh %205 : vector<8x128xf32>
    %cst_141 = arith.constant 5.000000e-01 : f32
    %207 = vector.broadcast %cst_141 : f32 to vector<8x128xf32>
    %208 = arith.mulf %207, %206 : vector<8x128xf32>
    %cst_142 = arith.constant 5.000000e-01 : f32
    %209 = vector.broadcast %cst_142 : f32 to vector<8x128xf32>
    %210 = arith.addf %208, %209 : vector<8x128xf32>
    %211 = arith.select %147, %206, %210 : vector<8x128xi1>, vector<8x128xf32>
    %c96_i32_143 = arith.constant 96 : i32
    %212 = tpu.dynamic_rotate %211 by %c96_i32_143 dim 1 : vector<8x128xf32>, i32 -> vector<8x128xf32>
    %c64_i32_144 = arith.constant 64 : i32
    %213 = tpu.dynamic_rotate %211 by %c64_i32_144 dim 1 : vector<8x128xf32>, i32 -> vector<8x128xf32>
    %c32_i32_145 = arith.constant 32 : i32
    %214 = tpu.dynamic_rotate %211 by %c32_i32_145 dim 1 : vector<8x128xf32>, i32 -> vector<8x128xf32>
    %215 = arith.mulf %212, %151 : vector<8x128xf32>
    %216 = arith.mulf %211, %213 : vector<8x128xf32>
    %217 = arith.addf %215, %216 : vector<8x128xf32>
    %218 = math.tanh %217 : vector<8x128xf32>
    %219 = arith.mulf %214, %218 : vector<8x128xf32>
    %c16 = arith.constant 16 : index
    %c0_146 = arith.constant 0 : index
    %220 = vector.load %arg23[%c16, %c0_146] : memref<64x128xf32, #tpu.memory_space<vmem>>, vector<8x128xf32>
    %221 = arith.addf %220, %137 : vector<8x128xf32>
    %c0_147 = arith.constant 0 : index
    %c0_148 = arith.constant 0 : index
    %c0_149 = arith.constant 0 : index
    %222 = vector.load %arg18[%c0_147, %c0_148, %c0_149] : memref<2x128x128xf32, #tpu.memory_space<vmem>>, vector<1x128x128xf32>
    %223 = vector.shape_cast %222 : vector<1x128x128xf32> to vector<128x128xf32>
    %cst_150 = arith.constant dense<0.000000e+00> : vector<8x128xf32>
    %224 = tpu.matmul %193, %223, %cst_150 {dimension_numbers = #tpu.dot_dimension_numbers<[1], [0], [0], [1], [0, 0, 1, 1], [], []>} : vector<8x128xf32>, vector<128x128xf32>, vector<8x128xf32> -> vector<8x128xf32>
    %225 = arith.addf %221, %224 : vector<8x128xf32>
    %226 = arith.mulf %225, %150 : vector<8x128xf32>
    %227 = math.tanh %226 : vector<8x128xf32>
    %cst_151 = arith.constant 5.000000e-01 : f32
    %228 = vector.broadcast %cst_151 : f32 to vector<8x128xf32>
    %229 = arith.mulf %228, %227 : vector<8x128xf32>
    %cst_152 = arith.constant 5.000000e-01 : f32
    %230 = vector.broadcast %cst_152 : f32 to vector<8x128xf32>
    %231 = arith.addf %229, %230 : vector<8x128xf32>
    %232 = arith.select %147, %227, %231 : vector<8x128xi1>, vector<8x128xf32>
    %c96_i32_153 = arith.constant 96 : i32
    %233 = tpu.dynamic_rotate %232 by %c96_i32_153 dim 1 : vector<8x128xf32>, i32 -> vector<8x128xf32>
    %c64_i32_154 = arith.constant 64 : i32
    %234 = tpu.dynamic_rotate %232 by %c64_i32_154 dim 1 : vector<8x128xf32>, i32 -> vector<8x128xf32>
    %c32_i32_155 = arith.constant 32 : i32
    %235 = tpu.dynamic_rotate %232 by %c32_i32_155 dim 1 : vector<8x128xf32>, i32 -> vector<8x128xf32>
    %236 = arith.mulf %233, %191 : vector<8x128xf32>
    %237 = arith.mulf %232, %234 : vector<8x128xf32>
    %238 = arith.addf %236, %237 : vector<8x128xf32>
    %239 = math.tanh %238 : vector<8x128xf32>
    %240 = arith.mulf %235, %239 : vector<8x128xf32>
    %c0_156 = arith.constant 0 : index
    %c0_157 = arith.constant 0 : index
    %c0_158 = arith.constant 0 : index
    %241 = vector.load %arg17[%c0_156, %c0_157, %c0_158] : memref<1x128x128xf32, #tpu.memory_space<vmem>>, vector<1x128x128xf32>
    %242 = vector.shape_cast %241 : vector<1x128x128xf32> to vector<128x128xf32>
    %cst_159 = arith.constant dense<0.000000e+00> : vector<8x128xf32>
    %243 = tpu.matmul %193, %242, %cst_159 {dimension_numbers = #tpu.dot_dimension_numbers<[1], [0], [0], [1], [0, 0, 1, 1], [], []>} : vector<8x128xf32>, vector<128x128xf32>, vector<8x128xf32> -> vector<8x128xf32>
    %c1_160 = arith.constant 1 : index
    %c0_161 = arith.constant 0 : index
    %c0_162 = arith.constant 0 : index
    %244 = vector.load %arg18[%c1_160, %c0_161, %c0_162] : memref<2x128x128xf32, #tpu.memory_space<vmem>>, vector<1x128x128xf32>
    %245 = vector.shape_cast %244 : vector<1x128x128xf32> to vector<128x128xf32>
    %cst_163 = arith.constant dense<0.000000e+00> : vector<8x128xf32>
    %246 = tpu.matmul %219, %245, %cst_163 {dimension_numbers = #tpu.dot_dimension_numbers<[1], [0], [0], [1], [0, 0, 1, 1], [], []>} : vector<8x128xf32>, vector<128x128xf32>, vector<8x128xf32> -> vector<8x128xf32>
    %247 = arith.addf %243, %246 : vector<8x128xf32>
    %c1_164 = arith.constant 1 : index
    %c0_165 = arith.constant 0 : index
    %c0_166 = arith.constant 0 : index
    %248 = vector.load %arg19[%c1_164, %c0_165, %c0_166] : memref<2x1x128xf32, #tpu.memory_space<vmem>>, vector<1x1x128xf32>
    %249 = vector.shape_cast %248 : vector<1x1x128xf32> to vector<1x128xf32>
    %250 = vector.broadcast %249 : vector<1x128xf32> to vector<8x128xf32>
    %251 = arith.addf %247, %250 : vector<8x128xf32>
    %252 = arith.mulf %251, %150 : vector<8x128xf32>
    %253 = math.tanh %252 : vector<8x128xf32>
    %cst_167 = arith.constant 5.000000e-01 : f32
    %254 = vector.broadcast %cst_167 : f32 to vector<8x128xf32>
    %255 = arith.mulf %254, %253 : vector<8x128xf32>
    %cst_168 = arith.constant 5.000000e-01 : f32
    %256 = vector.broadcast %cst_168 : f32 to vector<8x128xf32>
    %257 = arith.addf %255, %256 : vector<8x128xf32>
    %258 = arith.select %147, %253, %257 : vector<8x128xi1>, vector<8x128xf32>
    %c96_i32_169 = arith.constant 96 : i32
    %259 = tpu.dynamic_rotate %258 by %c96_i32_169 dim 1 : vector<8x128xf32>, i32 -> vector<8x128xf32>
    %c64_i32_170 = arith.constant 64 : i32
    %260 = tpu.dynamic_rotate %258 by %c64_i32_170 dim 1 : vector<8x128xf32>, i32 -> vector<8x128xf32>
    %c32_i32_171 = arith.constant 32 : i32
    %261 = tpu.dynamic_rotate %258 by %c32_i32_171 dim 1 : vector<8x128xf32>, i32 -> vector<8x128xf32>
    %262 = arith.mulf %259, %217 : vector<8x128xf32>
    %263 = arith.mulf %258, %260 : vector<8x128xf32>
    %264 = arith.addf %262, %263 : vector<8x128xf32>
    %265 = math.tanh %264 : vector<8x128xf32>
    %266 = arith.mulf %261, %265 : vector<8x128xf32>
    %c24 = arith.constant 24 : index
    %c0_172 = arith.constant 0 : index
    %267 = vector.load %arg23[%c24, %c0_172] : memref<64x128xf32, #tpu.memory_space<vmem>>, vector<8x128xf32>
    %268 = arith.addf %267, %137 : vector<8x128xf32>
    %c0_173 = arith.constant 0 : index
    %c0_174 = arith.constant 0 : index
    %c0_175 = arith.constant 0 : index
    %269 = vector.load %arg18[%c0_173, %c0_174, %c0_175] : memref<2x128x128xf32, #tpu.memory_space<vmem>>, vector<1x128x128xf32>
    %270 = vector.shape_cast %269 : vector<1x128x128xf32> to vector<128x128xf32>
    %cst_176 = arith.constant dense<0.000000e+00> : vector<8x128xf32>
    %271 = tpu.matmul %240, %270, %cst_176 {dimension_numbers = #tpu.dot_dimension_numbers<[1], [0], [0], [1], [0, 0, 1, 1], [], []>} : vector<8x128xf32>, vector<128x128xf32>, vector<8x128xf32> -> vector<8x128xf32>
    %272 = arith.addf %268, %271 : vector<8x128xf32>
    %273 = arith.mulf %272, %150 : vector<8x128xf32>
    %274 = math.tanh %273 : vector<8x128xf32>
    %cst_177 = arith.constant 5.000000e-01 : f32
    %275 = vector.broadcast %cst_177 : f32 to vector<8x128xf32>
    %276 = arith.mulf %275, %274 : vector<8x128xf32>
    %cst_178 = arith.constant 5.000000e-01 : f32
    %277 = vector.broadcast %cst_178 : f32 to vector<8x128xf32>
    %278 = arith.addf %276, %277 : vector<8x128xf32>
    %279 = arith.select %147, %274, %278 : vector<8x128xi1>, vector<8x128xf32>
    %c96_i32_179 = arith.constant 96 : i32
    %280 = tpu.dynamic_rotate %279 by %c96_i32_179 dim 1 : vector<8x128xf32>, i32 -> vector<8x128xf32>
    %c64_i32_180 = arith.constant 64 : i32
    %281 = tpu.dynamic_rotate %279 by %c64_i32_180 dim 1 : vector<8x128xf32>, i32 -> vector<8x128xf32>
    %c32_i32_181 = arith.constant 32 : i32
    %282 = tpu.dynamic_rotate %279 by %c32_i32_181 dim 1 : vector<8x128xf32>, i32 -> vector<8x128xf32>
    %283 = arith.mulf %280, %238 : vector<8x128xf32>
    %284 = arith.mulf %279, %281 : vector<8x128xf32>
    %285 = arith.addf %283, %284 : vector<8x128xf32>
    %286 = math.tanh %285 : vector<8x128xf32>
    %287 = arith.mulf %282, %286 : vector<8x128xf32>
    %c0_182 = arith.constant 0 : index
    %c0_183 = arith.constant 0 : index
    %c0_184 = arith.constant 0 : index
    %288 = vector.load %arg17[%c0_182, %c0_183, %c0_184] : memref<1x128x128xf32, #tpu.memory_space<vmem>>, vector<1x128x128xf32>
    %289 = vector.shape_cast %288 : vector<1x128x128xf32> to vector<128x128xf32>
    %cst_185 = arith.constant dense<0.000000e+00> : vector<8x128xf32>
    %290 = tpu.matmul %240, %289, %cst_185 {dimension_numbers = #tpu.dot_dimension_numbers<[1], [0], [0], [1], [0, 0, 1, 1], [], []>} : vector<8x128xf32>, vector<128x128xf32>, vector<8x128xf32> -> vector<8x128xf32>
    %c1_186 = arith.constant 1 : index
    %c0_187 = arith.constant 0 : index
    %c0_188 = arith.constant 0 : index
    %291 = vector.load %arg18[%c1_186, %c0_187, %c0_188] : memref<2x128x128xf32, #tpu.memory_space<vmem>>, vector<1x128x128xf32>
    %292 = vector.shape_cast %291 : vector<1x128x128xf32> to vector<128x128xf32>
    %cst_189 = arith.constant dense<0.000000e+00> : vector<8x128xf32>
    %293 = tpu.matmul %266, %292, %cst_189 {dimension_numbers = #tpu.dot_dimension_numbers<[1], [0], [0], [1], [0, 0, 1, 1], [], []>} : vector<8x128xf32>, vector<128x128xf32>, vector<8x128xf32> -> vector<8x128xf32>
    %294 = arith.addf %290, %293 : vector<8x128xf32>
    %c1_190 = arith.constant 1 : index
    %c0_191 = arith.constant 0 : index
    %c0_192 = arith.constant 0 : index
    %295 = vector.load %arg19[%c1_190, %c0_191, %c0_192] : memref<2x1x128xf32, #tpu.memory_space<vmem>>, vector<1x1x128xf32>
    %296 = vector.shape_cast %295 : vector<1x1x128xf32> to vector<1x128xf32>
    %297 = vector.broadcast %296 : vector<1x128xf32> to vector<8x128xf32>
    %298 = arith.addf %294, %297 : vector<8x128xf32>
    %299 = arith.mulf %298, %150 : vector<8x128xf32>
    %300 = math.tanh %299 : vector<8x128xf32>
    %cst_193 = arith.constant 5.000000e-01 : f32
    %301 = vector.broadcast %cst_193 : f32 to vector<8x128xf32>
    %302 = arith.mulf %301, %300 : vector<8x128xf32>
    %cst_194 = arith.constant 5.000000e-01 : f32
    %303 = vector.broadcast %cst_194 : f32 to vector<8x128xf32>
    %304 = arith.addf %302, %303 : vector<8x128xf32>
    %305 = arith.select %147, %300, %304 : vector<8x128xi1>, vector<8x128xf32>
    %c96_i32_195 = arith.constant 96 : i32
    %306 = tpu.dynamic_rotate %305 by %c96_i32_195 dim 1 : vector<8x128xf32>, i32 -> vector<8x128xf32>
    %c64_i32_196 = arith.constant 64 : i32
    %307 = tpu.dynamic_rotate %305 by %c64_i32_196 dim 1 : vector<8x128xf32>, i32 -> vector<8x128xf32>
    %c32_i32_197 = arith.constant 32 : i32
    %308 = tpu.dynamic_rotate %305 by %c32_i32_197 dim 1 : vector<8x128xf32>, i32 -> vector<8x128xf32>
    %309 = arith.mulf %306, %264 : vector<8x128xf32>
    %310 = arith.mulf %305, %307 : vector<8x128xf32>
    %311 = arith.addf %309, %310 : vector<8x128xf32>
    %312 = math.tanh %311 : vector<8x128xf32>
    %313 = arith.mulf %308, %312 : vector<8x128xf32>
    %c32 = arith.constant 32 : index
    %c0_198 = arith.constant 0 : index
    %314 = vector.load %arg23[%c32, %c0_198] : memref<64x128xf32, #tpu.memory_space<vmem>>, vector<8x128xf32>
    %315 = arith.addf %314, %137 : vector<8x128xf32>
    %c0_199 = arith.constant 0 : index
    %c0_200 = arith.constant 0 : index
    %c0_201 = arith.constant 0 : index
    %316 = vector.load %arg18[%c0_199, %c0_200, %c0_201] : memref<2x128x128xf32, #tpu.memory_space<vmem>>, vector<1x128x128xf32>
    %317 = vector.shape_cast %316 : vector<1x128x128xf32> to vector<128x128xf32>
    %cst_202 = arith.constant dense<0.000000e+00> : vector<8x128xf32>
    %318 = tpu.matmul %287, %317, %cst_202 {dimension_numbers = #tpu.dot_dimension_numbers<[1], [0], [0], [1], [0, 0, 1, 1], [], []>} : vector<8x128xf32>, vector<128x128xf32>, vector<8x128xf32> -> vector<8x128xf32>
    %319 = arith.addf %315, %318 : vector<8x128xf32>
    %320 = arith.mulf %319, %150 : vector<8x128xf32>
    %321 = math.tanh %320 : vector<8x128xf32>
    %cst_203 = arith.constant 5.000000e-01 : f32
    %322 = vector.broadcast %cst_203 : f32 to vector<8x128xf32>
    %323 = arith.mulf %322, %321 : vector<8x128xf32>
    %cst_204 = arith.constant 5.000000e-01 : f32
    %324 = vector.broadcast %cst_204 : f32 to vector<8x128xf32>
    %325 = arith.addf %323, %324 : vector<8x128xf32>
    %326 = arith.select %147, %321, %325 : vector<8x128xi1>, vector<8x128xf32>
    %c96_i32_205 = arith.constant 96 : i32
    %327 = tpu.dynamic_rotate %326 by %c96_i32_205 dim 1 : vector<8x128xf32>, i32 -> vector<8x128xf32>
    %c64_i32_206 = arith.constant 64 : i32
    %328 = tpu.dynamic_rotate %326 by %c64_i32_206 dim 1 : vector<8x128xf32>, i32 -> vector<8x128xf32>
    %c32_i32_207 = arith.constant 32 : i32
    %329 = tpu.dynamic_rotate %326 by %c32_i32_207 dim 1 : vector<8x128xf32>, i32 -> vector<8x128xf32>
    %330 = arith.mulf %327, %285 : vector<8x128xf32>
    %331 = arith.mulf %326, %328 : vector<8x128xf32>
    %332 = arith.addf %330, %331 : vector<8x128xf32>
    %333 = math.tanh %332 : vector<8x128xf32>
    %334 = arith.mulf %329, %333 : vector<8x128xf32>
    %c0_208 = arith.constant 0 : index
    %c0_209 = arith.constant 0 : index
    %c0_210 = arith.constant 0 : index
    %335 = vector.load %arg17[%c0_208, %c0_209, %c0_210] : memref<1x128x128xf32, #tpu.memory_space<vmem>>, vector<1x128x128xf32>
    %336 = vector.shape_cast %335 : vector<1x128x128xf32> to vector<128x128xf32>
    %cst_211 = arith.constant dense<0.000000e+00> : vector<8x128xf32>
    %337 = tpu.matmul %287, %336, %cst_211 {dimension_numbers = #tpu.dot_dimension_numbers<[1], [0], [0], [1], [0, 0, 1, 1], [], []>} : vector<8x128xf32>, vector<128x128xf32>, vector<8x128xf32> -> vector<8x128xf32>
    %c1_212 = arith.constant 1 : index
    %c0_213 = arith.constant 0 : index
    %c0_214 = arith.constant 0 : index
    %338 = vector.load %arg18[%c1_212, %c0_213, %c0_214] : memref<2x128x128xf32, #tpu.memory_space<vmem>>, vector<1x128x128xf32>
    %339 = vector.shape_cast %338 : vector<1x128x128xf32> to vector<128x128xf32>
    %cst_215 = arith.constant dense<0.000000e+00> : vector<8x128xf32>
    %340 = tpu.matmul %313, %339, %cst_215 {dimension_numbers = #tpu.dot_dimension_numbers<[1], [0], [0], [1], [0, 0, 1, 1], [], []>} : vector<8x128xf32>, vector<128x128xf32>, vector<8x128xf32> -> vector<8x128xf32>
    %341 = arith.addf %337, %340 : vector<8x128xf32>
    %c1_216 = arith.constant 1 : index
    %c0_217 = arith.constant 0 : index
    %c0_218 = arith.constant 0 : index
    %342 = vector.load %arg19[%c1_216, %c0_217, %c0_218] : memref<2x1x128xf32, #tpu.memory_space<vmem>>, vector<1x1x128xf32>
    %343 = vector.shape_cast %342 : vector<1x1x128xf32> to vector<1x128xf32>
    %344 = vector.broadcast %343 : vector<1x128xf32> to vector<8x128xf32>
    %345 = arith.addf %341, %344 : vector<8x128xf32>
    %346 = arith.mulf %345, %150 : vector<8x128xf32>
    %347 = math.tanh %346 : vector<8x128xf32>
    %cst_219 = arith.constant 5.000000e-01 : f32
    %348 = vector.broadcast %cst_219 : f32 to vector<8x128xf32>
    %349 = arith.mulf %348, %347 : vector<8x128xf32>
    %cst_220 = arith.constant 5.000000e-01 : f32
    %350 = vector.broadcast %cst_220 : f32 to vector<8x128xf32>
    %351 = arith.addf %349, %350 : vector<8x128xf32>
    %352 = arith.select %147, %347, %351 : vector<8x128xi1>, vector<8x128xf32>
    %c96_i32_221 = arith.constant 96 : i32
    %353 = tpu.dynamic_rotate %352 by %c96_i32_221 dim 1 : vector<8x128xf32>, i32 -> vector<8x128xf32>
    %c64_i32_222 = arith.constant 64 : i32
    %354 = tpu.dynamic_rotate %352 by %c64_i32_222 dim 1 : vector<8x128xf32>, i32 -> vector<8x128xf32>
    %c32_i32_223 = arith.constant 32 : i32
    %355 = tpu.dynamic_rotate %352 by %c32_i32_223 dim 1 : vector<8x128xf32>, i32 -> vector<8x128xf32>
    %356 = arith.mulf %353, %311 : vector<8x128xf32>
    %357 = arith.mulf %352, %354 : vector<8x128xf32>
    %358 = arith.addf %356, %357 : vector<8x128xf32>
    %359 = math.tanh %358 : vector<8x128xf32>
    %360 = arith.mulf %355, %359 : vector<8x128xf32>
    %c40 = arith.constant 40 : index
    %c0_224 = arith.constant 0 : index
    %361 = vector.load %arg23[%c40, %c0_224] : memref<64x128xf32, #tpu.memory_space<vmem>>, vector<8x128xf32>
    %362 = arith.addf %361, %137 : vector<8x128xf32>
    %c0_225 = arith.constant 0 : index
    %c0_226 = arith.constant 0 : index
    %c0_227 = arith.constant 0 : index
    %363 = vector.load %arg18[%c0_225, %c0_226, %c0_227] : memref<2x128x128xf32, #tpu.memory_space<vmem>>, vector<1x128x128xf32>
    %364 = vector.shape_cast %363 : vector<1x128x128xf32> to vector<128x128xf32>
    %cst_228 = arith.constant dense<0.000000e+00> : vector<8x128xf32>
    %365 = tpu.matmul %334, %364, %cst_228 {dimension_numbers = #tpu.dot_dimension_numbers<[1], [0], [0], [1], [0, 0, 1, 1], [], []>} : vector<8x128xf32>, vector<128x128xf32>, vector<8x128xf32> -> vector<8x128xf32>
    %366 = arith.addf %362, %365 : vector<8x128xf32>
    %367 = arith.mulf %366, %150 : vector<8x128xf32>
    %368 = math.tanh %367 : vector<8x128xf32>
    %cst_229 = arith.constant 5.000000e-01 : f32
    %369 = vector.broadcast %cst_229 : f32 to vector<8x128xf32>
    %370 = arith.mulf %369, %368 : vector<8x128xf32>
    %cst_230 = arith.constant 5.000000e-01 : f32
    %371 = vector.broadcast %cst_230 : f32 to vector<8x128xf32>
    %372 = arith.addf %370, %371 : vector<8x128xf32>
    %373 = arith.select %147, %368, %372 : vector<8x128xi1>, vector<8x128xf32>
    %c96_i32_231 = arith.constant 96 : i32
    %374 = tpu.dynamic_rotate %373 by %c96_i32_231 dim 1 : vector<8x128xf32>, i32 -> vector<8x128xf32>
    %c64_i32_232 = arith.constant 64 : i32
    %375 = tpu.dynamic_rotate %373 by %c64_i32_232 dim 1 : vector<8x128xf32>, i32 -> vector<8x128xf32>
    %c32_i32_233 = arith.constant 32 : i32
    %376 = tpu.dynamic_rotate %373 by %c32_i32_233 dim 1 : vector<8x128xf32>, i32 -> vector<8x128xf32>
    %377 = arith.mulf %374, %332 : vector<8x128xf32>
    %378 = arith.mulf %373, %375 : vector<8x128xf32>
    %379 = arith.addf %377, %378 : vector<8x128xf32>
    %380 = math.tanh %379 : vector<8x128xf32>
    %381 = arith.mulf %376, %380 : vector<8x128xf32>
    %c0_234 = arith.constant 0 : index
    %c0_235 = arith.constant 0 : index
    %c0_236 = arith.constant 0 : index
    %382 = vector.load %arg17[%c0_234, %c0_235, %c0_236] : memref<1x128x128xf32, #tpu.memory_space<vmem>>, vector<1x128x128xf32>
    %383 = vector.shape_cast %382 : vector<1x128x128xf32> to vector<128x128xf32>
    %cst_237 = arith.constant dense<0.000000e+00> : vector<8x128xf32>
    %384 = tpu.matmul %334, %383, %cst_237 {dimension_numbers = #tpu.dot_dimension_numbers<[1], [0], [0], [1], [0, 0, 1, 1], [], []>} : vector<8x128xf32>, vector<128x128xf32>, vector<8x128xf32> -> vector<8x128xf32>
    %c1_238 = arith.constant 1 : index
    %c0_239 = arith.constant 0 : index
    %c0_240 = arith.constant 0 : index
    %385 = vector.load %arg18[%c1_238, %c0_239, %c0_240] : memref<2x128x128xf32, #tpu.memory_space<vmem>>, vector<1x128x128xf32>
    %386 = vector.shape_cast %385 : vector<1x128x128xf32> to vector<128x128xf32>
    %cst_241 = arith.constant dense<0.000000e+00> : vector<8x128xf32>
    %387 = tpu.matmul %360, %386, %cst_241 {dimension_numbers = #tpu.dot_dimension_numbers<[1], [0], [0], [1], [0, 0, 1, 1], [], []>} : vector<8x128xf32>, vector<128x128xf32>, vector<8x128xf32> -> vector<8x128xf32>
    %388 = arith.addf %384, %387 : vector<8x128xf32>
    %c1_242 = arith.constant 1 : index
    %c0_243 = arith.constant 0 : index
    %c0_244 = arith.constant 0 : index
    %389 = vector.load %arg19[%c1_242, %c0_243, %c0_244] : memref<2x1x128xf32, #tpu.memory_space<vmem>>, vector<1x1x128xf32>
    %390 = vector.shape_cast %389 : vector<1x1x128xf32> to vector<1x128xf32>
    %391 = vector.broadcast %390 : vector<1x128xf32> to vector<8x128xf32>
    %392 = arith.addf %388, %391 : vector<8x128xf32>
    %393 = arith.mulf %392, %150 : vector<8x128xf32>
    %394 = math.tanh %393 : vector<8x128xf32>
    %cst_245 = arith.constant 5.000000e-01 : f32
    %395 = vector.broadcast %cst_245 : f32 to vector<8x128xf32>
    %396 = arith.mulf %395, %394 : vector<8x128xf32>
    %cst_246 = arith.constant 5.000000e-01 : f32
    %397 = vector.broadcast %cst_246 : f32 to vector<8x128xf32>
    %398 = arith.addf %396, %397 : vector<8x128xf32>
    %399 = arith.select %147, %394, %398 : vector<8x128xi1>, vector<8x128xf32>
    %c96_i32_247 = arith.constant 96 : i32
    %400 = tpu.dynamic_rotate %399 by %c96_i32_247 dim 1 : vector<8x128xf32>, i32 -> vector<8x128xf32>
    %c64_i32_248 = arith.constant 64 : i32
    %401 = tpu.dynamic_rotate %399 by %c64_i32_248 dim 1 : vector<8x128xf32>, i32 -> vector<8x128xf32>
    %c32_i32_249 = arith.constant 32 : i32
    %402 = tpu.dynamic_rotate %399 by %c32_i32_249 dim 1 : vector<8x128xf32>, i32 -> vector<8x128xf32>
    %403 = arith.mulf %400, %358 : vector<8x128xf32>
    %404 = arith.mulf %399, %401 : vector<8x128xf32>
    %405 = arith.addf %403, %404 : vector<8x128xf32>
    %406 = math.tanh %405 : vector<8x128xf32>
    %407 = arith.mulf %402, %406 : vector<8x128xf32>
    %c48 = arith.constant 48 : index
    %c0_250 = arith.constant 0 : index
    %408 = vector.load %arg23[%c48, %c0_250] : memref<64x128xf32, #tpu.memory_space<vmem>>, vector<8x128xf32>
    %409 = arith.addf %408, %137 : vector<8x128xf32>
    %c0_251 = arith.constant 0 : index
    %c0_252 = arith.constant 0 : index
    %c0_253 = arith.constant 0 : index
    %410 = vector.load %arg18[%c0_251, %c0_252, %c0_253] : memref<2x128x128xf32, #tpu.memory_space<vmem>>, vector<1x128x128xf32>
    %411 = vector.shape_cast %410 : vector<1x128x128xf32> to vector<128x128xf32>
    %cst_254 = arith.constant dense<0.000000e+00> : vector<8x128xf32>
    %412 = tpu.matmul %381, %411, %cst_254 {dimension_numbers = #tpu.dot_dimension_numbers<[1], [0], [0], [1], [0, 0, 1, 1], [], []>} : vector<8x128xf32>, vector<128x128xf32>, vector<8x128xf32> -> vector<8x128xf32>
    %413 = arith.addf %409, %412 : vector<8x128xf32>
    %414 = arith.mulf %413, %150 : vector<8x128xf32>
    %415 = math.tanh %414 : vector<8x128xf32>
    %cst_255 = arith.constant 5.000000e-01 : f32
    %416 = vector.broadcast %cst_255 : f32 to vector<8x128xf32>
    %417 = arith.mulf %416, %415 : vector<8x128xf32>
    %cst_256 = arith.constant 5.000000e-01 : f32
    %418 = vector.broadcast %cst_256 : f32 to vector<8x128xf32>
    %419 = arith.addf %417, %418 : vector<8x128xf32>
    %420 = arith.select %147, %415, %419 : vector<8x128xi1>, vector<8x128xf32>
    %c96_i32_257 = arith.constant 96 : i32
    %421 = tpu.dynamic_rotate %420 by %c96_i32_257 dim 1 : vector<8x128xf32>, i32 -> vector<8x128xf32>
    %c64_i32_258 = arith.constant 64 : i32
    %422 = tpu.dynamic_rotate %420 by %c64_i32_258 dim 1 : vector<8x128xf32>, i32 -> vector<8x128xf32>
    %c32_i32_259 = arith.constant 32 : i32
    %423 = tpu.dynamic_rotate %420 by %c32_i32_259 dim 1 : vector<8x128xf32>, i32 -> vector<8x128xf32>
    %424 = arith.mulf %421, %379 : vector<8x128xf32>
    %425 = arith.mulf %420, %422 : vector<8x128xf32>
    %426 = arith.addf %424, %425 : vector<8x128xf32>
    %427 = math.tanh %426 : vector<8x128xf32>
    %428 = arith.mulf %423, %427 : vector<8x128xf32>
    %c0_260 = arith.constant 0 : index
    %c0_261 = arith.constant 0 : index
    %c0_262 = arith.constant 0 : index
    %429 = vector.load %arg17[%c0_260, %c0_261, %c0_262] : memref<1x128x128xf32, #tpu.memory_space<vmem>>, vector<1x128x128xf32>
    %430 = vector.shape_cast %429 : vector<1x128x128xf32> to vector<128x128xf32>
    %cst_263 = arith.constant dense<0.000000e+00> : vector<8x128xf32>
    %431 = tpu.matmul %381, %430, %cst_263 {dimension_numbers = #tpu.dot_dimension_numbers<[1], [0], [0], [1], [0, 0, 1, 1], [], []>} : vector<8x128xf32>, vector<128x128xf32>, vector<8x128xf32> -> vector<8x128xf32>
    %c1_264 = arith.constant 1 : index
    %c0_265 = arith.constant 0 : index
    %c0_266 = arith.constant 0 : index
    %432 = vector.load %arg18[%c1_264, %c0_265, %c0_266] : memref<2x128x128xf32, #tpu.memory_space<vmem>>, vector<1x128x128xf32>
    %433 = vector.shape_cast %432 : vector<1x128x128xf32> to vector<128x128xf32>
    %cst_267 = arith.constant dense<0.000000e+00> : vector<8x128xf32>
    %434 = tpu.matmul %407, %433, %cst_267 {dimension_numbers = #tpu.dot_dimension_numbers<[1], [0], [0], [1], [0, 0, 1, 1], [], []>} : vector<8x128xf32>, vector<128x128xf32>, vector<8x128xf32> -> vector<8x128xf32>
    %435 = arith.addf %431, %434 : vector<8x128xf32>
    %c1_268 = arith.constant 1 : index
    %c0_269 = arith.constant 0 : index
    %c0_270 = arith.constant 0 : index
    %436 = vector.load %arg19[%c1_268, %c0_269, %c0_270] : memref<2x1x128xf32, #tpu.memory_space<vmem>>, vector<1x1x128xf32>
    %437 = vector.shape_cast %436 : vector<1x1x128xf32> to vector<1x128xf32>
    %438 = vector.broadcast %437 : vector<1x128xf32> to vector<8x128xf32>
    %439 = arith.addf %435, %438 : vector<8x128xf32>
    %440 = arith.mulf %439, %150 : vector<8x128xf32>
    %441 = math.tanh %440 : vector<8x128xf32>
    %cst_271 = arith.constant 5.000000e-01 : f32
    %442 = vector.broadcast %cst_271 : f32 to vector<8x128xf32>
    %443 = arith.mulf %442, %441 : vector<8x128xf32>
    %cst_272 = arith.constant 5.000000e-01 : f32
    %444 = vector.broadcast %cst_272 : f32 to vector<8x128xf32>
    %445 = arith.addf %443, %444 : vector<8x128xf32>
    %446 = arith.select %147, %441, %445 : vector<8x128xi1>, vector<8x128xf32>
    %c96_i32_273 = arith.constant 96 : i32
    %447 = tpu.dynamic_rotate %446 by %c96_i32_273 dim 1 : vector<8x128xf32>, i32 -> vector<8x128xf32>
    %c64_i32_274 = arith.constant 64 : i32
    %448 = tpu.dynamic_rotate %446 by %c64_i32_274 dim 1 : vector<8x128xf32>, i32 -> vector<8x128xf32>
    %c32_i32_275 = arith.constant 32 : i32
    %449 = tpu.dynamic_rotate %446 by %c32_i32_275 dim 1 : vector<8x128xf32>, i32 -> vector<8x128xf32>
    %450 = arith.mulf %447, %405 : vector<8x128xf32>
    %451 = arith.mulf %446, %448 : vector<8x128xf32>
    %452 = arith.addf %450, %451 : vector<8x128xf32>
    %453 = math.tanh %452 : vector<8x128xf32>
    %454 = arith.mulf %449, %453 : vector<8x128xf32>
    %c56 = arith.constant 56 : index
    %c0_276 = arith.constant 0 : index
    %455 = vector.load %arg23[%c56, %c0_276] : memref<64x128xf32, #tpu.memory_space<vmem>>, vector<8x128xf32>
    %456 = arith.addf %455, %137 : vector<8x128xf32>
    %c0_277 = arith.constant 0 : index
    %c0_278 = arith.constant 0 : index
    %c0_279 = arith.constant 0 : index
    %457 = vector.load %arg18[%c0_277, %c0_278, %c0_279] : memref<2x128x128xf32, #tpu.memory_space<vmem>>, vector<1x128x128xf32>
    %458 = vector.shape_cast %457 : vector<1x128x128xf32> to vector<128x128xf32>
    %cst_280 = arith.constant dense<0.000000e+00> : vector<8x128xf32>
    %459 = tpu.matmul %428, %458, %cst_280 {dimension_numbers = #tpu.dot_dimension_numbers<[1], [0], [0], [1], [0, 0, 1, 1], [], []>} : vector<8x128xf32>, vector<128x128xf32>, vector<8x128xf32> -> vector<8x128xf32>
    %460 = arith.addf %456, %459 : vector<8x128xf32>
    %461 = arith.mulf %460, %150 : vector<8x128xf32>
    %462 = math.tanh %461 : vector<8x128xf32>
    %cst_281 = arith.constant 5.000000e-01 : f32
    %463 = vector.broadcast %cst_281 : f32 to vector<8x128xf32>
    %464 = arith.mulf %463, %462 : vector<8x128xf32>
    %cst_282 = arith.constant 5.000000e-01 : f32
    %465 = vector.broadcast %cst_282 : f32 to vector<8x128xf32>
    %466 = arith.addf %464, %465 : vector<8x128xf32>
    %467 = arith.select %147, %462, %466 : vector<8x128xi1>, vector<8x128xf32>
    %c96_i32_283 = arith.constant 96 : i32
    %468 = tpu.dynamic_rotate %467 by %c96_i32_283 dim 1 : vector<8x128xf32>, i32 -> vector<8x128xf32>
    %c64_i32_284 = arith.constant 64 : i32
    %469 = tpu.dynamic_rotate %467 by %c64_i32_284 dim 1 : vector<8x128xf32>, i32 -> vector<8x128xf32>
    %c32_i32_285 = arith.constant 32 : i32
    %470 = tpu.dynamic_rotate %467 by %c32_i32_285 dim 1 : vector<8x128xf32>, i32 -> vector<8x128xf32>
    %471 = arith.mulf %468, %426 : vector<8x128xf32>
    %472 = arith.mulf %467, %469 : vector<8x128xf32>
    %473 = arith.addf %471, %472 : vector<8x128xf32>
    %474 = math.tanh %473 : vector<8x128xf32>
    %475 = arith.mulf %470, %474 : vector<8x128xf32>
    %c0_286 = arith.constant 0 : index
    %c0_287 = arith.constant 0 : index
    %c0_288 = arith.constant 0 : index
    %476 = vector.load %arg17[%c0_286, %c0_287, %c0_288] : memref<1x128x128xf32, #tpu.memory_space<vmem>>, vector<1x128x128xf32>
    %477 = vector.shape_cast %476 : vector<1x128x128xf32> to vector<128x128xf32>
    %cst_289 = arith.constant dense<0.000000e+00> : vector<8x128xf32>
    %478 = tpu.matmul %428, %477, %cst_289 {dimension_numbers = #tpu.dot_dimension_numbers<[1], [0], [0], [1], [0, 0, 1, 1], [], []>} : vector<8x128xf32>, vector<128x128xf32>, vector<8x128xf32> -> vector<8x128xf32>
    %c1_290 = arith.constant 1 : index
    %c0_291 = arith.constant 0 : index
    %c0_292 = arith.constant 0 : index
    %479 = vector.load %arg18[%c1_290, %c0_291, %c0_292] : memref<2x128x128xf32, #tpu.memory_space<vmem>>, vector<1x128x128xf32>
    %480 = vector.shape_cast %479 : vector<1x128x128xf32> to vector<128x128xf32>
    %cst_293 = arith.constant dense<0.000000e+00> : vector<8x128xf32>
    %481 = tpu.matmul %454, %480, %cst_293 {dimension_numbers = #tpu.dot_dimension_numbers<[1], [0], [0], [1], [0, 0, 1, 1], [], []>} : vector<8x128xf32>, vector<128x128xf32>, vector<8x128xf32> -> vector<8x128xf32>
    %482 = arith.addf %478, %481 : vector<8x128xf32>
    %c1_294 = arith.constant 1 : index
    %c0_295 = arith.constant 0 : index
    %c0_296 = arith.constant 0 : index
    %483 = vector.load %arg19[%c1_294, %c0_295, %c0_296] : memref<2x1x128xf32, #tpu.memory_space<vmem>>, vector<1x1x128xf32>
    %484 = vector.shape_cast %483 : vector<1x1x128xf32> to vector<1x128xf32>
    %485 = vector.broadcast %484 : vector<1x128xf32> to vector<8x128xf32>
    %486 = arith.addf %482, %485 : vector<8x128xf32>
    %487 = arith.mulf %486, %150 : vector<8x128xf32>
    %488 = math.tanh %487 : vector<8x128xf32>
    %cst_297 = arith.constant 5.000000e-01 : f32
    %489 = vector.broadcast %cst_297 : f32 to vector<8x128xf32>
    %490 = arith.mulf %489, %488 : vector<8x128xf32>
    %cst_298 = arith.constant 5.000000e-01 : f32
    %491 = vector.broadcast %cst_298 : f32 to vector<8x128xf32>
    %492 = arith.addf %490, %491 : vector<8x128xf32>
    %493 = arith.select %147, %488, %492 : vector<8x128xi1>, vector<8x128xf32>
    %c96_i32_299 = arith.constant 96 : i32
    %494 = tpu.dynamic_rotate %493 by %c96_i32_299 dim 1 : vector<8x128xf32>, i32 -> vector<8x128xf32>
    %c64_i32_300 = arith.constant 64 : i32
    %495 = tpu.dynamic_rotate %493 by %c64_i32_300 dim 1 : vector<8x128xf32>, i32 -> vector<8x128xf32>
    %c32_i32_301 = arith.constant 32 : i32
    %496 = tpu.dynamic_rotate %493 by %c32_i32_301 dim 1 : vector<8x128xf32>, i32 -> vector<8x128xf32>
    %497 = arith.mulf %494, %452 : vector<8x128xf32>
    %498 = arith.mulf %493, %495 : vector<8x128xf32>
    %499 = arith.addf %497, %498 : vector<8x128xf32>
    %500 = math.tanh %499 : vector<8x128xf32>
    %501 = arith.mulf %496, %500 : vector<8x128xf32>
    %c0_302 = arith.constant 0 : index
    %c0_303 = arith.constant 0 : index
    %c0_304 = arith.constant 0 : index
    %502 = vector.load %arg17[%c0_302, %c0_303, %c0_304] : memref<1x128x128xf32, #tpu.memory_space<vmem>>, vector<1x128x128xf32>
    %503 = vector.shape_cast %502 : vector<1x128x128xf32> to vector<128x128xf32>
    %cst_305 = arith.constant dense<0.000000e+00> : vector<8x128xf32>
    %504 = tpu.matmul %475, %503, %cst_305 {dimension_numbers = #tpu.dot_dimension_numbers<[1], [0], [0], [1], [0, 0, 1, 1], [], []>} : vector<8x128xf32>, vector<128x128xf32>, vector<8x128xf32> -> vector<8x128xf32>
    %c1_306 = arith.constant 1 : index
    %c0_307 = arith.constant 0 : index
    %c0_308 = arith.constant 0 : index
    %505 = vector.load %arg18[%c1_306, %c0_307, %c0_308] : memref<2x128x128xf32, #tpu.memory_space<vmem>>, vector<1x128x128xf32>
    %506 = vector.shape_cast %505 : vector<1x128x128xf32> to vector<128x128xf32>
    %cst_309 = arith.constant dense<0.000000e+00> : vector<8x128xf32>
    %507 = tpu.matmul %501, %506, %cst_309 {dimension_numbers = #tpu.dot_dimension_numbers<[1], [0], [0], [1], [0, 0, 1, 1], [], []>} : vector<8x128xf32>, vector<128x128xf32>, vector<8x128xf32> -> vector<8x128xf32>
    %508 = arith.addf %504, %507 : vector<8x128xf32>
    %c1_310 = arith.constant 1 : index
    %c0_311 = arith.constant 0 : index
    %c0_312 = arith.constant 0 : index
    %509 = vector.load %arg19[%c1_310, %c0_311, %c0_312] : memref<2x1x128xf32, #tpu.memory_space<vmem>>, vector<1x1x128xf32>
    %510 = vector.shape_cast %509 : vector<1x1x128xf32> to vector<1x128xf32>
    %511 = vector.broadcast %510 : vector<1x128xf32> to vector<8x128xf32>
    %512 = arith.addf %508, %511 : vector<8x128xf32>
    %513 = arith.mulf %512, %150 : vector<8x128xf32>
    %514 = math.tanh %513 : vector<8x128xf32>
    %cst_313 = arith.constant 5.000000e-01 : f32
    %515 = vector.broadcast %cst_313 : f32 to vector<8x128xf32>
    %516 = arith.mulf %515, %514 : vector<8x128xf32>
    %cst_314 = arith.constant 5.000000e-01 : f32
    %517 = vector.broadcast %cst_314 : f32 to vector<8x128xf32>
    %518 = arith.addf %516, %517 : vector<8x128xf32>
    %519 = arith.select %147, %514, %518 : vector<8x128xi1>, vector<8x128xf32>
    %c96_i32_315 = arith.constant 96 : i32
    %520 = tpu.dynamic_rotate %519 by %c96_i32_315 dim 1 : vector<8x128xf32>, i32 -> vector<8x128xf32>
    %c64_i32_316 = arith.constant 64 : i32
    %521 = tpu.dynamic_rotate %519 by %c64_i32_316 dim 1 : vector<8x128xf32>, i32 -> vector<8x128xf32>
    %c32_i32_317 = arith.constant 32 : i32
    %522 = tpu.dynamic_rotate %519 by %c32_i32_317 dim 1 : vector<8x128xf32>, i32 -> vector<8x128xf32>
    %523 = arith.mulf %520, %499 : vector<8x128xf32>
    %524 = arith.mulf %519, %521 : vector<8x128xf32>
    %525 = arith.addf %523, %524 : vector<8x128xf32>
    %526 = math.tanh %525 : vector<8x128xf32>
    %527 = arith.mulf %522, %526 : vector<8x128xf32>
    %c0_318 = arith.constant 0 : index
    %c0_319 = arith.constant 0 : index
    %528 = vector.load %arg20[%c0_318, %c0_319] : memref<128x128xf32, #tpu.memory_space<vmem>>, vector<128x128xf32>
    %cst_320 = arith.constant dense<0.000000e+00> : vector<8x128xf32>
    %529 = tpu.matmul %527, %528, %cst_320 {dimension_numbers = #tpu.dot_dimension_numbers<[1], [0], [0], [1], [0, 0, 1, 1], [], []>} : vector<8x128xf32>, vector<128x128xf32>, vector<8x128xf32> -> vector<8x128xf32>
    %c0_321 = arith.constant 0 : index
    %c0_322 = arith.constant 0 : index
    %530 = vector.load %arg21[%c0_321, %c0_322] : memref<1x128xf32, #tpu.memory_space<vmem>>, vector<1x128xf32>
    %531 = vector.broadcast %530 : vector<1x128xf32> to vector<8x128xf32>
    %532 = arith.addf %529, %531 : vector<8x128xf32>
    %c0_323 = arith.constant 0 : index
    %c0_324 = arith.constant 0 : index
    %533 = vector.load %arg22[%c0_323, %c0_324] : memref<8x128xf32, #tpu.memory_space<vmem>>, vector<8x128xf32>
    tpu.vector_store %arg22[%c0_323, %c0_324], %532 {strides = array<i32>} : memref<8x128xf32, #tpu.memory_space<vmem>>, vector<8x128xf32>,
    return
  }
}

</mosaic_0001>

<llo_original>
// kernel: gat_lstm_forward.1
$region0: #{gat_lstm_forward.1}
  #allocation0 [shape = 'u32[]', space=smem, size = 0x4, offset = 0x4, fixed_abs, tag = 'smem constant byte address 0x4 - core index']
  #allocation1 [shape = 'u32[144,128]{1,0:T(1,128)}', space=vmem, size = 0x12000, scoped, tag = 'internal scratch']
  #allocation2 [shape = 'f32[64,128]{1,0:T(8,128)}', space=vmem, size = 0x8000, scoped, tag = 'scratch operand']
  %s0 = inlined_call_operand.vmem [shape: f32[8,16], index: 0, kind: input, shape index: {}]
  %s1 = inlined_call_operand.vmem [shape: f32[4,128], index: 1, kind: input, shape index: {}]
  %s2 = inlined_call_operand.vmem [shape: f32[8,4], index: 2, kind: input, shape index: {}]
  %s3 = inlined_call_operand.vmem [shape: f32[8,1], index: 3, kind: input, shape index: {}]
  %s4 = inlined_call_operand.vmem [shape: f32[128,128], index: 4, kind: input, shape index: {}]
  %s5 = inlined_call_operand.vmem [shape: f32[16,128], index: 5, kind: input, shape index: {}]
  %s6 = inlined_call_operand.vmem [shape: f32[16,128], index: 6, kind: input, shape index: {}]
  %s7 = inlined_call_operand.vmem [shape: f32[8,16], index: 7, kind: input, shape index: {}]
  %s8 = inlined_call_operand.vmem [shape: f32[2,16,8], index: 8, kind: input, shape index: {}]
  %s9 = inlined_call_operand.vmem [shape: f32[2,16,8], index: 9, kind: input, shape index: {}]
  %s10 = inlined_call_operand.vmem [shape: f32[2,2,16], index: 10, kind: input, shape index: {}]
  %s11 = inlined_call_operand.vmem [shape: f32[2,2,16], index: 11, kind: input, shape index: {}]
  %s12 = inlined_call_operand.vmem [shape: f32[2,2,16], index: 12, kind: input, shape index: {}]
  %s13 = inlined_call_operand.vmem [shape: f32[2,1,8], index: 13, kind: input, shape index: {}]
  %s14 = inlined_call_operand.vmem [shape: f32[2,8,128], index: 14, kind: input, shape index: {}]
  %s15 = inlined_call_operand.vmem [shape: f32[64,6], index: 15, kind: input, shape index: {}]
  %s16 = inlined_call_operand.vmem [shape: f32[6,128], index: 16, kind: input, shape index: {}]
  %s17 = inlined_call_operand.vmem [shape: f32[1,128,128], index: 17, kind: input, shape index: {}]
  %s18 = inlined_call_operand.vmem [shape: f32[2,128,128], index: 18, kind: input, shape index: {}]
  %s19 = inlined_call_operand.vmem [shape: f32[2,1,128], index: 19, kind: input, shape index: {}]
  %s20 = inlined_call_operand.vmem [shape: f32[128,128], index: 20, kind: input, shape index: {}]
  %s21 = inlined_call_operand.vmem [shape: f32[1,128], index: 21, kind: input, shape index: {}]
  %s22 = inlined_call_operand.vmem [shape: f32[8,128], index: 22, kind: output, shape index: {}]
  %s23 = sld [smem:[#allocation0]]
  $region98: #{gat_lstm_forward.1} parent=0
    _
  %s25 = ssub.s32 1, %s23
  %s26 = scalar_select 0, %s25, %s23
  // Predicated region
  $region2: #{gat_lstm_forward.1} parent=0 // pred_check
    _
  $region3: #{gat_lstm_forward.1} parent=0 // pred_check_branch
    %28 = sbr.rel (0) target = $region5
  $region4: #{gat_lstm_forward.1} parent=0 // pred_region
    _
  $region5: #{gat_lstm_forward.1} parent=0 // pred_fallthru
    _
  // Predicated region
  $region6: #{gat_lstm_forward.1} parent=0 // pred_check
    _
  $region7: #{gat_lstm_forward.1} parent=0 // pred_check_branch
    %30 = sbr.rel (0) target = $region9
  $region8: #{gat_lstm_forward.1} parent=0 // pred_region
    _
  $region9: #{gat_lstm_forward.1} parent=0 // pred_fallthru
    _
  // Predicated region
  $region10: #{gat_lstm_forward.1} parent=0 // pred_check
    _
  $region11: #{gat_lstm_forward.1} parent=0 // pred_check_branch
    %32 = sbr.rel (0) target = $region13
  $region12: #{gat_lstm_forward.1} parent=0 // pred_region
    _
  $region13: #{gat_lstm_forward.1} parent=0 // pred_fallthru
    _
  // Predicated region
  $region14: #{gat_lstm_forward.1} parent=0 // pred_check
    _
  $region15: #{gat_lstm_forward.1} parent=0 // pred_check_branch
    %34 = sbr.rel (0) target = $region17
  $region16: #{gat_lstm_forward.1} parent=0 // pred_region
    _
  $region17: #{gat_lstm_forward.1} parent=0 // pred_fallthru
    _
  // Predicated region
  $region18: #{gat_lstm_forward.1} parent=0 // pred_check
    _
  $region19: #{gat_lstm_forward.1} parent=0 // pred_check_branch
    %36 = sbr.rel (0) target = $region21
  $region20: #{gat_lstm_forward.1} parent=0 // pred_region
    _
  $region21: #{gat_lstm_forward.1} parent=0 // pred_fallthru
    _
  // Predicated region
  $region22: #{gat_lstm_forward.1} parent=0 // pred_check
    _
  $region23: #{gat_lstm_forward.1} parent=0 // pred_check_branch
    %38 = sbr.rel (0) target = $region25
  $region24: #{gat_lstm_forward.1} parent=0 // pred_region
    _
  $region25: #{gat_lstm_forward.1} parent=0 // pred_fallthru
    _
  // Predicated region
  $region26: #{gat_lstm_forward.1} parent=0 // pred_check
    _
  $region27: #{gat_lstm_forward.1} parent=0 // pred_check_branch
    %40 = sbr.rel (0) target = $region29
  $region28: #{gat_lstm_forward.1} parent=0 // pred_region
    _
  $region29: #{gat_lstm_forward.1} parent=0 // pred_fallthru
    _
  // Predicated region
  $region30: #{gat_lstm_forward.1} parent=0 // pred_check
    _
  $region31: #{gat_lstm_forward.1} parent=0 // pred_check_branch
    %42 = sbr.rel (0) target = $region33
  $region32: #{gat_lstm_forward.1} parent=0 // pred_region
    _
  $region33: #{gat_lstm_forward.1} parent=0 // pred_fallthru
    _
  // Predicated region
  $region34: #{gat_lstm_forward.1} parent=0 // pred_check
    _
  $region35: #{gat_lstm_forward.1} parent=0 // pred_check_branch
    %44 = sbr.rel (0) target = $region37
  $region36: #{gat_lstm_forward.1} parent=0 // pred_region
    _
  $region37: #{gat_lstm_forward.1} parent=0 // pred_fallthru
    _
  // Predicated region
  $region38: #{gat_lstm_forward.1} parent=0 // pred_check
    _
  $region39: #{gat_lstm_forward.1} parent=0 // pred_check_branch
    %46 = sbr.rel (0) target = $region41
  $region40: #{gat_lstm_forward.1} parent=0 // pred_region
    _
  $region41: #{gat_lstm_forward.1} parent=0 // pred_fallthru
    _
  // Predicated region
  $region42: #{gat_lstm_forward.1} parent=0 // pred_check
    _
  $region43: #{gat_lstm_forward.1} parent=0 // pred_check_branch
    %48 = sbr.rel (0) target = $region45
  $region44: #{gat_lstm_forward.1} parent=0 // pred_region
    _
  $region45: #{gat_lstm_forward.1} parent=0 // pred_fallthru
    _
  // Predicated region
  $region46: #{gat_lstm_forward.1} parent=0 // pred_check
    _
  $region47: #{gat_lstm_forward.1} parent=0 // pred_check_branch
    %50 = sbr.rel (0) target = $region49
  $region48: #{gat_lstm_forward.1} parent=0 // pred_region
    _
  $region49: #{gat_lstm_forward.1} parent=0 // pred_fallthru
    _
  // Predicated region
  $region50: #{gat_lstm_forward.1} parent=0 // pred_check
    _
  $region51: #{gat_lstm_forward.1} parent=0 // pred_check_branch
    %52 = sbr.rel (0) target = $region53
  $region52: #{gat_lstm_forward.1} parent=0 // pred_region
    _
  $region53: #{gat_lstm_forward.1} parent=0 // pred_fallthru
    _
  // Predicated region
  $region54: #{gat_lstm_forward.1} parent=0 // pred_check
    _
  $region55: #{gat_lstm_forward.1} parent=0 // pred_check_branch
    %54 = sbr.rel (0) target = $region57
  $region56: #{gat_lstm_forward.1} parent=0 // pred_region
    _
  $region57: #{gat_lstm_forward.1} parent=0 // pred_fallthru
    _
  // Predicated region
  $region58: #{gat_lstm_forward.1} parent=0 // pred_check
    _
  $region59: #{gat_lstm_forward.1} parent=0 // pred_check_branch
    %56 = sbr.rel (0) target = $region61
  $region60: #{gat_lstm_forward.1} parent=0 // pred_region
    _
  $region61: #{gat_lstm_forward.1} parent=0 // pred_fallthru
    _
  // Predicated region
  $region62: #{gat_lstm_forward.1} parent=0 // pred_check
    _
  $region63: #{gat_lstm_forward.1} parent=0 // pred_check_branch
    %58 = sbr.rel (0) target = $region65
  $region64: #{gat_lstm_forward.1} parent=0 // pred_region
    _
  $region65: #{gat_lstm_forward.1} parent=0 // pred_fallthru
    _
  // Predicated region
  $region66: #{gat_lstm_forward.1} parent=0 // pred_check
    _
  $region67: #{gat_lstm_forward.1} parent=0 // pred_check_branch
    %60 = sbr.rel (0) target = $region69
  $region68: #{gat_lstm_forward.1} parent=0 // pred_region
    _
  $region69: #{gat_lstm_forward.1} parent=0 // pred_fallthru
    _
  // Predicated region
  $region70: #{gat_lstm_forward.1} parent=0 // pred_check
    _
  $region71: #{gat_lstm_forward.1} parent=0 // pred_check_branch
    %62 = sbr.rel (0) target = $region73
  $region72: #{gat_lstm_forward.1} parent=0 // pred_region
    _
  $region73: #{gat_lstm_forward.1} parent=0 // pred_fallthru
    _
  // Predicated region
  $region74: #{gat_lstm_forward.1} parent=0 // pred_check
    _
  $region75: #{gat_lstm_forward.1} parent=0 // pred_check_branch
    %64 = sbr.rel (0) target = $region77
  $region76: #{gat_lstm_forward.1} parent=0 // pred_region
    _
  $region77: #{gat_lstm_forward.1} parent=0 // pred_fallthru
    _
  // Predicated region
  $region78: #{gat_lstm_forward.1} parent=0 // pred_check
    _
  $region79: #{gat_lstm_forward.1} parent=0 // pred_check_branch
    %66 = sbr.rel (0) target = $region81
  $region80: #{gat_lstm_forward.1} parent=0 // pred_region
    _
  $region81: #{gat_lstm_forward.1} parent=0 // pred_fallthru
    _
  // Predicated region
  $region82: #{gat_lstm_forward.1} parent=0 // pred_check
    _
  $region83: #{gat_lstm_forward.1} parent=0 // pred_check_branch
    %68 = sbr.rel (0) target = $region85
  $region84: #{gat_lstm_forward.1} parent=0 // pred_region
    _
  $region85: #{gat_lstm_forward.1} parent=0 // pred_fallthru
    _
  // Predicated region
  $region86: #{gat_lstm_forward.1} parent=0 // pred_check
    _
  $region87: #{gat_lstm_forward.1} parent=0 // pred_check_branch
    %70 = sbr.rel (0) target = $region89
  $region88: #{gat_lstm_forward.1} parent=0 // pred_region
    _
  $region89: #{gat_lstm_forward.1} parent=0 // pred_fallthru
    _
  %v71 = vld [vmem:[%s0] sm:$0xff]
  %v72 = vld [vmem:[%s5] sm:$0xff]
  %v73 = vld [vmem:[%s5 + $0x8] sm:$0xff]
  %v74 = vld [vmem:[%s6] sm:$0xff]
  %v75 = vld [vmem:[%s6 + $0x8] sm:$0xff]
  %v76 = vld [vmem:[%s2] sm:$0xff]
  %v77 = vld [vmem:[%s1] sm:$0xf]
  %v78 = vld [vmem:[%s3] sm:$0xff]
  %80 = vset.pattern.permute.xlu0 0
  %81 = vperm.xlu0 %80, %v78
  %v82 = vpop.permute.xlu0 %81
  %vm84 = vcmask 31744
  %v86 = vsel %vm84, %v76, 0
  %vm88 = vcmask 1043456
  %v90 = vsel %vm88, %v77, 0
  %92 = vmatprep.subr.mxu0 0.0
  %93 = vmatpush1.msra.mxu0 0.0
  %94 = vmatprep.subr.mxu0 0.0
  %95 = vmatpush1.msra.mxu0 0.0
  %96 = vmatprep.subr.mxu0 0.0
  %97 = vmatpush1.msra.mxu0 0.0
  %98 = vmatprep.subr.mxu0 0.0
  %99 = vmatpush1.msra.mxu0 0.0
  %100 = vmatprep.subr.mxu0 0.0
  %101 = vmatpush1.msra.mxu0 0.0
  %102 = vmatprep.subr.mxu0 0.0
  %103 = vmatpush1.msra.mxu0 0.0
  %104 = vmatprep.subr.mxu0 0.0
  %105 = vmatpush1.msra.mxu0 0.0
  %106 = vmatprep.subr.mxu0 0.0
  %107 = vmatpush1.msra.mxu0 0.0
  %108 = vmatprep.subr.mxu0 0.0
  %109 = vmatpush1.msra.mxu0 0.0
  %110 = vmatprep.subr.mxu0 0.0
  %111 = vmatpush1.msra.mxu0 0.0
  %112 = vmatprep.subr.mxu0 0.0
  %113 = vmatpush1.msra.mxu0 0.0
  %114 = vmatprep.subr.mxu0 0.0
  %115 = vmatpush1.msra.mxu0 0.0
  %116 = vmatprep.subr.mxu0 0.0
  %117 = vmatpush1.msra.mxu0 0.0
  %118 = vmatprep.subr.mxu0 0.0
  %119 = vmatpush1.msra.mxu0 0.0
  %120 = vmatprep.subr.mxu0 0.0
  %121 = vmatpush1.msra.mxu0 0.0
  %122 = vmatprep.subr.mxu0 0.0
  %123 = vmatpush1.msra.mxu0 %v90
  %124 = vmatprep.subr.mxu0 0.0
  %125 = vmatpush2.msra.mxu0 0.0
  %126 = vmatprep.subr.mxu0 0.0
  %127 = vmatpush2.msra.mxu0 0.0
  %128 = vmatprep.subr.mxu0 0.0
  %129 = vmatpush2.msra.mxu0 0.0
  %130 = vmatprep.subr.mxu0 0.0
  %131 = vmatpush2.msra.mxu0 0.0
  %132 = vmatprep.subr.mxu0 0.0
  %133 = vmatpush2.msra.mxu0 0.0
  %134 = vmatprep.subr.mxu0 0.0
  %135 = vmatpush2.msra.mxu0 0.0
  %136 = vmatprep.subr.mxu0 0.0
  %137 = vmatpush2.msra.mxu0 0.0
  %138 = vmatprep.subr.mxu0 0.0
  %139 = vmatpush2.msra.mxu0 0.0
  %140 = vmatprep.subr.mxu0 0.0
  %141 = vmatpush2.msra.mxu0 0.0
  %142 = vmatprep.subr.mxu0 0.0
  %143 = vmatpush2.msra.mxu0 0.0
  %144 = vmatprep.subr.mxu0 0.0
  %145 = vmatpush2.msra.mxu0 0.0
  %146 = vmatprep.subr.mxu0 0.0
  %147 = vmatpush2.msra.mxu0 0.0
  %148 = vmatprep.subr.mxu0 0.0
  %149 = vmatpush2.msra.mxu0 0.0
  %150 = vmatprep.subr.mxu0 0.0
  %151 = vmatpush2.msra.mxu0 0.0
  %152 = vmatprep.subr.mxu0 0.0
  %153 = vmatpush2.msra.mxu0 0.0
  %154 = vmatprep.subr.mxu0 0.0
  %155 = vmatpush2.msra.mxu0 0.0
  %156 = vmatprep.mubr.f32.mxu0 0.0
  %157 = vmatmul.mubr.f32.gmra.mxu0 %v86
  %v158 = vpop.f32.mrf.mxu0
  %v159 = vadd.f32 %v82, %v158
  %v160 = vpop.f32.mrf.mxu0
  %161 = vdwg.mxu0
  %v162 = vld [vmem:[%s4] sm:$0xff]
  %v163 = vld [vmem:[%s4 + $0x8] sm:$0xff]
  %v164 = vld [vmem:[%s4 + $0x10] sm:$0xff]
  %v165 = vld [vmem:[%s4 + $0x18] sm:$0xff]
  %v166 = vld [vmem:[%s4 + $0x20] sm:$0xff]
  %v167 = vld [vmem:[%s4 + $0x28] sm:$0xff]
  %v168 = vld [vmem:[%s4 + $0x30] sm:$0xff]
  %v169 = vld [vmem:[%s4 + $0x38] sm:$0xff]
  %v170 = vld [vmem:[%s4 + $0x40] sm:$0xff]
  %v171 = vld [vmem:[%s4 + $0x48] sm:$0xff]
  %v172 = vld [vmem:[%s4 + $0x50] sm:$0xff]
  %v173 = vld [vmem:[%s4 + $0x58] sm:$0xff]
  %v174 = vld [vmem:[%s4 + $0x60] sm:$0xff]
  %v175 = vld [vmem:[%s4 + $0x68] sm:$0xff]
  %v176 = vld [vmem:[%s4 + $0x70] sm:$0xff]
  %v177 = vld [vmem:[%s4 + $0x78] sm:$0xff]
  %178 = vmatprep.subr.mxu0 0.0
  %179 = vmatpush1.msra.mxu0 %v177
  %180 = vmatprep.subr.mxu0 0.0
  %181 = vmatpush1.msra.mxu0 %v176
  %182 = vmatprep.subr.mxu0 0.0
  %183 = vmatpush1.msra.mxu0 %v175
  %184 = vmatprep.subr.mxu0 0.0
  %185 = vmatpush1.msra.mxu0 %v174
  %186 = vmatprep.subr.mxu0 0.0
  %187 = vmatpush1.msra.mxu0 %v173
  %188 = vmatprep.subr.mxu0 0.0
  %189 = vmatpush1.msra.mxu0 %v172
  %190 = vmatprep.subr.mxu0 0.0
  %191 = vmatpush1.msra.mxu0 %v171
  %192 = vmatprep.subr.mxu0 0.0
  %193 = vmatpush1.msra.mxu0 %v170
  %194 = vmatprep.subr.mxu0 0.0
  %195 = vmatpush1.msra.mxu0 %v169
  %196 = vmatprep.subr.mxu0 0.0
  %197 = vmatpush1.msra.mxu0 %v168
  %198 = vmatprep.subr.mxu0 0.0
  %199 = vmatpush1.msra.mxu0 %v167
  %200 = vmatprep.subr.mxu0 0.0
  %201 = vmatpush1.msra.mxu0 %v166
  %202 = vmatprep.subr.mxu0 0.0
  %203 = vmatpush1.msra.mxu0 %v165
  %204 = vmatprep.subr.mxu0 0.0
  %205 = vmatpush1.msra.mxu0 %v164
  %206 = vmatprep.subr.mxu0 0.0
  %207 = vmatpush1.msra.mxu0 %v163
  %208 = vmatprep.subr.mxu0 0.0
  %209 = vmatpush1.msra.mxu0 %v162
  %210 = vmatprep.subr.mxu0 0.0
  %211 = vmatpush2.msra.mxu0 0.0
  %212 = vmatprep.subr.mxu0 0.0
  %213 = vmatpush2.msra.mxu0 0.0
  %214 = vmatprep.subr.mxu0 0.0
  %215 = vmatpush2.msra.mxu0 0.0
  %216 = vmatprep.subr.mxu0 0.0
  %217 = vmatpush2.msra.mxu0 0.0
  %218 = vmatprep.subr.mxu0 0.0
  %219 = vmatpush2.msra.mxu0 0.0
  %220 = vmatprep.subr.mxu0 0.0
  %221 = vmatpush2.msra.mxu0 0.0
  %222 = vmatprep.subr.mxu0 0.0
  %223 = vmatpush2.msra.mxu0 0.0
  %224 = vmatprep.subr.mxu0 0.0
  %225 = vmatpush2.msra.mxu0 0.0
  %226 = vmatprep.subr.mxu0 0.0
  %227 = vmatpush2.msra.mxu0 0.0
  %228 = vmatprep.subr.mxu0 0.0
  %229 = vmatpush2.msra.mxu0 0.0
  %230 = vmatprep.subr.mxu0 0.0
  %231 = vmatpush2.msra.mxu0 0.0
  %232 = vmatprep.subr.mxu0 0.0
  %233 = vmatpush2.msra.mxu0 0.0
  %234 = vmatprep.subr.mxu0 0.0
  %235 = vmatpush2.msra.mxu0 0.0
  %236 = vmatprep.subr.mxu0 0.0
  %237 = vmatpush2.msra.mxu0 0.0
  %238 = vmatprep.subr.mxu0 0.0
  %239 = vmatpush2.msra.mxu0 0.0
  %240 = vmatprep.subr.mxu0 0.0
  %241 = vmatpush2.msra.mxu0 0.0
  %242 = vmatprep.mubr.f32.mxu0 0.0
  %243 = vmatmul.mubr.f32.gmra.mxu0 %v159
  %v244 = vpop.f32.mrf.mxu0
  %v245 = vadd.f32 0.0, %v244
  %v246 = vpop.f32.mrf.mxu0
  %247 = vdwg.mxu0
  %v248 = vld [vmem:[%s8] sm:$0xff]
  %v249 = vld [vmem:[%s8 + $0x8] sm:$0xff]
  %vm250 = vcmask 64512
  %v252 = vsel %vm250, %v248, 0
  %v255 = vsel %vm250, %v249, 0
  %257 = vmatprep.subr.mxu0 0.0
  %258 = vmatpush1.msra.mxu0 0.0
  %259 = vmatprep.subr.mxu0 0.0
  %260 = vmatpush1.msra.mxu0 0.0
  %261 = vmatprep.subr.mxu0 0.0
  %262 = vmatpush1.msra.mxu0 0.0
  %263 = vmatprep.subr.mxu0 0.0
  %264 = vmatpush1.msra.mxu0 0.0
  %265 = vmatprep.subr.mxu0 0.0
  %266 = vmatpush1.msra.mxu0 0.0
  %267 = vmatprep.subr.mxu0 0.0
  %268 = vmatpush1.msra.mxu0 0.0
  %269 = vmatprep.subr.mxu0 0.0
  %270 = vmatpush1.msra.mxu0 0.0
  %271 = vmatprep.subr.mxu0 0.0
  %272 = vmatpush1.msra.mxu0 0.0
  %273 = vmatprep.subr.mxu0 0.0
  %274 = vmatpush1.msra.mxu0 0.0
  %275 = vmatprep.subr.mxu0 0.0
  %276 = vmatpush1.msra.mxu0 0.0
  %277 = vmatprep.subr.mxu0 0.0
  %278 = vmatpush1.msra.mxu0 0.0
  %279 = vmatprep.subr.mxu0 0.0
  %280 = vmatpush1.msra.mxu0 0.0
  %281 = vmatprep.subr.mxu0 0.0
  %282 = vmatpush1.msra.mxu0 0.0
  %283 = vmatprep.subr.mxu0 0.0
  %284 = vmatpush1.msra.mxu0 0.0
  %285 = vmatprep.subr.mxu0 0.0
  %286 = vmatpush1.msra.mxu0 0.0
  %287 = vmatprep.subr.mxu0 0.0
  %288 = vmatpush1.msra.mxu0 %v71
  %289 = vmatprep.subr.mxu0 0.0
  %290 = vmatpush2.msra.mxu0 0.0
  %291 = vmatprep.subr.mxu0 0.0
  %292 = vmatpush2.msra.mxu0 0.0
  %293 = vmatprep.subr.mxu0 0.0
  %294 = vmatpush2.msra.mxu0 0.0
  %295 = vmatprep.subr.mxu0 0.0
  %296 = vmatpush2.msra.mxu0 0.0
  %297 = vmatprep.subr.mxu0 0.0
  %298 = vmatpush2.msra.mxu0 0.0
  %299 = vmatprep.subr.mxu0 0.0
  %300 = vmatpush2.msra.mxu0 0.0
  %301 = vmatprep.subr.mxu0 0.0
  %302 = vmatpush2.msra.mxu0 0.0
  %303 = vmatprep.subr.mxu0 0.0
  %304 = vmatpush2.msra.mxu0 0.0
  %305 = vmatprep.subr.mxu0 0.0
  %306 = vmatpush2.msra.mxu0 0.0
  %307 = vmatprep.subr.mxu0 0.0
  %308 = vmatpush2.msra.mxu0 0.0
  %309 = vmatprep.subr.mxu0 0.0
  %310 = vmatpush2.msra.mxu0 0.0
  %311 = vmatprep.subr.mxu0 0.0
  %312 = vmatpush2.msra.mxu0 0.0
  %313 = vmatprep.subr.mxu0 0.0
  %314 = vmatpush2.msra.mxu0 0.0
  %315 = vmatprep.subr.mxu0 0.0
  %316 = vmatpush2.msra.mxu0 0.0
  %317 = vmatprep.subr.mxu0 0.0
  %318 = vmatpush2.msra.mxu0 0.0
  %319 = vmatprep.subr.mxu0 0.0
  %320 = vmatpush2.msra.mxu0 0.0
  %321 = vmatprep.mubr.f32.mxu0 0.0
  %322 = vmatmul.mubr.f32.gmra.mxu0 %v252
  %v323 = vpop.f32.mrf.mxu0
  %v324 = vadd.f32 0.0, %v323
  %v325 = vpop.f32.mrf.mxu0
  %326 = vmatprep.mubr.f32.mxu0 0.0
  %327 = vmatmul.mubr.f32.gmra.mxu0 %v255
  %v328 = vpop.f32.mrf.mxu0
  %v329 = vadd.f32 0.0, %v328
  %v330 = vpop.f32.mrf.mxu0
  %331 = vdwg.mxu0
  %v332 = vld [vmem:[%s9] sm:$0xff]
  %v333 = vld [vmem:[%s9 + $0x8] sm:$0xff]
  %v335 = vsel %vm250, %v332, 0
  %v338 = vsel %vm250, %v333, 0
  %340 = vmatprep.subr.mxu0 0.0
  %341 = vmatpush1.msra.mxu0 0.0
  %342 = vmatprep.subr.mxu0 0.0
  %343 = vmatpush1.msra.mxu0 0.0
  %344 = vmatprep.subr.mxu0 0.0
  %345 = vmatpush1.msra.mxu0 0.0
  %346 = vmatprep.subr.mxu0 0.0
  %347 = vmatpush1.msra.mxu0 0.0
  %348 = vmatprep.subr.mxu0 0.0
  %349 = vmatpush1.msra.mxu0 0.0
  %350 = vmatprep.subr.mxu0 0.0
  %351 = vmatpush1.msra.mxu0 0.0
  %352 = vmatprep.subr.mxu0 0.0
  %353 = vmatpush1.msra.mxu0 0.0
  %354 = vmatprep.subr.mxu0 0.0
  %355 = vmatpush1.msra.mxu0 0.0
  %356 = vmatprep.subr.mxu0 0.0
  %357 = vmatpush1.msra.mxu0 0.0
  %358 = vmatprep.subr.mxu0 0.0
  %359 = vmatpush1.msra.mxu0 0.0
  %360 = vmatprep.subr.mxu0 0.0
  %361 = vmatpush1.msra.mxu0 0.0
  %362 = vmatprep.subr.mxu0 0.0
  %363 = vmatpush1.msra.mxu0 0.0
  %364 = vmatprep.subr.mxu0 0.0
  %365 = vmatpush1.msra.mxu0 0.0
  %366 = vmatprep.subr.mxu0 0.0
  %367 = vmatpush1.msra.mxu0 0.0
  %368 = vmatprep.subr.mxu0 0.0
  %369 = vmatpush1.msra.mxu0 0.0
  %370 = vmatprep.subr.mxu0 0.0
  %371 = vmatpush1.msra.mxu0 %v245
  %372 = vmatprep.subr.mxu0 0.0
  %373 = vmatpush2.msra.mxu0 0.0
  %374 = vmatprep.subr.mxu0 0.0
  %375 = vmatpush2.msra.mxu0 0.0
  %376 = vmatprep.subr.mxu0 0.0
  %377 = vmatpush2.msra.mxu0 0.0
  %378 = vmatprep.subr.mxu0 0.0
  %379 = vmatpush2.msra.mxu0 0.0
  %380 = vmatprep.subr.mxu0 0.0
  %381 = vmatpush2.msra.mxu0 0.0
  %382 = vmatprep.subr.mxu0 0.0
  %383 = vmatpush2.msra.mxu0 0.0
  %384 = vmatprep.subr.mxu0 0.0
  %385 = vmatpush2.msra.mxu0 0.0
  %386 = vmatprep.subr.mxu0 0.0
  %387 = vmatpush2.msra.mxu0 0.0
  %388 = vmatprep.subr.mxu0 0.0
  %389 = vmatpush2.msra.mxu0 0.0
  %390 = vmatprep.subr.mxu0 0.0
  %391 = vmatpush2.msra.mxu0 0.0
  %392 = vmatprep.subr.mxu0 0.0
  %393 = vmatpush2.msra.mxu0 0.0
  %394 = vmatprep.subr.mxu0 0.0
  %395 = vmatpush2.msra.mxu0 0.0
  %396 = vmatprep.subr.mxu0 0.0
  %397 = vmatpush2.msra.mxu0 0.0
  %398 = vmatprep.subr.mxu0 0.0
  %399 = vmatpush2.msra.mxu0 0.0
  %400 = vmatprep.subr.mxu0 0.0
  %401 = vmatpush2.msra.mxu0 0.0
  %402 = vmatprep.subr.mxu0 0.0
  %403 = vmatpush2.msra.mxu0 0.0
  %404 = vmatprep.mubr.f32.mxu0 0.0
  %405 = vmatmul.mubr.f32.gmra.mxu0 %v335
  %v406 = vpop.f32.mrf.mxu0
  %v407 = vadd.f32 0.0, %v406
  %v408 = vpop.f32.mrf.mxu0
  %409 = vmatprep.mubr.f32.mxu0 0.0
  %410 = vmatmul.mubr.f32.gmra.mxu0 %v338
  %v411 = vpop.f32.mrf.mxu0
  %v412 = vadd.f32 0.0, %v411
  %v413 = vpop.f32.mrf.mxu0
  %414 = vdwg.mxu0
  %v415 = vld [vmem:[%s10] sm:$0x3]
  %vm416 = vcmask 130048
  %v418 = vsel %vm416, %v415, 0
  %420 = vmatprep.subr.mxu0 0.0
  %421 = vmatpush1.msra.mxu0 0.0
  %422 = vmatprep.subr.mxu0 0.0
  %423 = vmatpush1.msra.mxu0 0.0
  %424 = vmatprep.subr.mxu0 0.0
  %425 = vmatpush1.msra.mxu0 0.0
  %426 = vmatprep.subr.mxu0 0.0
  %427 = vmatpush1.msra.mxu0 0.0
  %428 = vmatprep.subr.mxu0 0.0
  %429 = vmatpush1.msra.mxu0 0.0
  %430 = vmatprep.subr.mxu0 0.0
  %431 = vmatpush1.msra.mxu0 0.0
  %432 = vmatprep.subr.mxu0 0.0
  %433 = vmatpush1.msra.mxu0 0.0
  %434 = vmatprep.subr.mxu0 0.0
  %435 = vmatpush1.msra.mxu0 0.0
  %436 = vmatprep.subr.mxu0 0.0
  %437 = vmatpush1.msra.mxu0 0.0
  %438 = vmatprep.subr.mxu0 0.0
  %439 = vmatpush1.msra.mxu0 0.0
  %440 = vmatprep.subr.mxu0 0.0
  %441 = vmatpush1.msra.mxu0 0.0
  %442 = vmatprep.subr.mxu0 0.0
  %443 = vmatpush1.msra.mxu0 0.0
  %444 = vmatprep.subr.mxu0 0.0
  %445 = vmatpush1.msra.mxu0 0.0
  %446 = vmatprep.subr.mxu0 0.0
  %447 = vmatpush1.msra.mxu0 0.0
  %448 = vmatprep.subr.mxu0 0.0
  %449 = vmatpush1.msra.mxu0 %v329
  %450 = vmatprep.subr.mxu0 0.0
  %451 = vmatpush1.msra.mxu0 %v324
  %452 = vmatprep.subr.mxu0 0.0
  %453 = vmatpush2.msra.mxu0 0.0
  %454 = vmatprep.subr.mxu0 0.0
  %455 = vmatpush2.msra.mxu0 0.0
  %456 = vmatprep.subr.mxu0 0.0
  %457 = vmatpush2.msra.mxu0 0.0
  %458 = vmatprep.subr.mxu0 0.0
  %459 = vmatpush2.msra.mxu0 0.0
  %460 = vmatprep.subr.mxu0 0.0
  %461 = vmatpush2.msra.mxu0 0.0
  %462 = vmatprep.subr.mxu0 0.0
  %463 = vmatpush2.msra.mxu0 0.0
  %464 = vmatprep.subr.mxu0 0.0
  %465 = vmatpush2.msra.mxu0 0.0
  %466 = vmatprep.subr.mxu0 0.0
  %467 = vmatpush2.msra.mxu0 0.0
  %468 = vmatprep.subr.mxu0 0.0
  %469 = vmatpush2.msra.mxu0 0.0
  %470 = vmatprep.subr.mxu0 0.0
  %471 = vmatpush2.msra.mxu0 0.0
  %472 = vmatprep.subr.mxu0 0.0
  %473 = vmatpush2.msra.mxu0 0.0
  %474 = vmatprep.subr.mxu0 0.0
  %475 = vmatpush2.msra.mxu0 0.0
  %476 = vmatprep.subr.mxu0 0.0
  %477 = vmatpush2.msra.mxu0 0.0
  %478 = vmatprep.subr.mxu0 0.0
  %479 = vmatpush2.msra.mxu0 0.0
  %480 = vmatprep.subr.mxu0 0.0
  %481 = vmatpush2.msra.mxu0 0.0
  %482 = vmatprep.subr.mxu0 0.0
  %483 = vmatpush2.msra.mxu0 0.0
  %484 = vmatprep.mubr.f32.mxu0 0.0
  %485 = vmatmul.mubr.f32.gmra.mxu0 %v418
  %v486 = vpop.f32.mrf.mxu0
  %v487 = vadd.f32 0.0, %v486
  %v488 = vpop.f32.mrf.mxu0
  %489 = vdwg.mxu0
  %v490 = vld [vmem:[%s11] sm:$0x3]
  %v492 = vsel %vm416, %v490, 0
  %494 = vmatprep.subr.mxu0 0.0
  %495 = vmatpush1.msra.mxu0 0.0
  %496 = vmatprep.subr.mxu0 0.0
  %497 = vmatpush1.msra.mxu0 0.0
  %498 = vmatprep.subr.mxu0 0.0
  %499 = vmatpush1.msra.mxu0 0.0
  %500 = vmatprep.subr.mxu0 0.0
  %501 = vmatpush1.msra.mxu0 0.0
  %502 = vmatprep.subr.mxu0 0.0
  %503 = vmatpush1.msra.mxu0 0.0
  %504 = vmatprep.subr.mxu0 0.0
  %505 = vmatpush1.msra.mxu0 0.0
  %506 = vmatprep.subr.mxu0 0.0
  %507 = vmatpush1.msra.mxu0 0.0
  %508 = vmatprep.subr.mxu0 0.0
  %509 = vmatpush1.msra.mxu0 0.0
  %510 = vmatprep.subr.mxu0 0.0
  %511 = vmatpush1.msra.mxu0 0.0
  %512 = vmatprep.subr.mxu0 0.0
  %513 = vmatpush1.msra.mxu0 0.0
  %514 = vmatprep.subr.mxu0 0.0
  %515 = vmatpush1.msra.mxu0 0.0
  %516 = vmatprep.subr.mxu0 0.0
  %517 = vmatpush1.msra.mxu0 0.0
  %518 = vmatprep.subr.mxu0 0.0
  %519 = vmatpush1.msra.mxu0 0.0
  %520 = vmatprep.subr.mxu0 0.0
  %521 = vmatpush1.msra.mxu0 0.0
  %522 = vmatprep.subr.mxu0 0.0
  %523 = vmatpush1.msra.mxu0 %v329
  %524 = vmatprep.subr.mxu0 0.0
  %525 = vmatpush1.msra.mxu0 %v324
  %526 = vmatprep.subr.mxu0 0.0
  %527 = vmatpush2.msra.mxu0 0.0
  %528 = vmatprep.subr.mxu0 0.0
  %529 = vmatpush2.msra.mxu0 0.0
  %530 = vmatprep.subr.mxu0 0.0
  %531 = vmatpush2.msra.mxu0 0.0
  %532 = vmatprep.subr.mxu0 0.0
  %533 = vmatpush2.msra.mxu0 0.0
  %534 = vmatprep.subr.mxu0 0.0
  %535 = vmatpush2.msra.mxu0 0.0
  %536 = vmatprep.subr.mxu0 0.0
  %537 = vmatpush2.msra.mxu0 0.0
  %538 = vmatprep.subr.mxu0 0.0
  %539 = vmatpush2.msra.mxu0 0.0
  %540 = vmatprep.subr.mxu0 0.0
  %541 = vmatpush2.msra.mxu0 0.0
  %542 = vmatprep.subr.mxu0 0.0
  %543 = vmatpush2.msra.mxu0 0.0
  %544 = vmatprep.subr.mxu0 0.0
  %545 = vmatpush2.msra.mxu0 0.0
  %546 = vmatprep.subr.mxu0 0.0
  %547 = vmatpush2.msra.mxu0 0.0
  %548 = vmatprep.subr.mxu0 0.0
  %549 = vmatpush2.msra.mxu0 0.0
  %550 = vmatprep.subr.mxu0 0.0
  %551 = vmatpush2.msra.mxu0 0.0
  %552 = vmatprep.subr.mxu0 0.0
  %553 = vmatpush2.msra.mxu0 0.0
  %554 = vmatprep.subr.mxu0 0.0
  %555 = vmatpush2.msra.mxu0 0.0
  %556 = vmatprep.subr.mxu0 0.0
  %557 = vmatpush2.msra.mxu0 0.0
  %558 = vmatprep.mubr.f32.mxu0 0.0
  %559 = vmatmul.mubr.f32.gmra.mxu0 %v492
  %v560 = vpop.f32.mrf.mxu0
  %v561 = vadd.f32 0.0, %v560
  %v562 = vpop.f32.mrf.mxu0
  %563 = vdwg.mxu0
  %v564 = vld [vmem:[%s12] sm:$0x3]
  %v566 = vsel %vm416, %v564, 0
  %568 = vmatprep.subr.mxu0 0.0
  %569 = vmatpush1.msra.mxu0 0.0
  %570 = vmatprep.subr.mxu0 0.0
  %571 = vmatpush1.msra.mxu0 0.0
  %572 = vmatprep.subr.mxu0 0.0
  %573 = vmatpush1.msra.mxu0 0.0
  %574 = vmatprep.subr.mxu0 0.0
  %575 = vmatpush1.msra.mxu0 0.0
  %576 = vmatprep.subr.mxu0 0.0
  %577 = vmatpush1.msra.mxu0 0.0
  %578 = vmatprep.subr.mxu0 0.0
  %579 = vmatpush1.msra.mxu0 0.0
  %580 = vmatprep.subr.mxu0 0.0
  %581 = vmatpush1.msra.mxu0 0.0
  %582 = vmatprep.subr.mxu0 0.0
  %583 = vmatpush1.msra.mxu0 0.0
  %584 = vmatprep.subr.mxu0 0.0
  %585 = vmatpush1.msra.mxu0 0.0
  %586 = vmatprep.subr.mxu0 0.0
  %587 = vmatpush1.msra.mxu0 0.0
  %588 = vmatprep.subr.mxu0 0.0
  %589 = vmatpush1.msra.mxu0 0.0
  %590 = vmatprep.subr.mxu0 0.0
  %591 = vmatpush1.msra.mxu0 0.0
  %592 = vmatprep.subr.mxu0 0.0
  %593 = vmatpush1.msra.mxu0 0.0
  %594 = vmatprep.subr.mxu0 0.0
  %595 = vmatpush1.msra.mxu0 0.0
  %596 = vmatprep.subr.mxu0 0.0
  %597 = vmatpush1.msra.mxu0 %v412
  %598 = vmatprep.subr.mxu0 0.0
  %599 = vmatpush1.msra.mxu0 %v407
  %600 = vmatprep.subr.mxu0 0.0
  %601 = vmatpush2.msra.mxu0 0.0
  %602 = vmatprep.subr.mxu0 0.0
  %603 = vmatpush2.msra.mxu0 0.0
  %604 = vmatprep.subr.mxu0 0.0
  %605 = vmatpush2.msra.mxu0 0.0
  %606 = vmatprep.subr.mxu0 0.0
  %607 = vmatpush2.msra.mxu0 0.0
  %608 = vmatprep.subr.mxu0 0.0
  %609 = vmatpush2.msra.mxu0 0.0
  %610 = vmatprep.subr.mxu0 0.0
  %611 = vmatpush2.msra.mxu0 0.0
  %612 = vmatprep.subr.mxu0 0.0
  %613 = vmatpush2.msra.mxu0 0.0
  %614 = vmatprep.subr.mxu0 0.0
  %615 = vmatpush2.msra.mxu0 0.0
  %616 = vmatprep.subr.mxu0 0.0
  %617 = vmatpush2.msra.mxu0 0.0
  %618 = vmatprep.subr.mxu0 0.0
  %619 = vmatpush2.msra.mxu0 0.0
  %620 = vmatprep.subr.mxu0 0.0
  %621 = vmatpush2.msra.mxu0 0.0
  %622 = vmatprep.subr.mxu0 0.0
  %623 = vmatpush2.msra.mxu0 0.0
  %624 = vmatprep.subr.mxu0 0.0
  %625 = vmatpush2.msra.mxu0 0.0
  %626 = vmatprep.subr.mxu0 0.0
  %627 = vmatpush2.msra.mxu0 0.0
  %628 = vmatprep.subr.mxu0 0.0
  %629 = vmatpush2.msra.mxu0 0.0
  %630 = vmatprep.subr.mxu0 0.0
  %631 = vmatpush2.msra.mxu0 0.0
  %632 = vmatprep.mubr.f32.mxu0 0.0
  %633 = vmatmul.mubr.f32.gmra.mxu0 %v566
  %v634 = vpop.f32.mrf.mxu0
  %v635 = vadd.f32 0.0, %v634
  %v636 = vpop.f32.mrf.mxu0
  %637 = vdwg.mxu0
  %v639 = vsel %vm416, %v561, 0
  %641 = vmatprep.subr.mxu0 0.0
  %642 = vmatpush1.msra.mxu0 0.0
  %643 = vmatprep.subr.mxu0 0.0
  %644 = vmatpush1.msra.mxu0 0.0
  %645 = vmatprep.subr.mxu0 0.0
  %646 = vmatpush1.msra.mxu0 0.0
  %647 = vmatprep.subr.mxu0 0.0
  %648 = vmatpush1.msra.mxu0 0.0
  %649 = vmatprep.subr.mxu0 0.0
  %650 = vmatpush1.msra.mxu0 0.0
  %651 = vmatprep.subr.mxu0 0.0
  %652 = vmatpush1.msra.mxu0 0.0
  %653 = vmatprep.subr.mxu0 0.0
  %654 = vmatpush1.msra.mxu0 0.0
  %655 = vmatprep.subr.mxu0 0.0
  %656 = vmatpush1.msra.mxu0 0.0
  %657 = vmatprep.subr.mxu0 0.0
  %658 = vmatpush1.msra.mxu0 0.0
  %659 = vmatprep.subr.mxu0 0.0
  %660 = vmatpush1.msra.mxu0 0.0
  %661 = vmatprep.subr.mxu0 0.0
  %662 = vmatpush1.msra.mxu0 0.0
  %663 = vmatprep.subr.mxu0 0.0
  %664 = vmatpush1.msra.mxu0 0.0
  %665 = vmatprep.subr.mxu0 0.0
  %666 = vmatpush1.msra.mxu0 0.0
  %667 = vmatprep.subr.mxu0 0.0
  %668 = vmatpush1.msra.mxu0 0.0
  %669 = vmatprep.subr.mxu0 0.0
  %670 = vmatpush1.msra.mxu0 %v73
  %671 = vmatprep.subr.mxu0 0.0
  %672 = vmatpush1.msra.mxu0 %v72
  %673 = vmatprep.subr.mxu0 0.0
  %674 = vmatpush2.msra.mxu0 0.0
  %675 = vmatprep.subr.mxu0 0.0
  %676 = vmatpush2.msra.mxu0 0.0
  %677 = vmatprep.subr.mxu0 0.0
  %678 = vmatpush2.msra.mxu0 0.0
  %679 = vmatprep.subr.mxu0 0.0
  %680 = vmatpush2.msra.mxu0 0.0
  %681 = vmatprep.subr.mxu0 0.0
  %682 = vmatpush2.msra.mxu0 0.0
  %683 = vmatprep.subr.mxu0 0.0
  %684 = vmatpush2.msra.mxu0 0.0
  %685 = vmatprep.subr.mxu0 0.0
  %686 = vmatpush2.msra.mxu0 0.0
  %687 = vmatprep.subr.mxu0 0.0
  %688 = vmatpush2.msra.mxu0 0.0
  %689 = vmatprep.subr.mxu0 0.0
  %690 = vmatpush2.msra.mxu0 0.0
  %691 = vmatprep.subr.mxu0 0.0
  %692 = vmatpush2.msra.mxu0 0.0
  %693 = vmatprep.subr.mxu0 0.0
  %694 = vmatpush2.msra.mxu0 0.0
  %695 = vmatprep.subr.mxu0 0.0
  %696 = vmatpush2.msra.mxu0 0.0
  %697 = vmatprep.subr.mxu0 0.0
  %698 = vmatpush2.msra.mxu0 0.0
  %699 = vmatprep.subr.mxu0 0.0
  %700 = vmatpush2.msra.mxu0 0.0
  %701 = vmatprep.subr.mxu0 0.0
  %702 = vmatpush2.msra.mxu0 0.0
  %703 = vmatprep.subr.mxu0 0.0
  %704 = vmatpush2.msra.mxu0 0.0
  %705 = vmatprep.mubr.f32.mxu0 0.0
  %706 = vmatmul.mubr.f32.gmra.mxu0 %v639
  %v707 = vpop.f32.mrf.mxu0
  %v708 = vadd.f32 0.0, %v707
  %v709 = vpop.f32.mrf.mxu0
  %710 = vdwg.mxu0
  %v712 = vsel %vm416, %v487, 0
  %714 = vmatprep.subr.mxu0 0.0
  %715 = vmatpush1.msra.mxu0 0.0
  %716 = vmatprep.subr.mxu0 0.0
  %717 = vmatpush1.msra.mxu0 0.0
  %718 = vmatprep.subr.mxu0 0.0
  %719 = vmatpush1.msra.mxu0 0.0
  %720 = vmatprep.subr.mxu0 0.0
  %721 = vmatpush1.msra.mxu0 0.0
  %722 = vmatprep.subr.mxu0 0.0
  %723 = vmatpush1.msra.mxu0 0.0
  %724 = vmatprep.subr.mxu0 0.0
  %725 = vmatpush1.msra.mxu0 0.0
  %726 = vmatprep.subr.mxu0 0.0
  %727 = vmatpush1.msra.mxu0 0.0
  %728 = vmatprep.subr.mxu0 0.0
  %729 = vmatpush1.msra.mxu0 0.0
  %730 = vmatprep.subr.mxu0 0.0
  %731 = vmatpush1.msra.mxu0 0.0
  %732 = vmatprep.subr.mxu0 0.0
  %733 = vmatpush1.msra.mxu0 0.0
  %734 = vmatprep.subr.mxu0 0.0
  %735 = vmatpush1.msra.mxu0 0.0
  %736 = vmatprep.subr.mxu0 0.0
  %737 = vmatpush1.msra.mxu0 0.0
  %738 = vmatprep.subr.mxu0 0.0
  %739 = vmatpush1.msra.mxu0 0.0
  %740 = vmatprep.subr.mxu0 0.0
  %741 = vmatpush1.msra.mxu0 0.0
  %742 = vmatprep.subr.mxu0 0.0
  %743 = vmatpush1.msra.mxu0 %v75
  %744 = vmatprep.subr.mxu0 0.0
  %745 = vmatpush1.msra.mxu0 %v74
  %746 = vmatprep.subr.mxu0 0.0
  %747 = vmatpush2.msra.mxu0 0.0
  %748 = vmatprep.subr.mxu0 0.0
  %749 = vmatpush2.msra.mxu0 0.0
  %750 = vmatprep.subr.mxu0 0.0
  %751 = vmatpush2.msra.mxu0 0.0
  %752 = vmatprep.subr.mxu0 0.0
  %753 = vmatpush2.msra.mxu0 0.0
  %754 = vmatprep.subr.mxu0 0.0
  %755 = vmatpush2.msra.mxu0 0.0
  %756 = vmatprep.subr.mxu0 0.0
  %757 = vmatpush2.msra.mxu0 0.0
  %758 = vmatprep.subr.mxu0 0.0
  %759 = vmatpush2.msra.mxu0 0.0
  %760 = vmatprep.subr.mxu0 0.0
  %761 = vmatpush2.msra.mxu0 0.0
  %762 = vmatprep.subr.mxu0 0.0
  %763 = vmatpush2.msra.mxu0 0.0
  %764 = vmatprep.subr.mxu0 0.0
  %765 = vmatpush2.msra.mxu0 0.0
  %766 = vmatprep.subr.mxu0 0.0
  %767 = vmatpush2.msra.mxu0 0.0
  %768 = vmatprep.subr.mxu0 0.0
  %769 = vmatpush2.msra.mxu0 0.0
  %770 = vmatprep.subr.mxu0 0.0
  %771 = vmatpush2.msra.mxu0 0.0
  %772 = vmatprep.subr.mxu0 0.0
  %773 = vmatpush2.msra.mxu0 0.0
  %774 = vmatprep.subr.mxu0 0.0
  %775 = vmatpush2.msra.mxu0 0.0
  %776 = vmatprep.subr.mxu0 0.0
  %777 = vmatpush2.msra.mxu0 0.0
  %778 = vmatprep.mubr.f32.mxu0 0.0
  %779 = vmatmul.mubr.f32.gmra.mxu0 %v712
  %v780 = vpop.f32.mrf.mxu0
  %v781 = vadd.f32 %v708, %v780
  %v782 = vpop.f32.mrf.mxu0
  %783 = vdwg.mxu0
  %v784 = vadd.f32 %v781, %v635
  %vm785 = vcmp.gt.f32.partialorder %v784, 0.0
  %v786 = vmul.f32 %v784, 0.2
  %v787 = vsel %vm785, %v784, %v786
  %vm788 = vcmp.gt.f32.partialorder %v72, 0.0
  %vm789 = vcmp.gt.f32.partialorder %v73, 0.0
  %v792 = vunpack.c.l.s4 1966171168
  %v793 = vunpack.c.0.s8 %v792
  %v794 = vlaneseq
  %v795 = vshrl.u32 %v794, 7
  %v796 = vsub.s32 %v793, %v795
  %v797 = vrot.slane %v787, %v796
  %v798 = vcombine.high %v797, %v797
  %v800 = vunpack.c.l.s4 1966171168
  %v801 = vunpack.c.0.s8 %v800
  %v802 = vlaneseq
  %v803 = vshrl.u32 %v802, 7
  %v804 = vsub.s32 %v801, %v803
  %v805 = vrot.slane %v797, %v804
  %v807 = vunpack.c.l.s4 1966171168
  %v808 = vunpack.c.0.s8 %v807
  %v809 = vlaneseq
  %v810 = vshrl.u32 %v809, 7
  %v811 = vsub.s32 %v808, %v810
  %v812 = vrot.slane %v798, %v811
  %v813 = vsel %vm788, 1, 0
  %v814 = vsel %vm789, 1, 0
  %vm815 = vcmp.eq.s32.totalorder %v813, 1
  %vm816 = vcmp.eq.s32.totalorder %v814, 1
  %v817 = vlaneseq
  %v818 = vshrl.u32 %v817, 7
  %v819 = vsub.s32 0, %v818
  %v820 = vrot.slane %v805, %v819
  %v821 = vlaneseq
  %v822 = vshrl.u32 %v821, 7
  %v823 = vsub.s32 0, %v822
  %v824 = vrot.slane %v812, %v823
  %v827 = vsel %vm815, %v820, -1e+30
  %v828 = vsel %vm816, %v820, -1e+30
  %v829 = vsel %vm815, %v824, -1e+30
  %v830 = vsel %vm816, %v824, -1e+30
  %831 = vmax.xlane.f32.xlu0 %v827
  %v832 = vpop.xlane.xlu0 %831
  %833 = vmax.xlane.f32.xlu0 %v828
  %v834 = vpop.xlane.xlu0 %833
  %835 = vmax.xlane.f32.xlu0 %v829
  %v836 = vpop.xlane.xlu0 %835
  %837 = vmax.xlane.f32.xlu0 %v830
  %v838 = vpop.xlane.xlu0 %837
  %v839 = vsub.f32 %v827, %v832
  %v840 = vsub.f32 %v828, %v834
  %v841 = vsub.f32 %v829, %v836
  %v842 = vsub.f32 %v830, %v838
  %v843 = vmul.f32 %v839, 1.442695
  %v844 = vpow.pop %v843
  %v845 = vmul.f32 %v840, 1.442695
  %v846 = vpow.pop %v845
  %v847 = vmul.f32 %v841, 1.442695
  %v848 = vpow.pop %v847
  %v849 = vmul.f32 %v842, 1.442695
  %v850 = vpow.pop %v849
  %851 = vadd.xlane.f32.xlu0 %v844
  %v852 = vpop.xlane.xlu0 %851
  %853 = vadd.xlane.f32.xlu0 %v846
  %v854 = vpop.xlane.xlu0 %853
  %855 = vadd.xlane.f32.xlu0 %v848
  %v856 = vpop.xlane.xlu0 %855
  %857 = vadd.xlane.f32.xlu0 %v850
  %v858 = vpop.xlane.xlu0 %857
  %v859 = vrcp.pop %v852
  %v860 = vrcp.pop %v854
  %v861 = vrcp.pop %v856
  %v862 = vrcp.pop %v858
  %v863 = vmul.f32 %v844, %v859
  %v864 = vmul.f32 %v846, %v860
  %v865 = vmul.f32 %v848, %v861
  %v866 = vmul.f32 %v850, %v862
  %v868 = vsel %vm416, %v324, 0
  %v871 = vsel %vm416, %v329, 0
  %873 = vmatprep.subr.mxu0 0.0
  %874 = vmatpush1.msra.mxu0 0.0
  %875 = vmatprep.subr.mxu0 0.0
  %876 = vmatpush1.msra.mxu0 0.0
  %877 = vmatprep.subr.mxu0 0.0
  %878 = vmatpush1.msra.mxu0 0.0
  %879 = vmatprep.subr.mxu0 0.0
  %880 = vmatpush1.msra.mxu0 0.0
  %881 = vmatprep.subr.mxu0 0.0
  %882 = vmatpush1.msra.mxu0 0.0
  %883 = vmatprep.subr.mxu0 0.0
  %884 = vmatpush1.msra.mxu0 0.0
  %885 = vmatprep.subr.mxu0 0.0
  %886 = vmatpush1.msra.mxu0 0.0
  %887 = vmatprep.subr.mxu0 0.0
  %888 = vmatpush1.msra.mxu0 0.0
  %889 = vmatprep.subr.mxu0 0.0
  %890 = vmatpush1.msra.mxu0 0.0
  %891 = vmatprep.subr.mxu0 0.0
  %892 = vmatpush1.msra.mxu0 0.0
  %893 = vmatprep.subr.mxu0 0.0
  %894 = vmatpush1.msra.mxu0 0.0
  %895 = vmatprep.subr.mxu0 0.0
  %896 = vmatpush1.msra.mxu0 0.0
  %897 = vmatprep.subr.mxu0 0.0
  %898 = vmatpush1.msra.mxu0 0.0
  %899 = vmatprep.subr.mxu0 0.0
  %900 = vmatpush1.msra.mxu0 0.0
  %901 = vmatprep.subr.mxu0 0.0
  %902 = vmatpush1.msra.mxu0 %v75
  %903 = vmatprep.subr.mxu0 0.0
  %904 = vmatpush1.msra.mxu0 %v74
  %905 = vmatprep.subr.mxu0 0.0
  %906 = vmatpush2.msra.mxu0 0.0
  %907 = vmatprep.subr.mxu0 0.0
  %908 = vmatpush2.msra.mxu0 0.0
  %909 = vmatprep.subr.mxu0 0.0
  %910 = vmatpush2.msra.mxu0 0.0
  %911 = vmatprep.subr.mxu0 0.0
  %912 = vmatpush2.msra.mxu0 0.0
  %913 = vmatprep.subr.mxu0 0.0
  %914 = vmatpush2.msra.mxu0 0.0
  %915 = vmatprep.subr.mxu0 0.0
  %916 = vmatpush2.msra.mxu0 0.0
  %917 = vmatprep.subr.mxu0 0.0
  %918 = vmatpush2.msra.mxu0 0.0
  %919 = vmatprep.subr.mxu0 0.0
  %920 = vmatpush2.msra.mxu0 0.0
  %921 = vmatprep.subr.mxu0 0.0
  %922 = vmatpush2.msra.mxu0 0.0
  %923 = vmatprep.subr.mxu0 0.0
  %924 = vmatpush2.msra.mxu0 0.0
  %925 = vmatprep.subr.mxu0 0.0
  %926 = vmatpush2.msra.mxu0 0.0
  %927 = vmatprep.subr.mxu0 0.0
  %928 = vmatpush2.msra.mxu0 0.0
  %929 = vmatprep.subr.mxu0 0.0
  %930 = vmatpush2.msra.mxu0 0.0
  %931 = vmatprep.subr.mxu0 0.0
  %932 = vmatpush2.msra.mxu0 0.0
  %933 = vmatprep.subr.mxu0 0.0
  %934 = vmatpush2.msra.mxu0 0.0
  %935 = vmatprep.subr.mxu0 0.0
  %936 = vmatpush2.msra.mxu0 0.0
  %937 = vmatprep.mubr.f32.mxu0 0.0
  %938 = vmatmul.mubr.f32.gmra.mxu0 %v868
  %v939 = vpop.f32.mrf.mxu0
  %v940 = vadd.f32 0.0, %v939
  %v941 = vpop.f32.mrf.mxu0
  %942 = vmatprep.mubr.f32.mxu0 0.0
  %943 = vmatmul.mubr.f32.gmra.mxu0 %v871
  %v944 = vpop.f32.mrf.mxu0
  %v945 = vadd.f32 0.0, %v944
  %v946 = vpop.f32.mrf.mxu0
  %947 = vdwg.mxu0
  %948 = vmatprep.subr.mxu0 0.0
  %949 = vmatpush1.xpose.msra.mxu0 0.0
  %950 = vmatprep.subr.mxu0 0.0
  %951 = vmatpush1.xpose.msra.mxu0 0.0
  %952 = vmatprep.subr.mxu0 0.0
  %953 = vmatpush1.xpose.msra.mxu0 0.0
  %954 = vmatprep.subr.mxu0 0.0
  %955 = vmatpush1.xpose.msra.mxu0 0.0
  %956 = vmatprep.subr.mxu0 0.0
  %957 = vmatpush1.xpose.msra.mxu0 0.0
  %958 = vmatprep.subr.mxu0 0.0
  %959 = vmatpush1.xpose.msra.mxu0 0.0
  %960 = vmatprep.subr.mxu0 0.0
  %961 = vmatpush1.xpose.msra.mxu0 0.0
  %962 = vmatprep.subr.mxu0 0.0
  %963 = vmatpush1.xpose.msra.mxu0 0.0
  %964 = vmatprep.subr.mxu0 0.0
  %965 = vmatpush1.xpose.msra.mxu0 0.0
  %966 = vmatprep.subr.mxu0 0.0
  %967 = vmatpush1.xpose.msra.mxu0 0.0
  %968 = vmatprep.subr.mxu0 0.0
  %969 = vmatpush1.xpose.msra.mxu0 0.0
  %970 = vmatprep.subr.mxu0 0.0
  %971 = vmatpush1.xpose.msra.mxu0 0.0
  %972 = vmatprep.subr.mxu0 0.0
  %973 = vmatpush1.xpose.msra.mxu0 0.0
  %974 = vmatprep.subr.mxu0 0.0
  %975 = vmatpush1.xpose.msra.mxu0 0.0
  %976 = vmatprep.subr.mxu0 0.0
  %977 = vmatpush1.xpose.msra.mxu0 0.0
  %978 = vmatprep.subr.mxu0 0.0
  %979 = vmatpush1.xpose.msra.mxu0 %v940
  %980 = vmatprep.subr.mxu0 0.0
  %981 = vmatpush2.xpose.msra.mxu0 0.0
  %982 = vmatprep.subr.mxu0 0.0
  %983 = vmatpush2.xpose.msra.mxu0 0.0
  %984 = vmatprep.subr.mxu0 0.0
  %985 = vmatpush2.xpose.msra.mxu0 0.0
  %986 = vmatprep.subr.mxu0 0.0
  %987 = vmatpush2.xpose.msra.mxu0 0.0
  %988 = vmatprep.subr.mxu0 0.0
  %989 = vmatpush2.xpose.msra.mxu0 0.0
  %990 = vmatprep.subr.mxu0 0.0
  %991 = vmatpush2.xpose.msra.mxu0 0.0
  %992 = vmatprep.subr.mxu0 0.0
  %993 = vmatpush2.xpose.msra.mxu0 0.0
  %994 = vmatprep.subr.mxu0 0.0
  %995 = vmatpush2.xpose.msra.mxu0 0.0
  %996 = vmatprep.subr.mxu0 0.0
  %997 = vmatpush2.xpose.msra.mxu0 0.0
  %998 = vmatprep.subr.mxu0 0.0
  %999 = vmatpush2.xpose.msra.mxu0 0.0
  %1000 = vmatprep.subr.mxu0 0.0
  %1001 = vmatpush2.xpose.msra.mxu0 0.0
  %1002 = vmatprep.subr.mxu0 0.0
  %1003 = vmatpush2.xpose.msra.mxu0 0.0
  %1004 = vmatprep.subr.mxu0 0.0
  %1005 = vmatpush2.xpose.msra.mxu0 0.0
  %1006 = vmatprep.subr.mxu0 0.0
  %1007 = vmatpush2.xpose.msra.mxu0 0.0
  %1008 = vmatprep.subr.mxu0 0.0
  %1009 = vmatpush2.xpose.msra.mxu0 0.0
  %1010 = vmatprep.subr.mxu0 0.0
  %1011 = vmatpush2.xpose.msra.mxu0 0.0
  %1012 = vmatprep.mubr.f32.mxu0 0.0
  %1013 = vmatmul.mubr.f32.gmra.mxu0 %v863
  %v1014 = vpop.f32.mrf.mxu0
  %v1015 = vadd.f32 0.0, %v1014
  %v1016 = vpop.f32.mrf.mxu0
  %1017 = vmatprep.mubr.f32.mxu0 0.0
  %1018 = vmatmul.mubr.f32.gmra.mxu0 %v864
  %v1019 = vpop.f32.mrf.mxu0
  %v1020 = vadd.f32 0.0, %v1019
  %v1021 = vpop.f32.mrf.mxu0
  %1022 = vdwg.mxu0
  %1023 = vmatprep.subr.mxu0 0.0
  %1024 = vmatpush1.xpose.msra.mxu0 0.0
  %1025 = vmatprep.subr.mxu0 0.0
  %1026 = vmatpush1.xpose.msra.mxu0 0.0
  %1027 = vmatprep.subr.mxu0 0.0
  %1028 = vmatpush1.xpose.msra.mxu0 0.0
  %1029 = vmatprep.subr.mxu0 0.0
  %1030 = vmatpush1.xpose.msra.mxu0 0.0
  %1031 = vmatprep.subr.mxu0 0.0
  %1032 = vmatpush1.xpose.msra.mxu0 0.0
  %1033 = vmatprep.subr.mxu0 0.0
  %1034 = vmatpush1.xpose.msra.mxu0 0.0
  %1035 = vmatprep.subr.mxu0 0.0
  %1036 = vmatpush1.xpose.msra.mxu0 0.0
  %1037 = vmatprep.subr.mxu0 0.0
  %1038 = vmatpush1.xpose.msra.mxu0 0.0
  %1039 = vmatprep.subr.mxu0 0.0
  %1040 = vmatpush1.xpose.msra.mxu0 0.0
  %1041 = vmatprep.subr.mxu0 0.0
  %1042 = vmatpush1.xpose.msra.mxu0 0.0
  %1043 = vmatprep.subr.mxu0 0.0
  %1044 = vmatpush1.xpose.msra.mxu0 0.0
  %1045 = vmatprep.subr.mxu0 0.0
  %1046 = vmatpush1.xpose.msra.mxu0 0.0
  %1047 = vmatprep.subr.mxu0 0.0
  %1048 = vmatpush1.xpose.msra.mxu0 0.0
  %1049 = vmatprep.subr.mxu0 0.0
  %1050 = vmatpush1.xpose.msra.mxu0 0.0
  %1051 = vmatprep.subr.mxu0 0.0
  %1052 = vmatpush1.xpose.msra.mxu0 0.0
  %1053 = vmatprep.subr.mxu0 0.0
  %1054 = vmatpush1.xpose.msra.mxu0 %v945
  %1055 = vmatprep.subr.mxu0 0.0
  %1056 = vmatpush2.xpose.msra.mxu0 0.0
  %1057 = vmatprep.subr.mxu0 0.0
  %1058 = vmatpush2.xpose.msra.mxu0 0.0
  %1059 = vmatprep.subr.mxu0 0.0
  %1060 = vmatpush2.xpose.msra.mxu0 0.0
  %1061 = vmatprep.subr.mxu0 0.0
  %1062 = vmatpush2.xpose.msra.mxu0 0.0
  %1063 = vmatprep.subr.mxu0 0.0
  %1064 = vmatpush2.xpose.msra.mxu0 0.0
  %1065 = vmatprep.subr.mxu0 0.0
  %1066 = vmatpush2.xpose.msra.mxu0 0.0
  %1067 = vmatprep.subr.mxu0 0.0
  %1068 = vmatpush2.xpose.msra.mxu0 0.0
  %1069 = vmatprep.subr.mxu0 0.0
  %1070 = vmatpush2.xpose.msra.mxu0 0.0
  %1071 = vmatprep.subr.mxu0 0.0
  %1072 = vmatpush2.xpose.msra.mxu0 0.0
  %1073 = vmatprep.subr.mxu0 0.0
  %1074 = vmatpush2.xpose.msra.mxu0 0.0
  %1075 = vmatprep.subr.mxu0 0.0
  %1076 = vmatpush2.xpose.msra.mxu0 0.0
  %1077 = vmatprep.subr.mxu0 0.0
  %1078 = vmatpush2.xpose.msra.mxu0 0.0
  %1079 = vmatprep.subr.mxu0 0.0
  %1080 = vmatpush2.xpose.msra.mxu0 0.0
  %1081 = vmatprep.subr.mxu0 0.0
  %1082 = vmatpush2.xpose.msra.mxu0 0.0
  %1083 = vmatprep.subr.mxu0 0.0
  %1084 = vmatpush2.xpose.msra.mxu0 0.0
  %1085 = vmatprep.subr.mxu0 0.0
  %1086 = vmatpush2.xpose.msra.mxu0 0.0
  %1087 = vmatprep.mubr.f32.mxu0 0.0
  %1088 = vmatmul.mubr.f32.gmra.mxu0 %v865
  %v1089 = vpop.f32.mrf.mxu0
  %v1090 = vadd.f32 0.0, %v1089
  %v1091 = vpop.f32.mrf.mxu0
  %1092 = vmatprep.mubr.f32.mxu0 0.0
  %1093 = vmatmul.mubr.f32.gmra.mxu0 %v866
  %v1094 = vpop.f32.mrf.mxu0
  %v1095 = vadd.f32 0.0, %v1094
  %v1096 = vpop.f32.mrf.mxu0
  %1097 = vdwg.mxu0
  %v1098 = vsel %vm250, %v1015, 0.0
  %v1099 = vsel %vm250, %v1090, 0.0
  %v1100 = vadd.f32 %v1098, %v1099
  %v1101 = vsel %vm250, %v1020, 0.0
  %v1102 = vsel %vm250, %v1095, 0.0
  %v1103 = vadd.f32 %v1101, %v1102
  %v1104 = vmul.f32 %v1100, 0.5
  %v1105 = vmul.f32 %v1103, 0.5
  %v1106 = vld [vmem:[%s13] sm:$0x1]
  %v1108 = vlaneseq
  %v1109 = vshrl.u32 %v1108, 7
  %v1110 = vsub.s32 0, %v1109
  %v1111 = vrot.slane %v1106, %v1110
  %v1113 = vadd.f32 %v1104, %v1111
  %v1114 = vadd.f32 %v1105, %v1111
  %v1115 = vmax.f32 %v1113, 0.0
  %v1116 = vmax.f32 %v1114, 0.0
  %v1117 = vld [vmem:[%s14] sm:$0xff]
  %s1118 = scalar_lea.vmem %s8, 16
  %v1119 = vld [vmem:[%s1118] sm:$0xff]
  %v1120 = vld [vmem:[%s1118 + $0x8] sm:$0xff]
  %v1122 = vsel %vm250, %v1119, 0
  %v1125 = vsel %vm250, %v1120, 0
  %1127 = vmatprep.subr.mxu0 0.0
  %1128 = vmatpush1.msra.mxu0 0.0
  %1129 = vmatprep.subr.mxu0 0.0
  %1130 = vmatpush1.msra.mxu0 0.0
  %1131 = vmatprep.subr.mxu0 0.0
  %1132 = vmatpush1.msra.mxu0 0.0
  %1133 = vmatprep.subr.mxu0 0.0
  %1134 = vmatpush1.msra.mxu0 0.0
  %1135 = vmatprep.subr.mxu0 0.0
  %1136 = vmatpush1.msra.mxu0 0.0
  %1137 = vmatprep.subr.mxu0 0.0
  %1138 = vmatpush1.msra.mxu0 0.0
  %1139 = vmatprep.subr.mxu0 0.0
  %1140 = vmatpush1.msra.mxu0 0.0
  %1141 = vmatprep.subr.mxu0 0.0
  %1142 = vmatpush1.msra.mxu0 0.0
  %1143 = vmatprep.subr.mxu0 0.0
  %1144 = vmatpush1.msra.mxu0 0.0
  %1145 = vmatprep.subr.mxu0 0.0
  %1146 = vmatpush1.msra.mxu0 0.0
  %1147 = vmatprep.subr.mxu0 0.0
  %1148 = vmatpush1.msra.mxu0 0.0
  %1149 = vmatprep.subr.mxu0 0.0
  %1150 = vmatpush1.msra.mxu0 0.0
  %1151 = vmatprep.subr.mxu0 0.0
  %1152 = vmatpush1.msra.mxu0 0.0
  %1153 = vmatprep.subr.mxu0 0.0
  %1154 = vmatpush1.msra.mxu0 0.0
  %1155 = vmatprep.subr.mxu0 0.0
  %1156 = vmatpush1.msra.mxu0 0.0
  %1157 = vmatprep.subr.mxu0 0.0
  %1158 = vmatpush1.msra.mxu0 %v71
  %1159 = vmatprep.subr.mxu0 0.0
  %1160 = vmatpush2.msra.mxu0 0.0
  %1161 = vmatprep.subr.mxu0 0.0
  %1162 = vmatpush2.msra.mxu0 0.0
  %1163 = vmatprep.subr.mxu0 0.0
  %1164 = vmatpush2.msra.mxu0 0.0
  %1165 = vmatprep.subr.mxu0 0.0
  %1166 = vmatpush2.msra.mxu0 0.0
  %1167 = vmatprep.subr.mxu0 0.0
  %1168 = vmatpush2.msra.mxu0 0.0
  %1169 = vmatprep.subr.mxu0 0.0
  %1170 = vmatpush2.msra.mxu0 0.0
  %1171 = vmatprep.subr.mxu0 0.0
  %1172 = vmatpush2.msra.mxu0 0.0
  %1173 = vmatprep.subr.mxu0 0.0
  %1174 = vmatpush2.msra.mxu0 0.0
  %1175 = vmatprep.subr.mxu0 0.0
  %1176 = vmatpush2.msra.mxu0 0.0
  %1177 = vmatprep.subr.mxu0 0.0
  %1178 = vmatpush2.msra.mxu0 0.0
  %1179 = vmatprep.subr.mxu0 0.0
  %1180 = vmatpush2.msra.mxu0 0.0
  %1181 = vmatprep.subr.mxu0 0.0
  %1182 = vmatpush2.msra.mxu0 0.0
  %1183 = vmatprep.subr.mxu0 0.0
  %1184 = vmatpush2.msra.mxu0 0.0
  %1185 = vmatprep.subr.mxu0 0.0
  %1186 = vmatpush2.msra.mxu0 0.0
  %1187 = vmatprep.subr.mxu0 0.0
  %1188 = vmatpush2.msra.mxu0 0.0
  %1189 = vmatprep.subr.mxu0 0.0
  %1190 = vmatpush2.msra.mxu0 0.0
  %1191 = vmatprep.mubr.f32.mxu0 0.0
  %1192 = vmatmul.mubr.f32.gmra.mxu0 %v1122
  %v1193 = vpop.f32.mrf.mxu0
  %v1194 = vadd.f32 0.0, %v1193
  %v1195 = vpop.f32.mrf.mxu0
  %1196 = vmatprep.mubr.f32.mxu0 0.0
  %1197 = vmatmul.mubr.f32.gmra.mxu0 %v1125
  %v1198 = vpop.f32.mrf.mxu0
  %v1199 = vadd.f32 0.0, %v1198
  %v1200 = vpop.f32.mrf.mxu0
  %1201 = vdwg.mxu0
  %s1202 = scalar_lea.vmem %s9, 16
  %v1203 = vld [vmem:[%s1202] sm:$0xff]
  %v1204 = vld [vmem:[%s1202 + $0x8] sm:$0xff]
  %v1206 = vsel %vm250, %v1203, 0
  %v1209 = vsel %vm250, %v1204, 0
  %1211 = vmatprep.subr.mxu0 0.0
  %1212 = vmatpush1.msra.mxu0 0.0
  %1213 = vmatprep.subr.mxu0 0.0
  %1214 = vmatpush1.msra.mxu0 0.0
  %1215 = vmatprep.subr.mxu0 0.0
  %1216 = vmatpush1.msra.mxu0 0.0
  %1217 = vmatprep.subr.mxu0 0.0
  %1218 = vmatpush1.msra.mxu0 0.0
  %1219 = vmatprep.subr.mxu0 0.0
  %1220 = vmatpush1.msra.mxu0 0.0
  %1221 = vmatprep.subr.mxu0 0.0
  %1222 = vmatpush1.msra.mxu0 0.0
  %1223 = vmatprep.subr.mxu0 0.0
  %1224 = vmatpush1.msra.mxu0 0.0
  %1225 = vmatprep.subr.mxu0 0.0
  %1226 = vmatpush1.msra.mxu0 0.0
  %1227 = vmatprep.subr.mxu0 0.0
  %1228 = vmatpush1.msra.mxu0 0.0
  %1229 = vmatprep.subr.mxu0 0.0
  %1230 = vmatpush1.msra.mxu0 0.0
  %1231 = vmatprep.subr.mxu0 0.0
  %1232 = vmatpush1.msra.mxu0 0.0
  %1233 = vmatprep.subr.mxu0 0.0
  %1234 = vmatpush1.msra.mxu0 0.0
  %1235 = vmatprep.subr.mxu0 0.0
  %1236 = vmatpush1.msra.mxu0 0.0
  %1237 = vmatprep.subr.mxu0 0.0
  %1238 = vmatpush1.msra.mxu0 0.0
  %1239 = vmatprep.subr.mxu0 0.0
  %1240 = vmatpush1.msra.mxu0 0.0
  %1241 = vmatprep.subr.mxu0 0.0
  %1242 = vmatpush1.msra.mxu0 %v245
  %1243 = vmatprep.subr.mxu0 0.0
  %1244 = vmatpush2.msra.mxu0 0.0
  %1245 = vmatprep.subr.mxu0 0.0
  %1246 = vmatpush2.msra.mxu0 0.0
  %1247 = vmatprep.subr.mxu0 0.0
  %1248 = vmatpush2.msra.mxu0 0.0
  %1249 = vmatprep.subr.mxu0 0.0
  %1250 = vmatpush2.msra.mxu0 0.0
  %1251 = vmatprep.subr.mxu0 0.0
  %1252 = vmatpush2.msra.mxu0 0.0
  %1253 = vmatprep.subr.mxu0 0.0
  %1254 = vmatpush2.msra.mxu0 0.0
  %1255 = vmatprep.subr.mxu0 0.0
  %1256 = vmatpush2.msra.mxu0 0.0
  %1257 = vmatprep.subr.mxu0 0.0
  %1258 = vmatpush2.msra.mxu0 0.0
  %1259 = vmatprep.subr.mxu0 0.0
  %1260 = vmatpush2.msra.mxu0 0.0
  %1261 = vmatprep.subr.mxu0 0.0
  %1262 = vmatpush2.msra.mxu0 0.0
  %1263 = vmatprep.subr.mxu0 0.0
  %1264 = vmatpush2.msra.mxu0 0.0
  %1265 = vmatprep.subr.mxu0 0.0
  %1266 = vmatpush2.msra.mxu0 0.0
  %1267 = vmatprep.subr.mxu0 0.0
  %1268 = vmatpush2.msra.mxu0 0.0
  %1269 = vmatprep.subr.mxu0 0.0
  %1270 = vmatpush2.msra.mxu0 0.0
  %1271 = vmatprep.subr.mxu0 0.0
  %1272 = vmatpush2.msra.mxu0 0.0
  %1273 = vmatprep.subr.mxu0 0.0
  %1274 = vmatpush2.msra.mxu0 0.0
  %1275 = vmatprep.mubr.f32.mxu0 0.0
  %1276 = vmatmul.mubr.f32.gmra.mxu0 %v1206
  %v1277 = vpop.f32.mrf.mxu0
  %v1278 = vadd.f32 0.0, %v1277
  %v1279 = vpop.f32.mrf.mxu0
  %1280 = vmatprep.mubr.f32.mxu0 0.0
  %1281 = vmatmul.mubr.f32.gmra.mxu0 %v1209
  %v1282 = vpop.f32.mrf.mxu0
  %v1283 = vadd.f32 0.0, %v1282
  %v1284 = vpop.f32.mrf.mxu0
  %1285 = vdwg.mxu0
  %s1286 = scalar_lea.vmem %s10, 2
  %v1287 = vld [vmem:[%s1286] sm:$0x3]
  %v1289 = vsel %vm416, %v1287, 0
  %1291 = vmatprep.subr.mxu0 0.0
  %1292 = vmatpush1.msra.mxu0 0.0
  %1293 = vmatprep.subr.mxu0 0.0
  %1294 = vmatpush1.msra.mxu0 0.0
  %1295 = vmatprep.subr.mxu0 0.0
  %1296 = vmatpush1.msra.mxu0 0.0
  %1297 = vmatprep.subr.mxu0 0.0
  %1298 = vmatpush1.msra.mxu0 0.0
  %1299 = vmatprep.subr.mxu0 0.0
  %1300 = vmatpush1.msra.mxu0 0.0
  %1301 = vmatprep.subr.mxu0 0.0
  %1302 = vmatpush1.msra.mxu0 0.0
  %1303 = vmatprep.subr.mxu0 0.0
  %1304 = vmatpush1.msra.mxu0 0.0
  %1305 = vmatprep.subr.mxu0 0.0
  %1306 = vmatpush1.msra.mxu0 0.0
  %1307 = vmatprep.subr.mxu0 0.0
  %1308 = vmatpush1.msra.mxu0 0.0
  %1309 = vmatprep.subr.mxu0 0.0
  %1310 = vmatpush1.msra.mxu0 0.0
  %1311 = vmatprep.subr.mxu0 0.0
  %1312 = vmatpush1.msra.mxu0 0.0
  %1313 = vmatprep.subr.mxu0 0.0
  %1314 = vmatpush1.msra.mxu0 0.0
  %1315 = vmatprep.subr.mxu0 0.0
  %1316 = vmatpush1.msra.mxu0 0.0
  %1317 = vmatprep.subr.mxu0 0.0
  %1318 = vmatpush1.msra.mxu0 0.0
  %1319 = vmatprep.subr.mxu0 0.0
  %1320 = vmatpush1.msra.mxu0 %v1199
  %1321 = vmatprep.subr.mxu0 0.0
  %1322 = vmatpush1.msra.mxu0 %v1194
  %1323 = vmatprep.subr.mxu0 0.0
  %1324 = vmatpush2.msra.mxu0 0.0
  %1325 = vmatprep.subr.mxu0 0.0
  %1326 = vmatpush2.msra.mxu0 0.0
  %1327 = vmatprep.subr.mxu0 0.0
  %1328 = vmatpush2.msra.mxu0 0.0
  %1329 = vmatprep.subr.mxu0 0.0
  %1330 = vmatpush2.msra.mxu0 0.0
  %1331 = vmatprep.subr.mxu0 0.0
  %1332 = vmatpush2.msra.mxu0 0.0
  %1333 = vmatprep.subr.mxu0 0.0
  %1334 = vmatpush2.msra.mxu0 0.0
  %1335 = vmatprep.subr.mxu0 0.0
  %1336 = vmatpush2.msra.mxu0 0.0
  %1337 = vmatprep.subr.mxu0 0.0
  %1338 = vmatpush2.msra.mxu0 0.0
  %1339 = vmatprep.subr.mxu0 0.0
  %1340 = vmatpush2.msra.mxu0 0.0
  %1341 = vmatprep.subr.mxu0 0.0
  %1342 = vmatpush2.msra.mxu0 0.0
  %1343 = vmatprep.subr.mxu0 0.0
  %1344 = vmatpush2.msra.mxu0 0.0
  %1345 = vmatprep.subr.mxu0 0.0
  %1346 = vmatpush2.msra.mxu0 0.0
  %1347 = vmatprep.subr.mxu0 0.0
  %1348 = vmatpush2.msra.mxu0 0.0
  %1349 = vmatprep.subr.mxu0 0.0
  %1350 = vmatpush2.msra.mxu0 0.0
  %1351 = vmatprep.subr.mxu0 0.0
  %1352 = vmatpush2.msra.mxu0 0.0
  %1353 = vmatprep.subr.mxu0 0.0
  %1354 = vmatpush2.msra.mxu0 0.0
  %1355 = vmatprep.mubr.f32.mxu0 0.0
  %1356 = vmatmul.mubr.f32.gmra.mxu0 %v1289
  %v1357 = vpop.f32.mrf.mxu0
  %v1358 = vadd.f32 0.0, %v1357
  %v1359 = vpop.f32.mrf.mxu0
  %1360 = vdwg.mxu0
  %s1361 = scalar_lea.vmem %s11, 2
  %v1362 = vld [vmem:[%s1361] sm:$0x3]
  %v1364 = vsel %vm416, %v1362, 0
  %1366 = vmatprep.subr.mxu0 0.0
  %1367 = vmatpush1.msra.mxu0 0.0
  %1368 = vmatprep.subr.mxu0 0.0
  %1369 = vmatpush1.msra.mxu0 0.0
  %1370 = vmatprep.subr.mxu0 0.0
  %1371 = vmatpush1.msra.mxu0 0.0
  %1372 = vmatprep.subr.mxu0 0.0
  %1373 = vmatpush1.msra.mxu0 0.0
  %1374 = vmatprep.subr.mxu0 0.0
  %1375 = vmatpush1.msra.mxu0 0.0
  %1376 = vmatprep.subr.mxu0 0.0
  %1377 = vmatpush1.msra.mxu0 0.0
  %1378 = vmatprep.subr.mxu0 0.0
  %1379 = vmatpush1.msra.mxu0 0.0
  %1380 = vmatprep.subr.mxu0 0.0
  %1381 = vmatpush1.msra.mxu0 0.0
  %1382 = vmatprep.subr.mxu0 0.0
  %1383 = vmatpush1.msra.mxu0 0.0
  %1384 = vmatprep.subr.mxu0 0.0
  %1385 = vmatpush1.msra.mxu0 0.0
  %1386 = vmatprep.subr.mxu0 0.0
  %1387 = vmatpush1.msra.mxu0 0.0
  %1388 = vmatprep.subr.mxu0 0.0
  %1389 = vmatpush1.msra.mxu0 0.0
  %1390 = vmatprep.subr.mxu0 0.0
  %1391 = vmatpush1.msra.mxu0 0.0
  %1392 = vmatprep.subr.mxu0 0.0
  %1393 = vmatpush1.msra.mxu0 0.0
  %1394 = vmatprep.subr.mxu0 0.0
  %1395 = vmatpush1.msra.mxu0 %v1199
  %1396 = vmatprep.subr.mxu0 0.0
  %1397 = vmatpush1.msra.mxu0 %v1194
  %1398 = vmatprep.subr.mxu0 0.0
  %1399 = vmatpush2.msra.mxu0 0.0
  %1400 = vmatprep.subr.mxu0 0.0
  %1401 = vmatpush2.msra.mxu0 0.0
  %1402 = vmatprep.subr.mxu0 0.0
  %1403 = vmatpush2.msra.mxu0 0.0
  %1404 = vmatprep.subr.mxu0 0.0
  %1405 = vmatpush2.msra.mxu0 0.0
  %1406 = vmatprep.subr.mxu0 0.0
  %1407 = vmatpush2.msra.mxu0 0.0
  %1408 = vmatprep.subr.mxu0 0.0
  %1409 = vmatpush2.msra.mxu0 0.0
  %1410 = vmatprep.subr.mxu0 0.0
  %1411 = vmatpush2.msra.mxu0 0.0
  %1412 = vmatprep.subr.mxu0 0.0
  %1413 = vmatpush2.msra.mxu0 0.0
  %1414 = vmatprep.subr.mxu0 0.0
  %1415 = vmatpush2.msra.mxu0 0.0
  %1416 = vmatprep.subr.mxu0 0.0
  %1417 = vmatpush2.msra.mxu0 0.0
  %1418 = vmatprep.subr.mxu0 0.0
  %1419 = vmatpush2.msra.mxu0 0.0
  %1420 = vmatprep.subr.mxu0 0.0
  %1421 = vmatpush2.msra.mxu0 0.0
  %1422 = vmatprep.subr.mxu0 0.0
  %1423 = vmatpush2.msra.mxu0 0.0
  %1424 = vmatprep.subr.mxu0 0.0
  %1425 = vmatpush2.msra.mxu0 0.0
  %1426 = vmatprep.subr.mxu0 0.0
  %1427 = vmatpush2.msra.mxu0 0.0
  %1428 = vmatprep.subr.mxu0 0.0
  %1429 = vmatpush2.msra.mxu0 0.0
  %1430 = vmatprep.mubr.f32.mxu0 0.0
  %1431 = vmatmul.mubr.f32.gmra.mxu0 %v1364
  %v1432 = vpop.f32.mrf.mxu0
  %v1433 = vadd.f32 0.0, %v1432
  %v1434 = vpop.f32.mrf.mxu0
  %1435 = vdwg.mxu0
  %s1436 = scalar_lea.vmem %s12, 2
  %v1437 = vld [vmem:[%s1436] sm:$0x3]
  %v1439 = vsel %vm416, %v1437, 0
  %1441 = vmatprep.subr.mxu0 0.0
  %1442 = vmatpush1.msra.mxu0 0.0
  %1443 = vmatprep.subr.mxu0 0.0
  %1444 = vmatpush1.msra.mxu0 0.0
  %1445 = vmatprep.subr.mxu0 0.0
  %1446 = vmatpush1.msra.mxu0 0.0
  %1447 = vmatprep.subr.mxu0 0.0
  %1448 = vmatpush1.msra.mxu0 0.0
  %1449 = vmatprep.subr.mxu0 0.0
  %1450 = vmatpush1.msra.mxu0 0.0
  %1451 = vmatprep.subr.mxu0 0.0
  %1452 = vmatpush1.msra.mxu0 0.0
  %1453 = vmatprep.subr.mxu0 0.0
  %1454 = vmatpush1.msra.mxu0 0.0
  %1455 = vmatprep.subr.mxu0 0.0
  %1456 = vmatpush1.msra.mxu0 0.0
  %1457 = vmatprep.subr.mxu0 0.0
  %1458 = vmatpush1.msra.mxu0 0.0
  %1459 = vmatprep.subr.mxu0 0.0
  %1460 = vmatpush1.msra.mxu0 0.0
  %1461 = vmatprep.subr.mxu0 0.0
  %1462 = vmatpush1.msra.mxu0 0.0
  %1463 = vmatprep.subr.mxu0 0.0
  %1464 = vmatpush1.msra.mxu0 0.0
  %1465 = vmatprep.subr.mxu0 0.0
  %1466 = vmatpush1.msra.mxu0 0.0
  %1467 = vmatprep.subr.mxu0 0.0
  %1468 = vmatpush1.msra.mxu0 0.0
  %1469 = vmatprep.subr.mxu0 0.0
  %1470 = vmatpush1.msra.mxu0 %v1283
  %1471 = vmatprep.subr.mxu0 0.0
  %1472 = vmatpush1.msra.mxu0 %v1278
  %1473 = vmatprep.subr.mxu0 0.0
  %1474 = vmatpush2.msra.mxu0 0.0
  %1475 = vmatprep.subr.mxu0 0.0
  %1476 = vmatpush2.msra.mxu0 0.0
  %1477 = vmatprep.subr.mxu0 0.0
  %1478 = vmatpush2.msra.mxu0 0.0
  %1479 = vmatprep.subr.mxu0 0.0
  %1480 = vmatpush2.msra.mxu0 0.0
  %1481 = vmatprep.subr.mxu0 0.0
  %1482 = vmatpush2.msra.mxu0 0.0
  %1483 = vmatprep.subr.mxu0 0.0
  %1484 = vmatpush2.msra.mxu0 0.0
  %1485 = vmatprep.subr.mxu0 0.0
  %1486 = vmatpush2.msra.mxu0 0.0
  %1487 = vmatprep.subr.mxu0 0.0
  %1488 = vmatpush2.msra.mxu0 0.0
  %1489 = vmatprep.subr.mxu0 0.0
  %1490 = vmatpush2.msra.mxu0 0.0
  %1491 = vmatprep.subr.mxu0 0.0
  %1492 = vmatpush2.msra.mxu0 0.0
  %1493 = vmatprep.subr.mxu0 0.0
  %1494 = vmatpush2.msra.mxu0 0.0
  %1495 = vmatprep.subr.mxu0 0.0
  %1496 = vmatpush2.msra.mxu0 0.0
  %1497 = vmatprep.subr.mxu0 0.0
  %1498 = vmatpush2.msra.mxu0 0.0
  %1499 = vmatprep.subr.mxu0 0.0
  %1500 = vmatpush2.msra.mxu0 0.0
  %1501 = vmatprep.subr.mxu0 0.0
  %1502 = vmatpush2.msra.mxu0 0.0
  %1503 = vmatprep.subr.mxu0 0.0
  %1504 = vmatpush2.msra.mxu0 0.0
  %1505 = vmatprep.mubr.f32.mxu0 0.0
  %1506 = vmatmul.mubr.f32.gmra.mxu0 %v1439
  %v1507 = vpop.f32.mrf.mxu0
  %v1508 = vadd.f32 0.0, %v1507
  %v1509 = vpop.f32.mrf.mxu0
  %1510 = vdwg.mxu0
  %v1512 = vsel %vm416, %v1433, 0
  %1514 = vmatprep.subr.mxu0 0.0
  %1515 = vmatpush1.msra.mxu0 0.0
  %1516 = vmatprep.subr.mxu0 0.0
  %1517 = vmatpush1.msra.mxu0 0.0
  %1518 = vmatprep.subr.mxu0 0.0
  %1519 = vmatpush1.msra.mxu0 0.0
  %1520 = vmatprep.subr.mxu0 0.0
  %1521 = vmatpush1.msra.mxu0 0.0
  %1522 = vmatprep.subr.mxu0 0.0
  %1523 = vmatpush1.msra.mxu0 0.0
  %1524 = vmatprep.subr.mxu0 0.0
  %1525 = vmatpush1.msra.mxu0 0.0
  %1526 = vmatprep.subr.mxu0 0.0
  %1527 = vmatpush1.msra.mxu0 0.0
  %1528 = vmatprep.subr.mxu0 0.0
  %1529 = vmatpush1.msra.mxu0 0.0
  %1530 = vmatprep.subr.mxu0 0.0
  %1531 = vmatpush1.msra.mxu0 0.0
  %1532 = vmatprep.subr.mxu0 0.0
  %1533 = vmatpush1.msra.mxu0 0.0
  %1534 = vmatprep.subr.mxu0 0.0
  %1535 = vmatpush1.msra.mxu0 0.0
  %1536 = vmatprep.subr.mxu0 0.0
  %1537 = vmatpush1.msra.mxu0 0.0
  %1538 = vmatprep.subr.mxu0 0.0
  %1539 = vmatpush1.msra.mxu0 0.0
  %1540 = vmatprep.subr.mxu0 0.0
  %1541 = vmatpush1.msra.mxu0 0.0
  %1542 = vmatprep.subr.mxu0 0.0
  %1543 = vmatpush1.msra.mxu0 %v73
  %1544 = vmatprep.subr.mxu0 0.0
  %1545 = vmatpush1.msra.mxu0 %v72
  %1546 = vmatprep.subr.mxu0 0.0
  %1547 = vmatpush2.msra.mxu0 0.0
  %1548 = vmatprep.subr.mxu0 0.0
  %1549 = vmatpush2.msra.mxu0 0.0
  %1550 = vmatprep.subr.mxu0 0.0
  %1551 = vmatpush2.msra.mxu0 0.0
  %1552 = vmatprep.subr.mxu0 0.0
  %1553 = vmatpush2.msra.mxu0 0.0
  %1554 = vmatprep.subr.mxu0 0.0
  %1555 = vmatpush2.msra.mxu0 0.0
  %1556 = vmatprep.subr.mxu0 0.0
  %1557 = vmatpush2.msra.mxu0 0.0
  %1558 = vmatprep.subr.mxu0 0.0
  %1559 = vmatpush2.msra.mxu0 0.0
  %1560 = vmatprep.subr.mxu0 0.0
  %1561 = vmatpush2.msra.mxu0 0.0
  %1562 = vmatprep.subr.mxu0 0.0
  %1563 = vmatpush2.msra.mxu0 0.0
  %1564 = vmatprep.subr.mxu0 0.0
  %1565 = vmatpush2.msra.mxu0 0.0
  %1566 = vmatprep.subr.mxu0 0.0
  %1567 = vmatpush2.msra.mxu0 0.0
  %1568 = vmatprep.subr.mxu0 0.0
  %1569 = vmatpush2.msra.mxu0 0.0
  %1570 = vmatprep.subr.mxu0 0.0
  %1571 = vmatpush2.msra.mxu0 0.0
  %1572 = vmatprep.subr.mxu0 0.0
  %1573 = vmatpush2.msra.mxu0 0.0
  %1574 = vmatprep.subr.mxu0 0.0
  %1575 = vmatpush2.msra.mxu0 0.0
  %1576 = vmatprep.subr.mxu0 0.0
  %1577 = vmatpush2.msra.mxu0 0.0
  %1578 = vmatprep.mubr.f32.mxu0 0.0
  %1579 = vmatmul.mubr.f32.gmra.mxu0 %v1512
  %v1580 = vpop.f32.mrf.mxu0
  %v1581 = vadd.f32 0.0, %v1580
  %v1582 = vpop.f32.mrf.mxu0
  %1583 = vdwg.mxu0
  %v1585 = vsel %vm416, %v1358, 0
  %1587 = vmatprep.subr.mxu0 0.0
  %1588 = vmatpush1.msra.mxu0 0.0
  %1589 = vmatprep.subr.mxu0 0.0
  %1590 = vmatpush1.msra.mxu0 0.0
  %1591 = vmatprep.subr.mxu0 0.0
  %1592 = vmatpush1.msra.mxu0 0.0
  %1593 = vmatprep.subr.mxu0 0.0
  %1594 = vmatpush1.msra.mxu0 0.0
  %1595 = vmatprep.subr.mxu0 0.0
  %1596 = vmatpush1.msra.mxu0 0.0
  %1597 = vmatprep.subr.mxu0 0.0
  %1598 = vmatpush1.msra.mxu0 0.0
  %1599 = vmatprep.subr.mxu0 0.0
  %1600 = vmatpush1.msra.mxu0 0.0
  %1601 = vmatprep.subr.mxu0 0.0
  %1602 = vmatpush1.msra.mxu0 0.0
  %1603 = vmatprep.subr.mxu0 0.0
  %1604 = vmatpush1.msra.mxu0 0.0
  %1605 = vmatprep.subr.mxu0 0.0
  %1606 = vmatpush1.msra.mxu0 0.0
  %1607 = vmatprep.subr.mxu0 0.0
  %1608 = vmatpush1.msra.mxu0 0.0
  %1609 = vmatprep.subr.mxu0 0.0
  %1610 = vmatpush1.msra.mxu0 0.0
  %1611 = vmatprep.subr.mxu0 0.0
  %1612 = vmatpush1.msra.mxu0 0.0
  %1613 = vmatprep.subr.mxu0 0.0
  %1614 = vmatpush1.msra.mxu0 0.0
  %1615 = vmatprep.subr.mxu0 0.0
  %1616 = vmatpush1.msra.mxu0 %v75
  %1617 = vmatprep.subr.mxu0 0.0
  %1618 = vmatpush1.msra.mxu0 %v74
  %1619 = vmatprep.subr.mxu0 0.0
  %1620 = vmatpush2.msra.mxu0 0.0
  %1621 = vmatprep.subr.mxu0 0.0
  %1622 = vmatpush2.msra.mxu0 0.0
  %1623 = vmatprep.subr.mxu0 0.0
  %1624 = vmatpush2.msra.mxu0 0.0
  %1625 = vmatprep.subr.mxu0 0.0
  %1626 = vmatpush2.msra.mxu0 0.0
  %1627 = vmatprep.subr.mxu0 0.0
  %1628 = vmatpush2.msra.mxu0 0.0
  %1629 = vmatprep.subr.mxu0 0.0
  %1630 = vmatpush2.msra.mxu0 0.0
  %1631 = vmatprep.subr.mxu0 0.0
  %1632 = vmatpush2.msra.mxu0 0.0
  %1633 = vmatprep.subr.mxu0 0.0
  %1634 = vmatpush2.msra.mxu0 0.0
  %1635 = vmatprep.subr.mxu0 0.0
  %1636 = vmatpush2.msra.mxu0 0.0
  %1637 = vmatprep.subr.mxu0 0.0
  %1638 = vmatpush2.msra.mxu0 0.0
  %1639 = vmatprep.subr.mxu0 0.0
  %1640 = vmatpush2.msra.mxu0 0.0
  %1641 = vmatprep.subr.mxu0 0.0
  %1642 = vmatpush2.msra.mxu0 0.0
  %1643 = vmatprep.subr.mxu0 0.0
  %1644 = vmatpush2.msra.mxu0 0.0
  %1645 = vmatprep.subr.mxu0 0.0
  %1646 = vmatpush2.msra.mxu0 0.0
  %1647 = vmatprep.subr.mxu0 0.0
  %1648 = vmatpush2.msra.mxu0 0.0
  %1649 = vmatprep.subr.mxu0 0.0
  %1650 = vmatpush2.msra.mxu0 0.0
  %1651 = vmatprep.mubr.f32.mxu0 0.0
  %1652 = vmatmul.mubr.f32.gmra.mxu0 %v1585
  %v1653 = vpop.f32.mrf.mxu0
  %v1654 = vadd.f32 %v1581, %v1653
  %v1655 = vpop.f32.mrf.mxu0
  %1656 = vdwg.mxu0
  %v1657 = vadd.f32 %v1654, %v1508
  %vm1658 = vcmp.gt.f32.partialorder %v1657, 0.0
  %v1659 = vmul.f32 %v1657, 0.2
  %v1660 = vsel %vm1658, %v1657, %v1659
  %v1663 = vunpack.c.l.s4 1966171168
  %v1664 = vunpack.c.0.s8 %v1663
  %v1665 = vlaneseq
  %v1666 = vshrl.u32 %v1665, 7
  %v1667 = vsub.s32 %v1664, %v1666
  %v1668 = vrot.slane %v1660, %v1667
  %v1669 = vcombine.high %v1668, %v1668
  %v1671 = vunpack.c.l.s4 1966171168
  %v1672 = vunpack.c.0.s8 %v1671
  %v1673 = vlaneseq
  %v1674 = vshrl.u32 %v1673, 7
  %v1675 = vsub.s32 %v1672, %v1674
  %v1676 = vrot.slane %v1668, %v1675
  %v1678 = vunpack.c.l.s4 1966171168
  %v1679 = vunpack.c.0.s8 %v1678
  %v1680 = vlaneseq
  %v1681 = vshrl.u32 %v1680, 7
  %v1682 = vsub.s32 %v1679, %v1681
  %v1683 = vrot.slane %v1669, %v1682
  %v1684 = vlaneseq
  %v1685 = vshrl.u32 %v1684, 7
  %v1686 = vsub.s32 0, %v1685
  %v1687 = vrot.slane %v1676, %v1686
  %v1688 = vlaneseq
  %v1689 = vshrl.u32 %v1688, 7
  %v1690 = vsub.s32 0, %v1689
  %v1691 = vrot.slane %v1683, %v1690
  %v1694 = vsel %vm815, %v1687, -1e+30
  %v1695 = vsel %vm816, %v1687, -1e+30
  %v1696 = vsel %vm815, %v1691, -1e+30
  %v1697 = vsel %vm816, %v1691, -1e+30
  %1698 = vmax.xlane.f32.xlu0 %v1694
  %v1699 = vpop.xlane.xlu0 %1698
  %1700 = vmax.xlane.f32.xlu0 %v1695
  %v1701 = vpop.xlane.xlu0 %1700
  %1702 = vmax.xlane.f32.xlu0 %v1696
  %v1703 = vpop.xlane.xlu0 %1702
  %1704 = vmax.xlane.f32.xlu0 %v1697
  %v1705 = vpop.xlane.xlu0 %1704
  %v1706 = vsub.f32 %v1694, %v1699
  %v1707 = vsub.f32 %v1695, %v1701
  %v1708 = vsub.f32 %v1696, %v1703
  %v1709 = vsub.f32 %v1697, %v1705
  %v1710 = vmul.f32 %v1706, 1.442695
  %v1711 = vpow.pop %v1710
  %v1712 = vmul.f32 %v1707, 1.442695
  %v1713 = vpow.pop %v1712
  %v1714 = vmul.f32 %v1708, 1.442695
  %v1715 = vpow.pop %v1714
  %v1716 = vmul.f32 %v1709, 1.442695
  %v1717 = vpow.pop %v1716
  %1718 = vadd.xlane.f32.xlu0 %v1711
  %v1719 = vpop.xlane.xlu0 %1718
  %1720 = vadd.xlane.f32.xlu0 %v1713
  %v1721 = vpop.xlane.xlu0 %1720
  %1722 = vadd.xlane.f32.xlu0 %v1715
  %v1723 = vpop.xlane.xlu0 %1722
  %1724 = vadd.xlane.f32.xlu0 %v1717
  %v1725 = vpop.xlane.xlu0 %1724
  %v1726 = vrcp.pop %v1719
  %v1727 = vrcp.pop %v1721
  %v1728 = vrcp.pop %v1723
  %v1729 = vrcp.pop %v1725
  %v1730 = vmul.f32 %v1711, %v1726
  %v1731 = vmul.f32 %v1713, %v1727
  %v1732 = vmul.f32 %v1715, %v1728
  %v1733 = vmul.f32 %v1717, %v1729
  %v1735 = vsel %vm416, %v1194, 0
  %v1738 = vsel %vm416, %v1199, 0
  %1740 = vmatprep.subr.mxu0 0.0
  %1741 = vmatpush1.msra.mxu0 0.0
  %1742 = vmatprep.subr.mxu0 0.0
  %1743 = vmatpush1.msra.mxu0 0.0
  %1744 = vmatprep.subr.mxu0 0.0
  %1745 = vmatpush1.msra.mxu0 0.0
  %1746 = vmatprep.subr.mxu0 0.0
  %1747 = vmatpush1.msra.mxu0 0.0
  %1748 = vmatprep.subr.mxu0 0.0
  %1749 = vmatpush1.msra.mxu0 0.0
  %1750 = vmatprep.subr.mxu0 0.0
  %1751 = vmatpush1.msra.mxu0 0.0
  %1752 = vmatprep.subr.mxu0 0.0
  %1753 = vmatpush1.msra.mxu0 0.0
  %1754 = vmatprep.subr.mxu0 0.0
  %1755 = vmatpush1.msra.mxu0 0.0
  %1756 = vmatprep.subr.mxu0 0.0
  %1757 = vmatpush1.msra.mxu0 0.0
  %1758 = vmatprep.subr.mxu0 0.0
  %1759 = vmatpush1.msra.mxu0 0.0
  %1760 = vmatprep.subr.mxu0 0.0
  %1761 = vmatpush1.msra.mxu0 0.0
  %1762 = vmatprep.subr.mxu0 0.0
  %1763 = vmatpush1.msra.mxu0 0.0
  %1764 = vmatprep.subr.mxu0 0.0
  %1765 = vmatpush1.msra.mxu0 0.0
  %1766 = vmatprep.subr.mxu0 0.0
  %1767 = vmatpush1.msra.mxu0 0.0
  %1768 = vmatprep.subr.mxu0 0.0
  %1769 = vmatpush1.msra.mxu0 %v75
  %1770 = vmatprep.subr.mxu0 0.0
  %1771 = vmatpush1.msra.mxu0 %v74
  %1772 = vmatprep.subr.mxu0 0.0
  %1773 = vmatpush2.msra.mxu0 0.0
  %1774 = vmatprep.subr.mxu0 0.0
  %1775 = vmatpush2.msra.mxu0 0.0
  %1776 = vmatprep.subr.mxu0 0.0
  %1777 = vmatpush2.msra.mxu0 0.0
  %1778 = vmatprep.subr.mxu0 0.0
  %1779 = vmatpush2.msra.mxu0 0.0
  %1780 = vmatprep.subr.mxu0 0.0
  %1781 = vmatpush2.msra.mxu0 0.0
  %1782 = vmatprep.subr.mxu0 0.0
  %1783 = vmatpush2.msra.mxu0 0.0
  %1784 = vmatprep.subr.mxu0 0.0
  %1785 = vmatpush2.msra.mxu0 0.0
  %1786 = vmatprep.subr.mxu0 0.0
  %1787 = vmatpush2.msra.mxu0 0.0
  %1788 = vmatprep.subr.mxu0 0.0
  %1789 = vmatpush2.msra.mxu0 0.0
  %1790 = vmatprep.subr.mxu0 0.0
  %1791 = vmatpush2.msra.mxu0 0.0
  %1792 = vmatprep.subr.mxu0 0.0
  %1793 = vmatpush2.msra.mxu0 0.0
  %1794 = vmatprep.subr.mxu0 0.0
  %1795 = vmatpush2.msra.mxu0 0.0
  %1796 = vmatprep.subr.mxu0 0.0
  %1797 = vmatpush2.msra.mxu0 0.0
  %1798 = vmatprep.subr.mxu0 0.0
  %1799 = vmatpush2.msra.mxu0 0.0
  %1800 = vmatprep.subr.mxu0 0.0
  %1801 = vmatpush2.msra.mxu0 0.0
  %1802 = vmatprep.subr.mxu0 0.0
  %1803 = vmatpush2.msra.mxu0 0.0
  %1804 = vmatprep.mubr.f32.mxu0 0.0
  %1805 = vmatmul.mubr.f32.gmra.mxu0 %v1735
  %v1806 = vpop.f32.mrf.mxu0
  %v1807 = vadd.f32 0.0, %v1806
  %v1808 = vpop.f32.mrf.mxu0
  %1809 = vmatprep.mubr.f32.mxu0 0.0
  %1810 = vmatmul.mubr.f32.gmra.mxu0 %v1738
  %v1811 = vpop.f32.mrf.mxu0
  %v1812 = vadd.f32 0.0, %v1811
  %v1813 = vpop.f32.mrf.mxu0
  %1814 = vdwg.mxu0
  %1815 = vmatprep.subr.mxu0 0.0
  %1816 = vmatpush1.xpose.msra.mxu0 0.0
  %1817 = vmatprep.subr.mxu0 0.0
  %1818 = vmatpush1.xpose.msra.mxu0 0.0
  %1819 = vmatprep.subr.mxu0 0.0
  %1820 = vmatpush1.xpose.msra.mxu0 0.0
  %1821 = vmatprep.subr.mxu0 0.0
  %1822 = vmatpush1.xpose.msra.mxu0 0.0
  %1823 = vmatprep.subr.mxu0 0.0
  %1824 = vmatpush1.xpose.msra.mxu0 0.0
  %1825 = vmatprep.subr.mxu0 0.0
  %1826 = vmatpush1.xpose.msra.mxu0 0.0
  %1827 = vmatprep.subr.mxu0 0.0
  %1828 = vmatpush1.xpose.msra.mxu0 0.0
  %1829 = vmatprep.subr.mxu0 0.0
  %1830 = vmatpush1.xpose.msra.mxu0 0.0
  %1831 = vmatprep.subr.mxu0 0.0
  %1832 = vmatpush1.xpose.msra.mxu0 0.0
  %1833 = vmatprep.subr.mxu0 0.0
  %1834 = vmatpush1.xpose.msra.mxu0 0.0
  %1835 = vmatprep.subr.mxu0 0.0
  %1836 = vmatpush1.xpose.msra.mxu0 0.0
  %1837 = vmatprep.subr.mxu0 0.0
  %1838 = vmatpush1.xpose.msra.mxu0 0.0
  %1839 = vmatprep.subr.mxu0 0.0
  %1840 = vmatpush1.xpose.msra.mxu0 0.0
  %1841 = vmatprep.subr.mxu0 0.0
  %1842 = vmatpush1.xpose.msra.mxu0 0.0
  %1843 = vmatprep.subr.mxu0 0.0
  %1844 = vmatpush1.xpose.msra.mxu0 0.0
  %1845 = vmatprep.subr.mxu0 0.0
  %1846 = vmatpush1.xpose.msra.mxu0 %v1807
  %1847 = vmatprep.subr.mxu0 0.0
  %1848 = vmatpush2.xpose.msra.mxu0 0.0
  %1849 = vmatprep.subr.mxu0 0.0
  %1850 = vmatpush2.xpose.msra.mxu0 0.0
  %1851 = vmatprep.subr.mxu0 0.0
  %1852 = vmatpush2.xpose.msra.mxu0 0.0
  %1853 = vmatprep.subr.mxu0 0.0
  %1854 = vmatpush2.xpose.msra.mxu0 0.0
  %1855 = vmatprep.subr.mxu0 0.0
  %1856 = vmatpush2.xpose.msra.mxu0 0.0
  %1857 = vmatprep.subr.mxu0 0.0
  %1858 = vmatpush2.xpose.msra.mxu0 0.0
  %1859 = vmatprep.subr.mxu0 0.0
  %1860 = vmatpush2.xpose.msra.mxu0 0.0
  %1861 = vmatprep.subr.mxu0 0.0
  %1862 = vmatpush2.xpose.msra.mxu0 0.0
  %1863 = vmatprep.subr.mxu0 0.0
  %1864 = vmatpush2.xpose.msra.mxu0 0.0
  %1865 = vmatprep.subr.mxu0 0.0
  %1866 = vmatpush2.xpose.msra.mxu0 0.0
  %1867 = vmatprep.subr.mxu0 0.0
  %1868 = vmatpush2.xpose.msra.mxu0 0.0
  %1869 = vmatprep.subr.mxu0 0.0
  %1870 = vmatpush2.xpose.msra.mxu0 0.0
  %1871 = vmatprep.subr.mxu0 0.0
  %1872 = vmatpush2.xpose.msra.mxu0 0.0
  %1873 = vmatprep.subr.mxu0 0.0
  %1874 = vmatpush2.xpose.msra.mxu0 0.0
  %1875 = vmatprep.subr.mxu0 0.0
  %1876 = vmatpush2.xpose.msra.mxu0 0.0
  %1877 = vmatprep.subr.mxu0 0.0
  %1878 = vmatpush2.xpose.msra.mxu0 0.0
  %1879 = vmatprep.mubr.f32.mxu0 0.0
  %1880 = vmatmul.mubr.f32.gmra.mxu0 %v1730
  %v1881 = vpop.f32.mrf.mxu0
  %v1882 = vadd.f32 0.0, %v1881
  %v1883 = vpop.f32.mrf.mxu0
  %1884 = vmatprep.mubr.f32.mxu0 0.0
  %1885 = vmatmul.mubr.f32.gmra.mxu0 %v1731
  %v1886 = vpop.f32.mrf.mxu0
  %v1887 = vadd.f32 0.0, %v1886
  %v1888 = vpop.f32.mrf.mxu0
  %1889 = vdwg.mxu0
  %1890 = vmatprep.subr.mxu0 0.0
  %1891 = vmatpush1.xpose.msra.mxu0 0.0
  %1892 = vmatprep.subr.mxu0 0.0
  %1893 = vmatpush1.xpose.msra.mxu0 0.0
  %1894 = vmatprep.subr.mxu0 0.0
  %1895 = vmatpush1.xpose.msra.mxu0 0.0
  %1896 = vmatprep.subr.mxu0 0.0
  %1897 = vmatpush1.xpose.msra.mxu0 0.0
  %1898 = vmatprep.subr.mxu0 0.0
  %1899 = vmatpush1.xpose.msra.mxu0 0.0
  %1900 = vmatprep.subr.mxu0 0.0
  %1901 = vmatpush1.xpose.msra.mxu0 0.0
  %1902 = vmatprep.subr.mxu0 0.0
  %1903 = vmatpush1.xpose.msra.mxu0 0.0
  %1904 = vmatprep.subr.mxu0 0.0
  %1905 = vmatpush1.xpose.msra.mxu0 0.0
  %1906 = vmatprep.subr.mxu0 0.0
  %1907 = vmatpush1.xpose.msra.mxu0 0.0
  %1908 = vmatprep.subr.mxu0 0.0
  %1909 = vmatpush1.xpose.msra.mxu0 0.0
  %1910 = vmatprep.subr.mxu0 0.0
  %1911 = vmatpush1.xpose.msra.mxu0 0.0
  %1912 = vmatprep.subr.mxu0 0.0
  %1913 = vmatpush1.xpose.msra.mxu0 0.0
  %1914 = vmatprep.subr.mxu0 0.0
  %1915 = vmatpush1.xpose.msra.mxu0 0.0
  %1916 = vmatprep.subr.mxu0 0.0
  %1917 = vmatpush1.xpose.msra.mxu0 0.0
  %1918 = vmatprep.subr.mxu0 0.0
  %1919 = vmatpush1.xpose.msra.mxu0 0.0
  %1920 = vmatprep.subr.mxu0 0.0
  %1921 = vmatpush1.xpose.msra.mxu0 %v1812
  %1922 = vmatprep.subr.mxu0 0.0
  %1923 = vmatpush2.xpose.msra.mxu0 0.0
  %1924 = vmatprep.subr.mxu0 0.0
  %1925 = vmatpush2.xpose.msra.mxu0 0.0
  %1926 = vmatprep.subr.mxu0 0.0
  %1927 = vmatpush2.xpose.msra.mxu0 0.0
  %1928 = vmatprep.subr.mxu0 0.0
  %1929 = vmatpush2.xpose.msra.mxu0 0.0
  %1930 = vmatprep.subr.mxu0 0.0
  %1931 = vmatpush2.xpose.msra.mxu0 0.0
  %1932 = vmatprep.subr.mxu0 0.0
  %1933 = vmatpush2.xpose.msra.mxu0 0.0
  %1934 = vmatprep.subr.mxu0 0.0
  %1935 = vmatpush2.xpose.msra.mxu0 0.0
  %1936 = vmatprep.subr.mxu0 0.0
  %1937 = vmatpush2.xpose.msra.mxu0 0.0
  %1938 = vmatprep.subr.mxu0 0.0
  %1939 = vmatpush2.xpose.msra.mxu0 0.0
  %1940 = vmatprep.subr.mxu0 0.0
  %1941 = vmatpush2.xpose.msra.mxu0 0.0
  %1942 = vmatprep.subr.mxu0 0.0
  %1943 = vmatpush2.xpose.msra.mxu0 0.0
  %1944 = vmatprep.subr.mxu0 0.0
  %1945 = vmatpush2.xpose.msra.mxu0 0.0
  %1946 = vmatprep.subr.mxu0 0.0
  %1947 = vmatpush2.xpose.msra.mxu0 0.0
  %1948 = vmatprep.subr.mxu0 0.0
  %1949 = vmatpush2.xpose.msra.mxu0 0.0
  %1950 = vmatprep.subr.mxu0 0.0
  %1951 = vmatpush2.xpose.msra.mxu0 0.0
  %1952 = vmatprep.subr.mxu0 0.0
  %1953 = vmatpush2.xpose.msra.mxu0 0.0
  %1954 = vmatprep.mubr.f32.mxu0 0.0
  %1955 = vmatmul.mubr.f32.gmra.mxu0 %v1732
  %v1956 = vpop.f32.mrf.mxu0
  %v1957 = vadd.f32 0.0, %v1956
  %v1958 = vpop.f32.mrf.mxu0
  %1959 = vmatprep.mubr.f32.mxu0 0.0
  %1960 = vmatmul.mubr.f32.gmra.mxu0 %v1733
  %v1961 = vpop.f32.mrf.mxu0
  %v1962 = vadd.f32 0.0, %v1961
  %v1963 = vpop.f32.mrf.mxu0
  %1964 = vdwg.mxu0
  %v1965 = vsel %vm250, %v1882, 0.0
  %v1966 = vsel %vm250, %v1957, 0.0
  %v1967 = vadd.f32 %v1965, %v1966
  %v1968 = vsel %vm250, %v1887, 0.0
  %v1969 = vsel %vm250, %v1962, 0.0
  %v1970 = vadd.f32 %v1968, %v1969
  %v1971 = vmul.f32 %v1967, 0.5
  %v1972 = vmul.f32 %v1970, 0.5
  %s1973 = scalar_lea.vmem %s13, 1
  %v1974 = vld [vmem:[%s1973] sm:$0x1]
  %v1976 = vlaneseq
  %v1977 = vshrl.u32 %v1976, 7
  %v1978 = vsub.s32 0, %v1977
  %v1979 = vrot.slane %v1974, %v1978
  %v1981 = vadd.f32 %v1971, %v1979
  %v1982 = vadd.f32 %v1972, %v1979
  %v1983 = vmax.f32 %v1981, 0.0
  %v1984 = vmax.f32 %v1982, 0.0
  %s1985 = scalar_lea.vmem %s14, 8
  %v1986 = vld [vmem:[%s1985] sm:$0xff]
  %v1988 = vsel %vm250, %v1983, 0
  %v1991 = vsel %vm250, %v1984, 0
  %1993 = vmatprep.subr.mxu0 0.0
  %1994 = vmatpush1.msra.mxu0 0.0
  %1995 = vmatprep.subr.mxu0 0.0
  %1996 = vmatpush1.msra.mxu0 0.0
  %1997 = vmatprep.subr.mxu0 0.0
  %1998 = vmatpush1.msra.mxu0 0.0
  %1999 = vmatprep.subr.mxu0 0.0
  %2000 = vmatpush1.msra.mxu0 0.0
  %2001 = vmatprep.subr.mxu0 0.0
  %2002 = vmatpush1.msra.mxu0 0.0
  %2003 = vmatprep.subr.mxu0 0.0
  %2004 = vmatpush1.msra.mxu0 0.0
  %2005 = vmatprep.subr.mxu0 0.0
  %2006 = vmatpush1.msra.mxu0 0.0
  %2007 = vmatprep.subr.mxu0 0.0
  %2008 = vmatpush1.msra.mxu0 0.0
  %2009 = vmatprep.subr.mxu0 0.0
  %2010 = vmatpush1.msra.mxu0 0.0
  %2011 = vmatprep.subr.mxu0 0.0
  %2012 = vmatpush1.msra.mxu0 0.0
  %2013 = vmatprep.subr.mxu0 0.0
  %2014 = vmatpush1.msra.mxu0 0.0
  %2015 = vmatprep.subr.mxu0 0.0
  %2016 = vmatpush1.msra.mxu0 0.0
  %2017 = vmatprep.subr.mxu0 0.0
  %2018 = vmatpush1.msra.mxu0 0.0
  %2019 = vmatprep.subr.mxu0 0.0
  %2020 = vmatpush1.msra.mxu0 0.0
  %2021 = vmatprep.subr.mxu0 0.0
  %2022 = vmatpush1.msra.mxu0 0.0
  %2023 = vmatprep.subr.mxu0 0.0
  %2024 = vmatpush1.msra.mxu0 %v1986
  %2025 = vmatprep.subr.mxu0 0.0
  %2026 = vmatpush2.msra.mxu0 0.0
  %2027 = vmatprep.subr.mxu0 0.0
  %2028 = vmatpush2.msra.mxu0 0.0
  %2029 = vmatprep.subr.mxu0 0.0
  %2030 = vmatpush2.msra.mxu0 0.0
  %2031 = vmatprep.subr.mxu0 0.0
  %2032 = vmatpush2.msra.mxu0 0.0
  %2033 = vmatprep.subr.mxu0 0.0
  %2034 = vmatpush2.msra.mxu0 0.0
  %2035 = vmatprep.subr.mxu0 0.0
  %2036 = vmatpush2.msra.mxu0 0.0
  %2037 = vmatprep.subr.mxu0 0.0
  %2038 = vmatpush2.msra.mxu0 0.0
  %2039 = vmatprep.subr.mxu0 0.0
  %2040 = vmatpush2.msra.mxu0 0.0
  %2041 = vmatprep.subr.mxu0 0.0
  %2042 = vmatpush2.msra.mxu0 0.0
  %2043 = vmatprep.subr.mxu0 0.0
  %2044 = vmatpush2.msra.mxu0 0.0
  %2045 = vmatprep.subr.mxu0 0.0
  %2046 = vmatpush2.msra.mxu0 0.0
  %2047 = vmatprep.subr.mxu0 0.0
  %2048 = vmatpush2.msra.mxu0 0.0
  %2049 = vmatprep.subr.mxu0 0.0
  %2050 = vmatpush2.msra.mxu0 0.0
  %2051 = vmatprep.subr.mxu0 0.0
  %2052 = vmatpush2.msra.mxu0 0.0
  %2053 = vmatprep.subr.mxu0 0.0
  %2054 = vmatpush2.msra.mxu0 0.0
  %2055 = vmatprep.subr.mxu0 0.0
  %2056 = vmatpush2.msra.mxu0 0.0
  %2057 = vmatprep.mubr.f32.mxu0 0.0
  %2058 = vmatmul.mubr.f32.gmra.mxu0 %v1988
  %v2059 = vpop.f32.mrf.mxu0
  %v2060 = vadd.f32 0.0, %v2059
  %v2061 = vpop.f32.mrf.mxu0
  %2062 = vmatprep.mubr.f32.mxu0 0.0
  %2063 = vmatmul.mubr.f32.gmra.mxu0 %v1991
  %v2064 = vpop.f32.mrf.mxu0
  %v2065 = vadd.f32 0.0, %v2064
  %v2066 = vpop.f32.mrf.mxu0
  %2067 = vdwg.mxu0
  %v2069 = vsel %vm250, %v1115, 0
  %v2072 = vsel %vm250, %v1116, 0
  %2074 = vmatprep.subr.mxu0 0.0
  %2075 = vmatpush1.msra.mxu0 0.0
  %2076 = vmatprep.subr.mxu0 0.0
  %2077 = vmatpush1.msra.mxu0 0.0
  %2078 = vmatprep.subr.mxu0 0.0
  %2079 = vmatpush1.msra.mxu0 0.0
  %2080 = vmatprep.subr.mxu0 0.0
  %2081 = vmatpush1.msra.mxu0 0.0
  %2082 = vmatprep.subr.mxu0 0.0
  %2083 = vmatpush1.msra.mxu0 0.0
  %2084 = vmatprep.subr.mxu0 0.0
  %2085 = vmatpush1.msra.mxu0 0.0
  %2086 = vmatprep.subr.mxu0 0.0
  %2087 = vmatpush1.msra.mxu0 0.0
  %2088 = vmatprep.subr.mxu0 0.0
  %2089 = vmatpush1.msra.mxu0 0.0
  %2090 = vmatprep.subr.mxu0 0.0
  %2091 = vmatpush1.msra.mxu0 0.0
  %2092 = vmatprep.subr.mxu0 0.0
  %2093 = vmatpush1.msra.mxu0 0.0
  %2094 = vmatprep.subr.mxu0 0.0
  %2095 = vmatpush1.msra.mxu0 0.0
  %2096 = vmatprep.subr.mxu0 0.0
  %2097 = vmatpush1.msra.mxu0 0.0
  %2098 = vmatprep.subr.mxu0 0.0
  %2099 = vmatpush1.msra.mxu0 0.0
  %2100 = vmatprep.subr.mxu0 0.0
  %2101 = vmatpush1.msra.mxu0 0.0
  %2102 = vmatprep.subr.mxu0 0.0
  %2103 = vmatpush1.msra.mxu0 0.0
  %2104 = vmatprep.subr.mxu0 0.0
  %2105 = vmatpush1.msra.mxu0 %v1117
  %2106 = vmatprep.subr.mxu0 0.0
  %2107 = vmatpush2.msra.mxu0 0.0
  %2108 = vmatprep.subr.mxu0 0.0
  %2109 = vmatpush2.msra.mxu0 0.0
  %2110 = vmatprep.subr.mxu0 0.0
  %2111 = vmatpush2.msra.mxu0 0.0
  %2112 = vmatprep.subr.mxu0 0.0
  %2113 = vmatpush2.msra.mxu0 0.0
  %2114 = vmatprep.subr.mxu0 0.0
  %2115 = vmatpush2.msra.mxu0 0.0
  %2116 = vmatprep.subr.mxu0 0.0
  %2117 = vmatpush2.msra.mxu0 0.0
  %2118 = vmatprep.subr.mxu0 0.0
  %2119 = vmatpush2.msra.mxu0 0.0
  %2120 = vmatprep.subr.mxu0 0.0
  %2121 = vmatpush2.msra.mxu0 0.0
  %2122 = vmatprep.subr.mxu0 0.0
  %2123 = vmatpush2.msra.mxu0 0.0
  %2124 = vmatprep.subr.mxu0 0.0
  %2125 = vmatpush2.msra.mxu0 0.0
  %2126 = vmatprep.subr.mxu0 0.0
  %2127 = vmatpush2.msra.mxu0 0.0
  %2128 = vmatprep.subr.mxu0 0.0
  %2129 = vmatpush2.msra.mxu0 0.0
  %2130 = vmatprep.subr.mxu0 0.0
  %2131 = vmatpush2.msra.mxu0 0.0
  %2132 = vmatprep.subr.mxu0 0.0
  %2133 = vmatpush2.msra.mxu0 0.0
  %2134 = vmatprep.subr.mxu0 0.0
  %2135 = vmatpush2.msra.mxu0 0.0
  %2136 = vmatprep.subr.mxu0 0.0
  %2137 = vmatpush2.msra.mxu0 0.0
  %2138 = vmatprep.mubr.f32.mxu0 0.0
  %2139 = vmatmul.mubr.f32.gmra.mxu0 %v2069
  %v2140 = vpop.f32.mrf.mxu0
  %v2141 = vadd.f32 %v2060, %v2140
  %v2142 = vpop.f32.mrf.mxu0
  %2143 = vmatprep.mubr.f32.mxu0 0.0
  %2144 = vmatmul.mubr.f32.gmra.mxu0 %v2072
  %v2145 = vpop.f32.mrf.mxu0
  %v2146 = vadd.f32 %v2065, %v2145
  %v2147 = vpop.f32.mrf.mxu0
  %2148 = vdwg.mxu0
  %v2149 = vld [vmem:[%s7] sm:$0xff]
  %v2150 = vld [vmem:[%s19] sm:$0x1]
  %v2152 = vlaneseq
  %v2153 = vshrl.u32 %v2152, 7
  %v2154 = vsub.s32 0, %v2153
  %v2155 = vrot.slane %v2150, %v2154
  %v2158 = vsel %vm416, %v2149, 0
  %2160 = vmatprep.subr.mxu0 0.0
  %2161 = vmatpush1.msra.mxu0 0.0
  %2162 = vmatprep.subr.mxu0 0.0
  %2163 = vmatpush1.msra.mxu0 0.0
  %2164 = vmatprep.subr.mxu0 0.0
  %2165 = vmatpush1.msra.mxu0 0.0
  %2166 = vmatprep.subr.mxu0 0.0
  %2167 = vmatpush1.msra.mxu0 0.0
  %2168 = vmatprep.subr.mxu0 0.0
  %2169 = vmatpush1.msra.mxu0 0.0
  %2170 = vmatprep.subr.mxu0 0.0
  %2171 = vmatpush1.msra.mxu0 0.0
  %2172 = vmatprep.subr.mxu0 0.0
  %2173 = vmatpush1.msra.mxu0 0.0
  %2174 = vmatprep.subr.mxu0 0.0
  %2175 = vmatpush1.msra.mxu0 0.0
  %2176 = vmatprep.subr.mxu0 0.0
  %2177 = vmatpush1.msra.mxu0 0.0
  %2178 = vmatprep.subr.mxu0 0.0
  %2179 = vmatpush1.msra.mxu0 0.0
  %2180 = vmatprep.subr.mxu0 0.0
  %2181 = vmatpush1.msra.mxu0 0.0
  %2182 = vmatprep.subr.mxu0 0.0
  %2183 = vmatpush1.msra.mxu0 0.0
  %2184 = vmatprep.subr.mxu0 0.0
  %2185 = vmatpush1.msra.mxu0 0.0
  %2186 = vmatprep.subr.mxu0 0.0
  %2187 = vmatpush1.msra.mxu0 0.0
  %2188 = vmatprep.subr.mxu0 0.0
  %2189 = vmatpush1.msra.mxu0 %v2146
  %2190 = vmatprep.subr.mxu0 0.0
  %2191 = vmatpush1.msra.mxu0 %v2141
  %2192 = vmatprep.subr.mxu0 0.0
  %2193 = vmatpush2.msra.mxu0 0.0
  %2194 = vmatprep.subr.mxu0 0.0
  %2195 = vmatpush2.msra.mxu0 0.0
  %2196 = vmatprep.subr.mxu0 0.0
  %2197 = vmatpush2.msra.mxu0 0.0
  %2198 = vmatprep.subr.mxu0 0.0
  %2199 = vmatpush2.msra.mxu0 0.0
  %2200 = vmatprep.subr.mxu0 0.0
  %2201 = vmatpush2.msra.mxu0 0.0
  %2202 = vmatprep.subr.mxu0 0.0
  %2203 = vmatpush2.msra.mxu0 0.0
  %2204 = vmatprep.subr.mxu0 0.0
  %2205 = vmatpush2.msra.mxu0 0.0
  %2206 = vmatprep.subr.mxu0 0.0
  %2207 = vmatpush2.msra.mxu0 0.0
  %2208 = vmatprep.subr.mxu0 0.0
  %2209 = vmatpush2.msra.mxu0 0.0
  %2210 = vmatprep.subr.mxu0 0.0
  %2211 = vmatpush2.msra.mxu0 0.0
  %2212 = vmatprep.subr.mxu0 0.0
  %2213 = vmatpush2.msra.mxu0 0.0
  %2214 = vmatprep.subr.mxu0 0.0
  %2215 = vmatpush2.msra.mxu0 0.0
  %2216 = vmatprep.subr.mxu0 0.0
  %2217 = vmatpush2.msra.mxu0 0.0
  %2218 = vmatprep.subr.mxu0 0.0
  %2219 = vmatpush2.msra.mxu0 0.0
  %2220 = vmatprep.subr.mxu0 0.0
  %2221 = vmatpush2.msra.mxu0 0.0
  %2222 = vmatprep.subr.mxu0 0.0
  %2223 = vmatpush2.msra.mxu0 0.0
  %2224 = vmatprep.mubr.f32.mxu0 0.0
  %2225 = vmatmul.mubr.f32.gmra.mxu0 %v2158
  %v2226 = vpop.f32.mrf.mxu0
  %v2227 = vadd.f32 %v2155, %v2226
  %v2228 = vpop.f32.mrf.mxu0
  %2229 = vdwg.mxu0
  %v2230 = vld [vmem:[%s15] sm:$0xff]
  %v2231 = vld [vmem:[%s15 + $0x8] sm:$0xff]
  %v2232 = vld [vmem:[%s15 + $0x10] sm:$0xff]
  %v2233 = vld [vmem:[%s15 + $0x18] sm:$0xff]
  %v2234 = vld [vmem:[%s15 + $0x20] sm:$0xff]
  %v2235 = vld [vmem:[%s15 + $0x28] sm:$0xff]
  %v2236 = vld [vmem:[%s15 + $0x30] sm:$0xff]
  %v2237 = vld [vmem:[%s15 + $0x38] sm:$0xff]
  %v2238 = vld [vmem:[%s16] sm:$0x3f]
  %vm2239 = vcmask 48128
  %v2241 = vsel %vm2239, %v2230, 0
  %v2244 = vsel %vm2239, %v2231, 0
  %v2247 = vsel %vm2239, %v2232, 0
  %v2250 = vsel %vm2239, %v2233, 0
  %v2253 = vsel %vm2239, %v2234, 0
  %v2256 = vsel %vm2239, %v2235, 0
  %v2259 = vsel %vm2239, %v2236, 0
  %v2262 = vsel %vm2239, %v2237, 0
  %vm2264 = vcmask 1045504
  %v2266 = vsel %vm2264, %v2238, 0
  %2268 = vmatprep.subr.mxu0 0.0
  %2269 = vmatpush1.msra.mxu0 0.0
  %2270 = vmatprep.subr.mxu0 0.0
  %2271 = vmatpush1.msra.mxu0 0.0
  %2272 = vmatprep.subr.mxu0 0.0
  %2273 = vmatpush1.msra.mxu0 0.0
  %2274 = vmatprep.subr.mxu0 0.0
  %2275 = vmatpush1.msra.mxu0 0.0
  %2276 = vmatprep.subr.mxu0 0.0
  %2277 = vmatpush1.msra.mxu0 0.0
  %2278 = vmatprep.subr.mxu0 0.0
  %2279 = vmatpush1.msra.mxu0 0.0
  %2280 = vmatprep.subr.mxu0 0.0
  %2281 = vmatpush1.msra.mxu0 0.0
  %2282 = vmatprep.subr.mxu0 0.0
  %2283 = vmatpush1.msra.mxu0 0.0
  %2284 = vmatprep.subr.mxu0 0.0
  %2285 = vmatpush1.msra.mxu0 0.0
  %2286 = vmatprep.subr.mxu0 0.0
  %2287 = vmatpush1.msra.mxu0 0.0
  %2288 = vmatprep.subr.mxu0 0.0
  %2289 = vmatpush1.msra.mxu0 0.0
  %2290 = vmatprep.subr.mxu0 0.0
  %2291 = vmatpush1.msra.mxu0 0.0
  %2292 = vmatprep.subr.mxu0 0.0
  %2293 = vmatpush1.msra.mxu0 0.0
  %2294 = vmatprep.subr.mxu0 0.0
  %2295 = vmatpush1.msra.mxu0 0.0
  %2296 = vmatprep.subr.mxu0 0.0
  %2297 = vmatpush1.msra.mxu0 0.0
  %2298 = vmatprep.subr.mxu0 0.0
  %2299 = vmatpush1.msra.mxu0 %v2266
  %2300 = vmatprep.subr.mxu0 0.0
  %2301 = vmatpush2.msra.mxu0 0.0
  %2302 = vmatprep.subr.mxu0 0.0
  %2303 = vmatpush2.msra.mxu0 0.0
  %2304 = vmatprep.subr.mxu0 0.0
  %2305 = vmatpush2.msra.mxu0 0.0
  %2306 = vmatprep.subr.mxu0 0.0
  %2307 = vmatpush2.msra.mxu0 0.0
  %2308 = vmatprep.subr.mxu0 0.0
  %2309 = vmatpush2.msra.mxu0 0.0
  %2310 = vmatprep.subr.mxu0 0.0
  %2311 = vmatpush2.msra.mxu0 0.0
  %2312 = vmatprep.subr.mxu0 0.0
  %2313 = vmatpush2.msra.mxu0 0.0
  %2314 = vmatprep.subr.mxu0 0.0
  %2315 = vmatpush2.msra.mxu0 0.0
  %2316 = vmatprep.subr.mxu0 0.0
  %2317 = vmatpush2.msra.mxu0 0.0
  %2318 = vmatprep.subr.mxu0 0.0
  %2319 = vmatpush2.msra.mxu0 0.0
  %2320 = vmatprep.subr.mxu0 0.0
  %2321 = vmatpush2.msra.mxu0 0.0
  %2322 = vmatprep.subr.mxu0 0.0
  %2323 = vmatpush2.msra.mxu0 0.0
  %2324 = vmatprep.subr.mxu0 0.0
  %2325 = vmatpush2.msra.mxu0 0.0
  %2326 = vmatprep.subr.mxu0 0.0
  %2327 = vmatpush2.msra.mxu0 0.0
  %2328 = vmatprep.subr.mxu0 0.0
  %2329 = vmatpush2.msra.mxu0 0.0
  %2330 = vmatprep.subr.mxu0 0.0
  %2331 = vmatpush2.msra.mxu0 0.0
  %2332 = vmatprep.mubr.f32.mxu0 0.0
  %2333 = vmatmul.mubr.f32.gmra.mxu0 %v2241
  %v2334 = vpop.f32.mrf.mxu0
  %v2335 = vadd.f32 0.0, %v2334
  %v2336 = vpop.f32.mrf.mxu0
  %2337 = vmatprep.mubr.f32.mxu0 0.0
  %2338 = vmatmul.mubr.f32.gmra.mxu0 %v2244
  %v2339 = vpop.f32.mrf.mxu0
  %v2340 = vadd.f32 0.0, %v2339
  %v2341 = vpop.f32.mrf.mxu0
  %2342 = vmatprep.mubr.f32.mxu0 0.0
  %2343 = vmatmul.mubr.f32.gmra.mxu0 %v2247
  %v2344 = vpop.f32.mrf.mxu0
  %v2345 = vadd.f32 0.0, %v2344
  %v2346 = vpop.f32.mrf.mxu0
  %2347 = vmatprep.mubr.f32.mxu0 0.0
  %2348 = vmatmul.mubr.f32.gmra.mxu0 %v2250
  %v2349 = vpop.f32.mrf.mxu0
  %v2350 = vadd.f32 0.0, %v2349
  %v2351 = vpop.f32.mrf.mxu0
  %2352 = vmatprep.mubr.f32.mxu0 0.0
  %2353 = vmatmul.mubr.f32.gmra.mxu0 %v2253
  %v2354 = vpop.f32.mrf.mxu0
  %v2355 = vadd.f32 0.0, %v2354
  %v2356 = vpop.f32.mrf.mxu0
  %2357 = vmatprep.mubr.f32.mxu0 0.0
  %2358 = vmatmul.mubr.f32.gmra.mxu0 %v2256
  %v2359 = vpop.f32.mrf.mxu0
  %v2360 = vadd.f32 0.0, %v2359
  %v2361 = vpop.f32.mrf.mxu0
  %2362 = vmatprep.mubr.f32.mxu0 0.0
  %2363 = vmatmul.mubr.f32.gmra.mxu0 %v2259
  %v2364 = vpop.f32.mrf.mxu0
  %v2365 = vadd.f32 0.0, %v2364
  %v2366 = vpop.f32.mrf.mxu0
  %2367 = vmatprep.mubr.f32.mxu0 0.0
  %2368 = vmatmul.mubr.f32.gmra.mxu0 %v2262
  %v2369 = vpop.f32.mrf.mxu0
  %v2370 = vadd.f32 0.0, %v2369
  %v2371 = vpop.f32.mrf.mxu0
  %2372 = vdwg.mxu0
  %2373 = vst [vmem:[#allocation2] sm:$0xff] %v2335
  %2374 = vst [vmem:[#allocation2 + $0x8] sm:$0xff] %v2340
  %2375 = vst [vmem:[#allocation2 + $0x10] sm:$0xff] %v2345
  %2376 = vst [vmem:[#allocation2 + $0x18] sm:$0xff] %v2350
  %2377 = vst [vmem:[#allocation2 + $0x20] sm:$0xff] %v2355
  %2378 = vst [vmem:[#allocation2 + $0x28] sm:$0xff] %v2360
  %2379 = vst [vmem:[#allocation2 + $0x30] sm:$0xff] %v2365
  %2380 = vst [vmem:[#allocation2 + $0x38] sm:$0xff] %v2370
  %v2381 = vlaneseq
  %v2382 = vand.u32 %v2381, 127
  %vm2383 = vcmp.ge.s32.totalorder %v2382, 64
  %vm2384 = vcmp.lt.s32.totalorder %v2382, 96
  %vm2385 = vmand %vm2383, %vm2384
  %v2386 = vsel %vm2385, 1.0, 0.5
  %v2387 = vld [vmem:[#allocation2] sm:$0xff]
  %v2388 = vadd.f32 %v2387, %v2227
  %v2389 = vld [vmem:[%s18] sm:$0xff]
  %v2390 = vld [vmem:[%s18 + $0x8] sm:$0xff]
  %v2391 = vld [vmem:[%s18 + $0x10] sm:$0xff]
  %v2392 = vld [vmem:[%s18 + $0x18] sm:$0xff]
  %v2393 = vld [vmem:[%s18 + $0x20] sm:$0xff]
  %v2394 = vld [vmem:[%s18 + $0x28] sm:$0xff]
  %v2395 = vld [vmem:[%s18 + $0x30] sm:$0xff]
  %v2396 = vld [vmem:[%s18 + $0x38] sm:$0xff]
  %v2397 = vld [vmem:[%s18 + $0x40] sm:$0xff]
  %v2398 = vld [vmem:[%s18 + $0x48] sm:$0xff]
  %v2399 = vld [vmem:[%s18 + $0x50] sm:$0xff]
  %v2400 = vld [vmem:[%s18 + $0x58] sm:$0xff]
  %v2401 = vld [vmem:[%s18 + $0x60] sm:$0xff]
  %v2402 = vld [vmem:[%s18 + $0x68] sm:$0xff]
  %v2403 = vld [vmem:[%s18 + $0x70] sm:$0xff]
  %v2404 = vld [vmem:[%s18 + $0x78] sm:$0xff]
  %2405 = vmatprep.subr.mxu0 0.0
  %2406 = vmatpush1.msra.mxu0 %v2404
  %2407 = vmatprep.subr.mxu0 0.0
  %2408 = vmatpush1.msra.mxu0 %v2403
  %2409 = vmatprep.subr.mxu0 0.0
  %2410 = vmatpush1.msra.mxu0 %v2402
  %2411 = vmatprep.subr.mxu0 0.0
  %2412 = vmatpush1.msra.mxu0 %v2401
  %2413 = vmatprep.subr.mxu0 0.0
  %2414 = vmatpush1.msra.mxu0 %v2400
  %2415 = vmatprep.subr.mxu0 0.0
  %2416 = vmatpush1.msra.mxu0 %v2399
  %2417 = vmatprep.subr.mxu0 0.0
  %2418 = vmatpush1.msra.mxu0 %v2398
  %2419 = vmatprep.subr.mxu0 0.0
  %2420 = vmatpush1.msra.mxu0 %v2397
  %2421 = vmatprep.subr.mxu0 0.0
  %2422 = vmatpush1.msra.mxu0 %v2396
  %2423 = vmatprep.subr.mxu0 0.0
  %2424 = vmatpush1.msra.mxu0 %v2395
  %2425 = vmatprep.subr.mxu0 0.0
  %2426 = vmatpush1.msra.mxu0 %v2394
  %2427 = vmatprep.subr.mxu0 0.0
  %2428 = vmatpush1.msra.mxu0 %v2393
  %2429 = vmatprep.subr.mxu0 0.0
  %2430 = vmatpush1.msra.mxu0 %v2392
  %2431 = vmatprep.subr.mxu0 0.0
  %2432 = vmatpush1.msra.mxu0 %v2391
  %2433 = vmatprep.subr.mxu0 0.0
  %2434 = vmatpush1.msra.mxu0 %v2390
  %2435 = vmatprep.subr.mxu0 0.0
  %2436 = vmatpush1.msra.mxu0 %v2389
  %2437 = vmatprep.subr.mxu0 0.0
  %2438 = vmatpush2.msra.mxu0 0.0
  %2439 = vmatprep.subr.mxu0 0.0
  %2440 = vmatpush2.msra.mxu0 0.0
  %2441 = vmatprep.subr.mxu0 0.0
  %2442 = vmatpush2.msra.mxu0 0.0
  %2443 = vmatprep.subr.mxu0 0.0
  %2444 = vmatpush2.msra.mxu0 0.0
  %2445 = vmatprep.subr.mxu0 0.0
  %2446 = vmatpush2.msra.mxu0 0.0
  %2447 = vmatprep.subr.mxu0 0.0
  %2448 = vmatpush2.msra.mxu0 0.0
  %2449 = vmatprep.subr.mxu0 0.0
  %2450 = vmatpush2.msra.mxu0 0.0
  %2451 = vmatprep.subr.mxu0 0.0
  %2452 = vmatpush2.msra.mxu0 0.0
  %2453 = vmatprep.subr.mxu0 0.0
  %2454 = vmatpush2.msra.mxu0 0.0
  %2455 = vmatprep.subr.mxu0 0.0
  %2456 = vmatpush2.msra.mxu0 0.0
  %2457 = vmatprep.subr.mxu0 0.0
  %2458 = vmatpush2.msra.mxu0 0.0
  %2459 = vmatprep.subr.mxu0 0.0
  %2460 = vmatpush2.msra.mxu0 0.0
  %2461 = vmatprep.subr.mxu0 0.0
  %2462 = vmatpush2.msra.mxu0 0.0
  %2463 = vmatprep.subr.mxu0 0.0
  %2464 = vmatpush2.msra.mxu0 0.0
  %2465 = vmatprep.subr.mxu0 0.0
  %2466 = vmatpush2.msra.mxu0 0.0
  %2467 = vmatprep.subr.mxu0 0.0
  %2468 = vmatpush2.msra.mxu0 0.0
  %2469 = vmatprep.mubr.f32.mxu0 0.0
  %2470 = vmatmul.mubr.f32.gmra.mxu0 0.0
  %v2471 = vpop.f32.mrf.mxu0
  %v2472 = vadd.f32 0.0, %v2471
  %v2473 = vpop.f32.mrf.mxu0
  %2474 = vdwg.mxu0
  %v2475 = vadd.f32 %v2388, %v2472
  %v2476 = vmul.f32 %v2475, %v2386
  %v2477 = vtanh.pop %v2476
  %v2478 = vmul.f32 %v2477, 0.5
  %v2479 = vadd.f32 %v2478, 0.5
  %v2480 = vsel %vm2385, %v2477, %v2479
  %2481 = vrot.lane.b32.xlu0 %v2480, 96
  %v2482 = vpop.permute.xlu0 %2481
  %2483 = vrot.lane.b32.xlu0 %v2480, 64
  %v2484 = vpop.permute.xlu0 %2483
  %2485 = vrot.lane.b32.xlu0 %v2480, 32
  %v2486 = vpop.permute.xlu0 %2485
  %v2487 = vmul.f32 %v2482, 0.0
  %v2488 = vmul.f32 %v2480, %v2484
  %v2489 = vadd.f32 %v2487, %v2488
  %v2490 = vtanh.pop %v2489
  %v2491 = vmul.f32 %v2486, %v2490
  %v2492 = vld [vmem:[#allocation2 + $0x8] sm:$0xff]
  %v2493 = vadd.f32 %v2492, %v2227
  %2494 = vmatprep.subr.mxu0 0.0
  %2495 = vmatpush1.msra.mxu0 %v2404
  %2496 = vmatprep.subr.mxu0 0.0
  %2497 = vmatpush1.msra.mxu0 %v2403
  %2498 = vmatprep.subr.mxu0 0.0
  %2499 = vmatpush1.msra.mxu0 %v2402
  %2500 = vmatprep.subr.mxu0 0.0
  %2501 = vmatpush1.msra.mxu0 %v2401
  %2502 = vmatprep.subr.mxu0 0.0
  %2503 = vmatpush1.msra.mxu0 %v2400
  %2504 = vmatprep.subr.mxu0 0.0
  %2505 = vmatpush1.msra.mxu0 %v2399
  %2506 = vmatprep.subr.mxu0 0.0
  %2507 = vmatpush1.msra.mxu0 %v2398
  %2508 = vmatprep.subr.mxu0 0.0
  %2509 = vmatpush1.msra.mxu0 %v2397
  %2510 = vmatprep.subr.mxu0 0.0
  %2511 = vmatpush1.msra.mxu0 %v2396
  %2512 = vmatprep.subr.mxu0 0.0
  %2513 = vmatpush1.msra.mxu0 %v2395
  %2514 = vmatprep.subr.mxu0 0.0
  %2515 = vmatpush1.msra.mxu0 %v2394
  %2516 = vmatprep.subr.mxu0 0.0
  %2517 = vmatpush1.msra.mxu0 %v2393
  %2518 = vmatprep.subr.mxu0 0.0
  %2519 = vmatpush1.msra.mxu0 %v2392
  %2520 = vmatprep.subr.mxu0 0.0
  %2521 = vmatpush1.msra.mxu0 %v2391
  %2522 = vmatprep.subr.mxu0 0.0
  %2523 = vmatpush1.msra.mxu0 %v2390
  %2524 = vmatprep.subr.mxu0 0.0
  %2525 = vmatpush1.msra.mxu0 %v2389
  %2526 = vmatprep.subr.mxu0 0.0
  %2527 = vmatpush2.msra.mxu0 0.0
  %2528 = vmatprep.subr.mxu0 0.0
  %2529 = vmatpush2.msra.mxu0 0.0
  %2530 = vmatprep.subr.mxu0 0.0
  %2531 = vmatpush2.msra.mxu0 0.0
  %2532 = vmatprep.subr.mxu0 0.0
  %2533 = vmatpush2.msra.mxu0 0.0
  %2534 = vmatprep.subr.mxu0 0.0
  %2535 = vmatpush2.msra.mxu0 0.0
  %2536 = vmatprep.subr.mxu0 0.0
  %2537 = vmatpush2.msra.mxu0 0.0
  %2538 = vmatprep.subr.mxu0 0.0
  %2539 = vmatpush2.msra.mxu0 0.0
  %2540 = vmatprep.subr.mxu0 0.0
  %2541 = vmatpush2.msra.mxu0 0.0
  %2542 = vmatprep.subr.mxu0 0.0
  %2543 = vmatpush2.msra.mxu0 0.0
  %2544 = vmatprep.subr.mxu0 0.0
  %2545 = vmatpush2.msra.mxu0 0.0
  %2546 = vmatprep.subr.mxu0 0.0
  %2547 = vmatpush2.msra.mxu0 0.0
  %2548 = vmatprep.subr.mxu0 0.0
  %2549 = vmatpush2.msra.mxu0 0.0
  %2550 = vmatprep.subr.mxu0 0.0
  %2551 = vmatpush2.msra.mxu0 0.0
  %2552 = vmatprep.subr.mxu0 0.0
  %2553 = vmatpush2.msra.mxu0 0.0
  %2554 = vmatprep.subr.mxu0 0.0
  %2555 = vmatpush2.msra.mxu0 0.0
  %2556 = vmatprep.subr.mxu0 0.0
  %2557 = vmatpush2.msra.mxu0 0.0
  %2558 = vmatprep.mubr.f32.mxu0 0.0
  %2559 = vmatmul.mubr.f32.gmra.mxu0 %v2491
  %v2560 = vpop.f32.mrf.mxu0
  %v2561 = vadd.f32 0.0, %v2560
  %v2562 = vpop.f32.mrf.mxu0
  %2563 = vdwg.mxu0
  %v2564 = vadd.f32 %v2493, %v2561
  %v2565 = vmul.f32 %v2564, %v2386
  %v2566 = vtanh.pop %v2565
  %v2567 = vmul.f32 %v2566, 0.5
  %v2568 = vadd.f32 %v2567, 0.5
  %v2569 = vsel %vm2385, %v2566, %v2568
  %2570 = vrot.lane.b32.xlu0 %v2569, 96
  %v2571 = vpop.permute.xlu0 %2570
  %2572 = vrot.lane.b32.xlu0 %v2569, 64
  %v2573 = vpop.permute.xlu0 %2572
  %2574 = vrot.lane.b32.xlu0 %v2569, 32
  %v2575 = vpop.permute.xlu0 %2574
  %v2576 = vmul.f32 %v2571, %v2489
  %v2577 = vmul.f32 %v2569, %v2573
  %v2578 = vadd.f32 %v2576, %v2577
  %v2579 = vtanh.pop %v2578
  %v2580 = vmul.f32 %v2575, %v2579
  %v2581 = vld [vmem:[%s17] sm:$0xff]
  %v2582 = vld [vmem:[%s17 + $0x8] sm:$0xff]
  %v2583 = vld [vmem:[%s17 + $0x10] sm:$0xff]
  %v2584 = vld [vmem:[%s17 + $0x18] sm:$0xff]
  %v2585 = vld [vmem:[%s17 + $0x20] sm:$0xff]
  %v2586 = vld [vmem:[%s17 + $0x28] sm:$0xff]
  %v2587 = vld [vmem:[%s17 + $0x30] sm:$0xff]
  %v2588 = vld [vmem:[%s17 + $0x38] sm:$0xff]
  %v2589 = vld [vmem:[%s17 + $0x40] sm:$0xff]
  %v2590 = vld [vmem:[%s17 + $0x48] sm:$0xff]
  %v2591 = vld [vmem:[%s17 + $0x50] sm:$0xff]
  %v2592 = vld [vmem:[%s17 + $0x58] sm:$0xff]
  %v2593 = vld [vmem:[%s17 + $0x60] sm:$0xff]
  %v2594 = vld [vmem:[%s17 + $0x68] sm:$0xff]
  %v2595 = vld [vmem:[%s17 + $0x70] sm:$0xff]
  %v2596 = vld [vmem:[%s17 + $0x78] sm:$0xff]
  %s2597 = scalar_lea.vmem %s18, 128
  %v2598 = vld [vmem:[%s2597] sm:$0xff]
  %v2599 = vld [vmem:[%s2597 + $0x8] sm:$0xff]
  %v2600 = vld [vmem:[%s2597 + $0x10] sm:$0xff]
  %v2601 = vld [vmem:[%s2597 + $0x18] sm:$0xff]
  %v2602 = vld [vmem:[%s2597 + $0x20] sm:$0xff]
  %v2603 = vld [vmem:[%s2597 + $0x28] sm:$0xff]
  %v2604 = vld [vmem:[%s2597 + $0x30] sm:$0xff]
  %v2605 = vld [vmem:[%s2597 + $0x38] sm:$0xff]
  %v2606 = vld [vmem:[%s2597 + $0x40] sm:$0xff]
  %v2607 = vld [vmem:[%s2597 + $0x48] sm:$0xff]
  %v2608 = vld [vmem:[%s2597 + $0x50] sm:$0xff]
  %v2609 = vld [vmem:[%s2597 + $0x58] sm:$0xff]
  %v2610 = vld [vmem:[%s2597 + $0x60] sm:$0xff]
  %v2611 = vld [vmem:[%s2597 + $0x68] sm:$0xff]
  %v2612 = vld [vmem:[%s2597 + $0x70] sm:$0xff]
  %v2613 = vld [vmem:[%s2597 + $0x78] sm:$0xff]
  %2614 = vmatprep.subr.mxu0 0.0
  %2615 = vmatpush1.msra.mxu0 %v2613
  %2616 = vmatprep.subr.mxu0 0.0
  %2617 = vmatpush1.msra.mxu0 %v2612
  %2618 = vmatprep.subr.mxu0 0.0
  %2619 = vmatpush1.msra.mxu0 %v2611
  %2620 = vmatprep.subr.mxu0 0.0
  %2621 = vmatpush1.msra.mxu0 %v2610
  %2622 = vmatprep.subr.mxu0 0.0
  %2623 = vmatpush1.msra.mxu0 %v2609
  %2624 = vmatprep.subr.mxu0 0.0
  %2625 = vmatpush1.msra.mxu0 %v2608
  %2626 = vmatprep.subr.mxu0 0.0
  %2627 = vmatpush1.msra.mxu0 %v2607
  %2628 = vmatprep.subr.mxu0 0.0
  %2629 = vmatpush1.msra.mxu0 %v2606
  %2630 = vmatprep.subr.mxu0 0.0
  %2631 = vmatpush1.msra.mxu0 %v2605
  %2632 = vmatprep.subr.mxu0 0.0
  %2633 = vmatpush1.msra.mxu0 %v2604
  %2634 = vmatprep.subr.mxu0 0.0
  %2635 = vmatpush1.msra.mxu0 %v2603
  %2636 = vmatprep.subr.mxu0 0.0
  %2637 = vmatpush1.msra.mxu0 %v2602
  %2638 = vmatprep.subr.mxu0 0.0
  %2639 = vmatpush1.msra.mxu0 %v2601
  %2640 = vmatprep.subr.mxu0 0.0
  %2641 = vmatpush1.msra.mxu0 %v2600
  %2642 = vmatprep.subr.mxu0 0.0
  %2643 = vmatpush1.msra.mxu0 %v2599
  %2644 = vmatprep.subr.mxu0 0.0
  %2645 = vmatpush1.msra.mxu0 %v2598
  %2646 = vmatprep.subr.mxu0 0.0
  %2647 = vmatpush2.msra.mxu0 0.0
  %2648 = vmatprep.subr.mxu0 0.0
  %2649 = vmatpush2.msra.mxu0 0.0
  %2650 = vmatprep.subr.mxu0 0.0
  %2651 = vmatpush2.msra.mxu0 0.0
  %2652 = vmatprep.subr.mxu0 0.0
  %2653 = vmatpush2.msra.mxu0 0.0
  %2654 = vmatprep.subr.mxu0 0.0
  %2655 = vmatpush2.msra.mxu0 0.0
  %2656 = vmatprep.subr.mxu0 0.0
  %2657 = vmatpush2.msra.mxu0 0.0
  %2658 = vmatprep.subr.mxu0 0.0
  %2659 = vmatpush2.msra.mxu0 0.0
  %2660 = vmatprep.subr.mxu0 0.0
  %2661 = vmatpush2.msra.mxu0 0.0
  %2662 = vmatprep.subr.mxu0 0.0
  %2663 = vmatpush2.msra.mxu0 0.0
  %2664 = vmatprep.subr.mxu0 0.0
  %2665 = vmatpush2.msra.mxu0 0.0
  %2666 = vmatprep.subr.mxu0 0.0
  %2667 = vmatpush2.msra.mxu0 0.0
  %2668 = vmatprep.subr.mxu0 0.0
  %2669 = vmatpush2.msra.mxu0 0.0
  %2670 = vmatprep.subr.mxu0 0.0
  %2671 = vmatpush2.msra.mxu0 0.0
  %2672 = vmatprep.subr.mxu0 0.0
  %2673 = vmatpush2.msra.mxu0 0.0
  %2674 = vmatprep.subr.mxu0 0.0
  %2675 = vmatpush2.msra.mxu0 0.0
  %2676 = vmatprep.subr.mxu0 0.0
  %2677 = vmatpush2.msra.mxu0 0.0
  %2678 = vmatprep.mubr.f32.mxu0 0.0
  %2679 = vmatmul.mubr.f32.gmra.mxu0 0.0
  %v2680 = vpop.f32.mrf.mxu0
  %v2681 = vadd.f32 0.0, %v2680
  %v2682 = vpop.f32.mrf.mxu0
  %2683 = vdwg.mxu0
  %2684 = vmatprep.subr.mxu0 0.0
  %2685 = vmatpush1.msra.mxu0 %v2596
  %2686 = vmatprep.subr.mxu0 0.0
  %2687 = vmatpush1.msra.mxu0 %v2595
  %2688 = vmatprep.subr.mxu0 0.0
  %2689 = vmatpush1.msra.mxu0 %v2594
  %2690 = vmatprep.subr.mxu0 0.0
  %2691 = vmatpush1.msra.mxu0 %v2593
  %2692 = vmatprep.subr.mxu0 0.0
  %2693 = vmatpush1.msra.mxu0 %v2592
  %2694 = vmatprep.subr.mxu0 0.0
  %2695 = vmatpush1.msra.mxu0 %v2591
  %2696 = vmatprep.subr.mxu0 0.0
  %2697 = vmatpush1.msra.mxu0 %v2590
  %2698 = vmatprep.subr.mxu0 0.0
  %2699 = vmatpush1.msra.mxu0 %v2589
  %2700 = vmatprep.subr.mxu0 0.0
  %2701 = vmatpush1.msra.mxu0 %v2588
  %2702 = vmatprep.subr.mxu0 0.0
  %2703 = vmatpush1.msra.mxu0 %v2587
  %2704 = vmatprep.subr.mxu0 0.0
  %2705 = vmatpush1.msra.mxu0 %v2586
  %2706 = vmatprep.subr.mxu0 0.0
  %2707 = vmatpush1.msra.mxu0 %v2585
  %2708 = vmatprep.subr.mxu0 0.0
  %2709 = vmatpush1.msra.mxu0 %v2584
  %2710 = vmatprep.subr.mxu0 0.0
  %2711 = vmatpush1.msra.mxu0 %v2583
  %2712 = vmatprep.subr.mxu0 0.0
  %2713 = vmatpush1.msra.mxu0 %v2582
  %2714 = vmatprep.subr.mxu0 0.0
  %2715 = vmatpush1.msra.mxu0 %v2581
  %2716 = vmatprep.subr.mxu0 0.0
  %2717 = vmatpush2.msra.mxu0 0.0
  %2718 = vmatprep.subr.mxu0 0.0
  %2719 = vmatpush2.msra.mxu0 0.0
  %2720 = vmatprep.subr.mxu0 0.0
  %2721 = vmatpush2.msra.mxu0 0.0
  %2722 = vmatprep.subr.mxu0 0.0
  %2723 = vmatpush2.msra.mxu0 0.0
  %2724 = vmatprep.subr.mxu0 0.0
  %2725 = vmatpush2.msra.mxu0 0.0
  %2726 = vmatprep.subr.mxu0 0.0
  %2727 = vmatpush2.msra.mxu0 0.0
  %2728 = vmatprep.subr.mxu0 0.0
  %2729 = vmatpush2.msra.mxu0 0.0
  %2730 = vmatprep.subr.mxu0 0.0
  %2731 = vmatpush2.msra.mxu0 0.0
  %2732 = vmatprep.subr.mxu0 0.0
  %2733 = vmatpush2.msra.mxu0 0.0
  %2734 = vmatprep.subr.mxu0 0.0
  %2735 = vmatpush2.msra.mxu0 0.0
  %2736 = vmatprep.subr.mxu0 0.0
  %2737 = vmatpush2.msra.mxu0 0.0
  %2738 = vmatprep.subr.mxu0 0.0
  %2739 = vmatpush2.msra.mxu0 0.0
  %2740 = vmatprep.subr.mxu0 0.0
  %2741 = vmatpush2.msra.mxu0 0.0
  %2742 = vmatprep.subr.mxu0 0.0
  %2743 = vmatpush2.msra.mxu0 0.0
  %2744 = vmatprep.subr.mxu0 0.0
  %2745 = vmatpush2.msra.mxu0 0.0
  %2746 = vmatprep.subr.mxu0 0.0
  %2747 = vmatpush2.msra.mxu0 0.0
  %2748 = vmatprep.mubr.f32.mxu0 0.0
  %2749 = vmatmul.mubr.f32.gmra.mxu0 %v2491
  %v2750 = vpop.f32.mrf.mxu0
  %v2751 = vadd.f32 %v2681, %v2750
  %v2752 = vpop.f32.mrf.mxu0
  %2753 = vdwg.mxu0
  %s2754 = scalar_lea.vmem %s19, 1
  %v2755 = vld [vmem:[%s2754] sm:$0x1]
  %v2757 = vlaneseq
  %v2758 = vshrl.u32 %v2757, 7
  %v2759 = vsub.s32 0, %v2758
  %v2760 = vrot.slane %v2755, %v2759
  %v2762 = vadd.f32 %v2751, %v2760
  %v2763 = vmul.f32 %v2762, %v2386
  %v2764 = vtanh.pop %v2763
  %v2765 = vmul.f32 %v2764, 0.5
  %v2766 = vadd.f32 %v2765, 0.5
  %v2767 = vsel %vm2385, %v2764, %v2766
  %2768 = vrot.lane.b32.xlu0 %v2767, 96
  %v2769 = vpop.permute.xlu0 %2768
  %2770 = vrot.lane.b32.xlu0 %v2767, 64
  %v2771 = vpop.permute.xlu0 %2770
  %2772 = vrot.lane.b32.xlu0 %v2767, 32
  %v2773 = vpop.permute.xlu0 %2772
  %v2774 = vmul.f32 %v2769, 0.0
  %v2775 = vmul.f32 %v2767, %v2771
  %v2776 = vadd.f32 %v2774, %v2775
  %v2777 = vtanh.pop %v2776
  %v2778 = vmul.f32 %v2773, %v2777
  %v2779 = vld [vmem:[#allocation2 + $0x10] sm:$0xff]
  %v2780 = vadd.f32 %v2779, %v2227
  %2781 = vmatprep.subr.mxu0 0.0
  %2782 = vmatpush1.msra.mxu0 %v2404
  %2783 = vmatprep.subr.mxu0 0.0
  %2784 = vmatpush1.msra.mxu0 %v2403
  %2785 = vmatprep.subr.mxu0 0.0
  %2786 = vmatpush1.msra.mxu0 %v2402
  %2787 = vmatprep.subr.mxu0 0.0
  %2788 = vmatpush1.msra.mxu0 %v2401
  %2789 = vmatprep.subr.mxu0 0.0
  %2790 = vmatpush1.msra.mxu0 %v2400
  %2791 = vmatprep.subr.mxu0 0.0
  %2792 = vmatpush1.msra.mxu0 %v2399
  %2793 = vmatprep.subr.mxu0 0.0
  %2794 = vmatpush1.msra.mxu0 %v2398
  %2795 = vmatprep.subr.mxu0 0.0
  %2796 = vmatpush1.msra.mxu0 %v2397
  %2797 = vmatprep.subr.mxu0 0.0
  %2798 = vmatpush1.msra.mxu0 %v2396
  %2799 = vmatprep.subr.mxu0 0.0
  %2800 = vmatpush1.msra.mxu0 %v2395
  %2801 = vmatprep.subr.mxu0 0.0
  %2802 = vmatpush1.msra.mxu0 %v2394
  %2803 = vmatprep.subr.mxu0 0.0
  %2804 = vmatpush1.msra.mxu0 %v2393
  %2805 = vmatprep.subr.mxu0 0.0
  %2806 = vmatpush1.msra.mxu0 %v2392
  %2807 = vmatprep.subr.mxu0 0.0
  %2808 = vmatpush1.msra.mxu0 %v2391
  %2809 = vmatprep.subr.mxu0 0.0
  %2810 = vmatpush1.msra.mxu0 %v2390
  %2811 = vmatprep.subr.mxu0 0.0
  %2812 = vmatpush1.msra.mxu0 %v2389
  %2813 = vmatprep.subr.mxu0 0.0
  %2814 = vmatpush2.msra.mxu0 0.0
  %2815 = vmatprep.subr.mxu0 0.0
  %2816 = vmatpush2.msra.mxu0 0.0
  %2817 = vmatprep.subr.mxu0 0.0
  %2818 = vmatpush2.msra.mxu0 0.0
  %2819 = vmatprep.subr.mxu0 0.0
  %2820 = vmatpush2.msra.mxu0 0.0
  %2821 = vmatprep.subr.mxu0 0.0
  %2822 = vmatpush2.msra.mxu0 0.0
  %2823 = vmatprep.subr.mxu0 0.0
  %2824 = vmatpush2.msra.mxu0 0.0
  %2825 = vmatprep.subr.mxu0 0.0
  %2826 = vmatpush2.msra.mxu0 0.0
  %2827 = vmatprep.subr.mxu0 0.0
  %2828 = vmatpush2.msra.mxu0 0.0
  %2829 = vmatprep.subr.mxu0 0.0
  %2830 = vmatpush2.msra.mxu0 0.0
  %2831 = vmatprep.subr.mxu0 0.0
  %2832 = vmatpush2.msra.mxu0 0.0
  %2833 = vmatprep.subr.mxu0 0.0
  %2834 = vmatpush2.msra.mxu0 0.0
  %2835 = vmatprep.subr.mxu0 0.0
  %2836 = vmatpush2.msra.mxu0 0.0
  %2837 = vmatprep.subr.mxu0 0.0
  %2838 = vmatpush2.msra.mxu0 0.0
  %2839 = vmatprep.subr.mxu0 0.0
  %2840 = vmatpush2.msra.mxu0 0.0
  %2841 = vmatprep.subr.mxu0 0.0
  %2842 = vmatpush2.msra.mxu0 0.0
  %2843 = vmatprep.subr.mxu0 0.0
  %2844 = vmatpush2.msra.mxu0 0.0
  %2845 = vmatprep.mubr.f32.mxu0 0.0
  %2846 = vmatmul.mubr.f32.gmra.mxu0 %v2580
  %v2847 = vpop.f32.mrf.mxu0
  %v2848 = vadd.f32 0.0, %v2847
  %v2849 = vpop.f32.mrf.mxu0
  %2850 = vdwg.mxu0
  %v2851 = vadd.f32 %v2780, %v2848
  %v2852 = vmul.f32 %v2851, %v2386
  %v2853 = vtanh.pop %v2852
  %v2854 = vmul.f32 %v2853, 0.5
  %v2855 = vadd.f32 %v2854, 0.5
  %v2856 = vsel %vm2385, %v2853, %v2855
  %2857 = vrot.lane.b32.xlu0 %v2856, 96
  %v2858 = vpop.permute.xlu0 %2857
  %2859 = vrot.lane.b32.xlu0 %v2856, 64
  %v2860 = vpop.permute.xlu0 %2859
  %2861 = vrot.lane.b32.xlu0 %v2856, 32
  %v2862 = vpop.permute.xlu0 %2861
  %v2863 = vmul.f32 %v2858, %v2578
  %v2864 = vmul.f32 %v2856, %v2860
  %v2865 = vadd.f32 %v2863, %v2864
  %v2866 = vtanh.pop %v2865
  %v2867 = vmul.f32 %v2862, %v2866
  %2868 = vmatprep.subr.mxu0 0.0
  %2869 = vmatpush1.msra.mxu0 %v2613
  %2870 = vmatprep.subr.mxu0 0.0
  %2871 = vmatpush1.msra.mxu0 %v2612
  %2872 = vmatprep.subr.mxu0 0.0
  %2873 = vmatpush1.msra.mxu0 %v2611
  %2874 = vmatprep.subr.mxu0 0.0
  %2875 = vmatpush1.msra.mxu0 %v2610
  %2876 = vmatprep.subr.mxu0 0.0
  %2877 = vmatpush1.msra.mxu0 %v2609
  %2878 = vmatprep.subr.mxu0 0.0
  %2879 = vmatpush1.msra.mxu0 %v2608
  %2880 = vmatprep.subr.mxu0 0.0
  %2881 = vmatpush1.msra.mxu0 %v2607
  %2882 = vmatprep.subr.mxu0 0.0
  %2883 = vmatpush1.msra.mxu0 %v2606
  %2884 = vmatprep.subr.mxu0 0.0
  %2885 = vmatpush1.msra.mxu0 %v2605
  %2886 = vmatprep.subr.mxu0 0.0
  %2887 = vmatpush1.msra.mxu0 %v2604
  %2888 = vmatprep.subr.mxu0 0.0
  %2889 = vmatpush1.msra.mxu0 %v2603
  %2890 = vmatprep.subr.mxu0 0.0
  %2891 = vmatpush1.msra.mxu0 %v2602
  %2892 = vmatprep.subr.mxu0 0.0
  %2893 = vmatpush1.msra.mxu0 %v2601
  %2894 = vmatprep.subr.mxu0 0.0
  %2895 = vmatpush1.msra.mxu0 %v2600
  %2896 = vmatprep.subr.mxu0 0.0
  %2897 = vmatpush1.msra.mxu0 %v2599
  %2898 = vmatprep.subr.mxu0 0.0
  %2899 = vmatpush1.msra.mxu0 %v2598
  %2900 = vmatprep.subr.mxu0 0.0
  %2901 = vmatpush2.msra.mxu0 0.0
  %2902 = vmatprep.subr.mxu0 0.0
  %2903 = vmatpush2.msra.mxu0 0.0
  %2904 = vmatprep.subr.mxu0 0.0
  %2905 = vmatpush2.msra.mxu0 0.0
  %2906 = vmatprep.subr.mxu0 0.0
  %2907 = vmatpush2.msra.mxu0 0.0
  %2908 = vmatprep.subr.mxu0 0.0
  %2909 = vmatpush2.msra.mxu0 0.0
  %2910 = vmatprep.subr.mxu0 0.0
  %2911 = vmatpush2.msra.mxu0 0.0
  %2912 = vmatprep.subr.mxu0 0.0
  %2913 = vmatpush2.msra.mxu0 0.0
  %2914 = vmatprep.subr.mxu0 0.0
  %2915 = vmatpush2.msra.mxu0 0.0
  %2916 = vmatprep.subr.mxu0 0.0
  %2917 = vmatpush2.msra.mxu0 0.0
  %2918 = vmatprep.subr.mxu0 0.0
  %2919 = vmatpush2.msra.mxu0 0.0
  %2920 = vmatprep.subr.mxu0 0.0
  %2921 = vmatpush2.msra.mxu0 0.0
  %2922 = vmatprep.subr.mxu0 0.0
  %2923 = vmatpush2.msra.mxu0 0.0
  %2924 = vmatprep.subr.mxu0 0.0
  %2925 = vmatpush2.msra.mxu0 0.0
  %2926 = vmatprep.subr.mxu0 0.0
  %2927 = vmatpush2.msra.mxu0 0.0
  %2928 = vmatprep.subr.mxu0 0.0
  %2929 = vmatpush2.msra.mxu0 0.0
  %2930 = vmatprep.subr.mxu0 0.0
  %2931 = vmatpush2.msra.mxu0 0.0
  %2932 = vmatprep.mubr.f32.mxu0 0.0
  %2933 = vmatmul.mubr.f32.gmra.mxu0 %v2778
  %v2934 = vpop.f32.mrf.mxu0
  %v2935 = vadd.f32 0.0, %v2934
  %v2936 = vpop.f32.mrf.mxu0
  %2937 = vdwg.mxu0
  %2938 = vmatprep.subr.mxu0 0.0
  %2939 = vmatpush1.msra.mxu0 %v2596
  %2940 = vmatprep.subr.mxu0 0.0
  %2941 = vmatpush1.msra.mxu0 %v2595
  %2942 = vmatprep.subr.mxu0 0.0
  %2943 = vmatpush1.msra.mxu0 %v2594
  %2944 = vmatprep.subr.mxu0 0.0
  %2945 = vmatpush1.msra.mxu0 %v2593
  %2946 = vmatprep.subr.mxu0 0.0
  %2947 = vmatpush1.msra.mxu0 %v2592
  %2948 = vmatprep.subr.mxu0 0.0
  %2949 = vmatpush1.msra.mxu0 %v2591
  %2950 = vmatprep.subr.mxu0 0.0
  %2951 = vmatpush1.msra.mxu0 %v2590
  %2952 = vmatprep.subr.mxu0 0.0
  %2953 = vmatpush1.msra.mxu0 %v2589
  %2954 = vmatprep.subr.mxu0 0.0
  %2955 = vmatpush1.msra.mxu0 %v2588
  %2956 = vmatprep.subr.mxu0 0.0
  %2957 = vmatpush1.msra.mxu0 %v2587
  %2958 = vmatprep.subr.mxu0 0.0
  %2959 = vmatpush1.msra.mxu0 %v2586
  %2960 = vmatprep.subr.mxu0 0.0
  %2961 = vmatpush1.msra.mxu0 %v2585
  %2962 = vmatprep.subr.mxu0 0.0
  %2963 = vmatpush1.msra.mxu0 %v2584
  %2964 = vmatprep.subr.mxu0 0.0
  %2965 = vmatpush1.msra.mxu0 %v2583
  %2966 = vmatprep.subr.mxu0 0.0
  %2967 = vmatpush1.msra.mxu0 %v2582
  %2968 = vmatprep.subr.mxu0 0.0
  %2969 = vmatpush1.msra.mxu0 %v2581
  %2970 = vmatprep.subr.mxu0 0.0
  %2971 = vmatpush2.msra.mxu0 0.0
  %2972 = vmatprep.subr.mxu0 0.0
  %2973 = vmatpush2.msra.mxu0 0.0
  %2974 = vmatprep.subr.mxu0 0.0
  %2975 = vmatpush2.msra.mxu0 0.0
  %2976 = vmatprep.subr.mxu0 0.0
  %2977 = vmatpush2.msra.mxu0 0.0
  %2978 = vmatprep.subr.mxu0 0.0
  %2979 = vmatpush2.msra.mxu0 0.0
  %2980 = vmatprep.subr.mxu0 0.0
  %2981 = vmatpush2.msra.mxu0 0.0
  %2982 = vmatprep.subr.mxu0 0.0
  %2983 = vmatpush2.msra.mxu0 0.0
  %2984 = vmatprep.subr.mxu0 0.0
  %2985 = vmatpush2.msra.mxu0 0.0
  %2986 = vmatprep.subr.mxu0 0.0
  %2987 = vmatpush2.msra.mxu0 0.0
  %2988 = vmatprep.subr.mxu0 0.0
  %2989 = vmatpush2.msra.mxu0 0.0
  %2990 = vmatprep.subr.mxu0 0.0
  %2991 = vmatpush2.msra.mxu0 0.0
  %2992 = vmatprep.subr.mxu0 0.0
  %2993 = vmatpush2.msra.mxu0 0.0
  %2994 = vmatprep.subr.mxu0 0.0
  %2995 = vmatpush2.msra.mxu0 0.0
  %2996 = vmatprep.subr.mxu0 0.0
  %2997 = vmatpush2.msra.mxu0 0.0
  %2998 = vmatprep.subr.mxu0 0.0
  %2999 = vmatpush2.msra.mxu0 0.0
  %3000 = vmatprep.subr.mxu0 0.0
  %3001 = vmatpush2.msra.mxu0 0.0
  %3002 = vmatprep.mubr.f32.mxu0 0.0
  %3003 = vmatmul.mubr.f32.gmra.mxu0 %v2580
  %v3004 = vpop.f32.mrf.mxu0
  %v3005 = vadd.f32 %v2935, %v3004
  %v3006 = vpop.f32.mrf.mxu0
  %3007 = vdwg.mxu0
  %v3008 = vadd.f32 %v3005, %v2760
  %v3009 = vmul.f32 %v3008, %v2386
  %v3010 = vtanh.pop %v3009
  %v3011 = vmul.f32 %v3010, 0.5
  %v3012 = vadd.f32 %v3011, 0.5
  %v3013 = vsel %vm2385, %v3010, %v3012
  %3014 = vrot.lane.b32.xlu0 %v3013, 96
  %v3015 = vpop.permute.xlu0 %3014
  %3016 = vrot.lane.b32.xlu0 %v3013, 64
  %v3017 = vpop.permute.xlu0 %3016
  %3018 = vrot.lane.b32.xlu0 %v3013, 32
  %v3019 = vpop.permute.xlu0 %3018
  %v3020 = vmul.f32 %v3015, %v2776
  %v3021 = vmul.f32 %v3013, %v3017
  %v3022 = vadd.f32 %v3020, %v3021
  %v3023 = vtanh.pop %v3022
  %v3024 = vmul.f32 %v3019, %v3023
  %v3025 = vld [vmem:[#allocation2 + $0x18] sm:$0xff]
  %v3026 = vadd.f32 %v3025, %v2227
  %3027 = vmatprep.subr.mxu0 0.0
  %3028 = vmatpush1.msra.mxu0 %v2404
  %3029 = vmatprep.subr.mxu0 0.0
  %3030 = vmatpush1.msra.mxu0 %v2403
  %3031 = vmatprep.subr.mxu0 0.0
  %3032 = vmatpush1.msra.mxu0 %v2402
  %3033 = vmatprep.subr.mxu0 0.0
  %3034 = vmatpush1.msra.mxu0 %v2401
  %3035 = vmatprep.subr.mxu0 0.0
  %3036 = vmatpush1.msra.mxu0 %v2400
  %3037 = vmatprep.subr.mxu0 0.0
  %3038 = vmatpush1.msra.mxu0 %v2399
  %3039 = vmatprep.subr.mxu0 0.0
  %3040 = vmatpush1.msra.mxu0 %v2398
  %3041 = vmatprep.subr.mxu0 0.0
  %3042 = vmatpush1.msra.mxu0 %v2397
  %3043 = vmatprep.subr.mxu0 0.0
  %3044 = vmatpush1.msra.mxu0 %v2396
  %3045 = vmatprep.subr.mxu0 0.0
  %3046 = vmatpush1.msra.mxu0 %v2395
  %3047 = vmatprep.subr.mxu0 0.0
  %3048 = vmatpush1.msra.mxu0 %v2394
  %3049 = vmatprep.subr.mxu0 0.0
  %3050 = vmatpush1.msra.mxu0 %v2393
  %3051 = vmatprep.subr.mxu0 0.0
  %3052 = vmatpush1.msra.mxu0 %v2392
  %3053 = vmatprep.subr.mxu0 0.0
  %3054 = vmatpush1.msra.mxu0 %v2391
  %3055 = vmatprep.subr.mxu0 0.0
  %3056 = vmatpush1.msra.mxu0 %v2390
  %3057 = vmatprep.subr.mxu0 0.0
  %3058 = vmatpush1.msra.mxu0 %v2389
  %3059 = vmatprep.subr.mxu0 0.0
  %3060 = vmatpush2.msra.mxu0 0.0
  %3061 = vmatprep.subr.mxu0 0.0
  %3062 = vmatpush2.msra.mxu0 0.0
  %3063 = vmatprep.subr.mxu0 0.0
  %3064 = vmatpush2.msra.mxu0 0.0
  %3065 = vmatprep.subr.mxu0 0.0
  %3066 = vmatpush2.msra.mxu0 0.0
  %3067 = vmatprep.subr.mxu0 0.0
  %3068 = vmatpush2.msra.mxu0 0.0
  %3069 = vmatprep.subr.mxu0 0.0
  %3070 = vmatpush2.msra.mxu0 0.0
  %3071 = vmatprep.subr.mxu0 0.0
  %3072 = vmatpush2.msra.mxu0 0.0
  %3073 = vmatprep.subr.mxu0 0.0
  %3074 = vmatpush2.msra.mxu0 0.0
  %3075 = vmatprep.subr.mxu0 0.0
  %3076 = vmatpush2.msra.mxu0 0.0
  %3077 = vmatprep.subr.mxu0 0.0
  %3078 = vmatpush2.msra.mxu0 0.0
  %3079 = vmatprep.subr.mxu0 0.0
  %3080 = vmatpush2.msra.mxu0 0.0
  %3081 = vmatprep.subr.mxu0 0.0
  %3082 = vmatpush2.msra.mxu0 0.0
  %3083 = vmatprep.subr.mxu0 0.0
  %3084 = vmatpush2.msra.mxu0 0.0
  %3085 = vmatprep.subr.mxu0 0.0
  %3086 = vmatpush2.msra.mxu0 0.0
  %3087 = vmatprep.subr.mxu0 0.0
  %3088 = vmatpush2.msra.mxu0 0.0
  %3089 = vmatprep.subr.mxu0 0.0
  %3090 = vmatpush2.msra.mxu0 0.0
  %3091 = vmatprep.mubr.f32.mxu0 0.0
  %3092 = vmatmul.mubr.f32.gmra.mxu0 %v2867
  %v3093 = vpop.f32.mrf.mxu0
  %v3094 = vadd.f32 0.0, %v3093
  %v3095 = vpop.f32.mrf.mxu0
  %3096 = vdwg.mxu0
  %v3097 = vadd.f32 %v3026, %v3094
  %v3098 = vmul.f32 %v3097, %v2386
  %v3099 = vtanh.pop %v3098
  %v3100 = vmul.f32 %v3099, 0.5
  %v3101 = vadd.f32 %v3100, 0.5
  %v3102 = vsel %vm2385, %v3099, %v3101
  %3103 = vrot.lane.b32.xlu0 %v3102, 96
  %v3104 = vpop.permute.xlu0 %3103
  %3105 = vrot.lane.b32.xlu0 %v3102, 64
  %v3106 = vpop.permute.xlu0 %3105
  %3107 = vrot.lane.b32.xlu0 %v3102, 32
  %v3108 = vpop.permute.xlu0 %3107
  %v3109 = vmul.f32 %v3104, %v2865
  %v3110 = vmul.f32 %v3102, %v3106
  %v3111 = vadd.f32 %v3109, %v3110
  %v3112 = vtanh.pop %v3111
  %v3113 = vmul.f32 %v3108, %v3112
  %3114 = vmatprep.subr.mxu0 0.0
  %3115 = vmatpush1.msra.mxu0 %v2613
  %3116 = vmatprep.subr.mxu0 0.0
  %3117 = vmatpush1.msra.mxu0 %v2612
  %3118 = vmatprep.subr.mxu0 0.0
  %3119 = vmatpush1.msra.mxu0 %v2611
  %3120 = vmatprep.subr.mxu0 0.0
  %3121 = vmatpush1.msra.mxu0 %v2610
  %3122 = vmatprep.subr.mxu0 0.0
  %3123 = vmatpush1.msra.mxu0 %v2609
  %3124 = vmatprep.subr.mxu0 0.0
  %3125 = vmatpush1.msra.mxu0 %v2608
  %3126 = vmatprep.subr.mxu0 0.0
  %3127 = vmatpush1.msra.mxu0 %v2607
  %3128 = vmatprep.subr.mxu0 0.0
  %3129 = vmatpush1.msra.mxu0 %v2606
  %3130 = vmatprep.subr.mxu0 0.0
  %3131 = vmatpush1.msra.mxu0 %v2605
  %3132 = vmatprep.subr.mxu0 0.0
  %3133 = vmatpush1.msra.mxu0 %v2604
  %3134 = vmatprep.subr.mxu0 0.0
  %3135 = vmatpush1.msra.mxu0 %v2603
  %3136 = vmatprep.subr.mxu0 0.0
  %3137 = vmatpush1.msra.mxu0 %v2602
  %3138 = vmatprep.subr.mxu0 0.0
  %3139 = vmatpush1.msra.mxu0 %v2601
  %3140 = vmatprep.subr.mxu0 0.0
  %3141 = vmatpush1.msra.mxu0 %v2600
  %3142 = vmatprep.subr.mxu0 0.0
  %3143 = vmatpush1.msra.mxu0 %v2599
  %3144 = vmatprep.subr.mxu0 0.0
  %3145 = vmatpush1.msra.mxu0 %v2598
  %3146 = vmatprep.subr.mxu0 0.0
  %3147 = vmatpush2.msra.mxu0 0.0
  %3148 = vmatprep.subr.mxu0 0.0
  %3149 = vmatpush2.msra.mxu0 0.0
  %3150 = vmatprep.subr.mxu0 0.0
  %3151 = vmatpush2.msra.mxu0 0.0
  %3152 = vmatprep.subr.mxu0 0.0
  %3153 = vmatpush2.msra.mxu0 0.0
  %3154 = vmatprep.subr.mxu0 0.0
  %3155 = vmatpush2.msra.mxu0 0.0
  %3156 = vmatprep.subr.mxu0 0.0
  %3157 = vmatpush2.msra.mxu0 0.0
  %3158 = vmatprep.subr.mxu0 0.0
  %3159 = vmatpush2.msra.mxu0 0.0
  %3160 = vmatprep.subr.mxu0 0.0
  %3161 = vmatpush2.msra.mxu0 0.0
  %3162 = vmatprep.subr.mxu0 0.0
  %3163 = vmatpush2.msra.mxu0 0.0
  %3164 = vmatprep.subr.mxu0 0.0
  %3165 = vmatpush2.msra.mxu0 0.0
  %3166 = vmatprep.subr.mxu0 0.0
  %3167 = vmatpush2.msra.mxu0 0.0
  %3168 = vmatprep.subr.mxu0 0.0
  %3169 = vmatpush2.msra.mxu0 0.0
  %3170 = vmatprep.subr.mxu0 0.0
  %3171 = vmatpush2.msra.mxu0 0.0
  %3172 = vmatprep.subr.mxu0 0.0
  %3173 = vmatpush2.msra.mxu0 0.0
  %3174 = vmatprep.subr.mxu0 0.0
  %3175 = vmatpush2.msra.mxu0 0.0
  %3176 = vmatprep.subr.mxu0 0.0
  %3177 = vmatpush2.msra.mxu0 0.0
  %3178 = vmatprep.mubr.f32.mxu0 0.0
  %3179 = vmatmul.mubr.f32.gmra.mxu0 %v3024
  %v3180 = vpop.f32.mrf.mxu0
  %v3181 = vadd.f32 0.0, %v3180
  %v3182 = vpop.f32.mrf.mxu0
  %3183 = vdwg.mxu0
  %3184 = vmatprep.subr.mxu0 0.0
  %3185 = vmatpush1.msra.mxu0 %v2596
  %3186 = vmatprep.subr.mxu0 0.0
  %3187 = vmatpush1.msra.mxu0 %v2595
  %3188 = vmatprep.subr.mxu0 0.0
  %3189 = vmatpush1.msra.mxu0 %v2594
  %3190 = vmatprep.subr.mxu0 0.0
  %3191 = vmatpush1.msra.mxu0 %v2593
  %3192 = vmatprep.subr.mxu0 0.0
  %3193 = vmatpush1.msra.mxu0 %v2592
  %3194 = vmatprep.subr.mxu0 0.0
  %3195 = vmatpush1.msra.mxu0 %v2591
  %3196 = vmatprep.subr.mxu0 0.0
  %3197 = vmatpush1.msra.mxu0 %v2590
  %3198 = vmatprep.subr.mxu0 0.0
  %3199 = vmatpush1.msra.mxu0 %v2589
  %3200 = vmatprep.subr.mxu0 0.0
  %3201 = vmatpush1.msra.mxu0 %v2588
  %3202 = vmatprep.subr.mxu0 0.0
  %3203 = vmatpush1.msra.mxu0 %v2587
  %3204 = vmatprep.subr.mxu0 0.0
  %3205 = vmatpush1.msra.mxu0 %v2586
  %3206 = vmatprep.subr.mxu0 0.0
  %3207 = vmatpush1.msra.mxu0 %v2585
  %3208 = vmatprep.subr.mxu0 0.0
  %3209 = vmatpush1.msra.mxu0 %v2584
  %3210 = vmatprep.subr.mxu0 0.0
  %3211 = vmatpush1.msra.mxu0 %v2583
  %3212 = vmatprep.subr.mxu0 0.0
  %3213 = vmatpush1.msra.mxu0 %v2582
  %3214 = vmatprep.subr.mxu0 0.0
  %3215 = vmatpush1.msra.mxu0 %v2581
  %3216 = vmatprep.subr.mxu0 0.0
  %3217 = vmatpush2.msra.mxu0 0.0
  %3218 = vmatprep.subr.mxu0 0.0
  %3219 = vmatpush2.msra.mxu0 0.0
  %3220 = vmatprep.subr.mxu0 0.0
  %3221 = vmatpush2.msra.mxu0 0.0
  %3222 = vmatprep.subr.mxu0 0.0
  %3223 = vmatpush2.msra.mxu0 0.0
  %3224 = vmatprep.subr.mxu0 0.0
  %3225 = vmatpush2.msra.mxu0 0.0
  %3226 = vmatprep.subr.mxu0 0.0
  %3227 = vmatpush2.msra.mxu0 0.0
  %3228 = vmatprep.subr.mxu0 0.0
  %3229 = vmatpush2.msra.mxu0 0.0
  %3230 = vmatprep.subr.mxu0 0.0
  %3231 = vmatpush2.msra.mxu0 0.0
  %3232 = vmatprep.subr.mxu0 0.0
  %3233 = vmatpush2.msra.mxu0 0.0
  %3234 = vmatprep.subr.mxu0 0.0
  %3235 = vmatpush2.msra.mxu0 0.0
  %3236 = vmatprep.subr.mxu0 0.0
  %3237 = vmatpush2.msra.mxu0 0.0
  %3238 = vmatprep.subr.mxu0 0.0
  %3239 = vmatpush2.msra.mxu0 0.0
  %3240 = vmatprep.subr.mxu0 0.0
  %3241 = vmatpush2.msra.mxu0 0.0
  %3242 = vmatprep.subr.mxu0 0.0
  %3243 = vmatpush2.msra.mxu0 0.0
  %3244 = vmatprep.subr.mxu0 0.0
  %3245 = vmatpush2.msra.mxu0 0.0
  %3246 = vmatprep.subr.mxu0 0.0
  %3247 = vmatpush2.msra.mxu0 0.0
  %3248 = vmatprep.mubr.f32.mxu0 0.0
  %3249 = vmatmul.mubr.f32.gmra.mxu0 %v2867
  %v3250 = vpop.f32.mrf.mxu0
  %v3251 = vadd.f32 %v3181, %v3250
  %v3252 = vpop.f32.mrf.mxu0
  %3253 = vdwg.mxu0
  %v3254 = vadd.f32 %v3251, %v2760
  %v3255 = vmul.f32 %v3254, %v2386
  %v3256 = vtanh.pop %v3255
  %v3257 = vmul.f32 %v3256, 0.5
  %v3258 = vadd.f32 %v3257, 0.5
  %v3259 = vsel %vm2385, %v3256, %v3258
  %3260 = vrot.lane.b32.xlu0 %v3259, 96
  %v3261 = vpop.permute.xlu0 %3260
  %3262 = vrot.lane.b32.xlu0 %v3259, 64
  %v3263 = vpop.permute.xlu0 %3262
  %3264 = vrot.lane.b32.xlu0 %v3259, 32
  %v3265 = vpop.permute.xlu0 %3264
  %v3266 = vmul.f32 %v3261, %v3022
  %v3267 = vmul.f32 %v3259, %v3263
  %v3268 = vadd.f32 %v3266, %v3267
  %v3269 = vtanh.pop %v3268
  %v3270 = vmul.f32 %v3265, %v3269
  %v3271 = vld [vmem:[#allocation2 + $0x20] sm:$0xff]
  %v3272 = vadd.f32 %v3271, %v2227
  %3273 = vmatprep.subr.mxu0 0.0
  %3274 = vmatpush1.msra.mxu0 %v2404
  %3275 = vmatprep.subr.mxu0 0.0
  %3276 = vmatpush1.msra.mxu0 %v2403
  %3277 = vmatprep.subr.mxu0 0.0
  %3278 = vmatpush1.msra.mxu0 %v2402
  %3279 = vmatprep.subr.mxu0 0.0
  %3280 = vmatpush1.msra.mxu0 %v2401
  %3281 = vmatprep.subr.mxu0 0.0
  %3282 = vmatpush1.msra.mxu0 %v2400
  %3283 = vmatprep.subr.mxu0 0.0
  %3284 = vmatpush1.msra.mxu0 %v2399
  %3285 = vmatprep.subr.mxu0 0.0
  %3286 = vmatpush1.msra.mxu0 %v2398
  %3287 = vmatprep.subr.mxu0 0.0
  %3288 = vmatpush1.msra.mxu0 %v2397
  %3289 = vmatprep.subr.mxu0 0.0
  %3290 = vmatpush1.msra.mxu0 %v2396
  %3291 = vmatprep.subr.mxu0 0.0
  %3292 = vmatpush1.msra.mxu0 %v2395
  %3293 = vmatprep.subr.mxu0 0.0
  %3294 = vmatpush1.msra.mxu0 %v2394
  %3295 = vmatprep.subr.mxu0 0.0
  %3296 = vmatpush1.msra.mxu0 %v2393
  %3297 = vmatprep.subr.mxu0 0.0
  %3298 = vmatpush1.msra.mxu0 %v2392
  %3299 = vmatprep.subr.mxu0 0.0
  %3300 = vmatpush1.msra.mxu0 %v2391
  %3301 = vmatprep.subr.mxu0 0.0
  %3302 = vmatpush1.msra.mxu0 %v2390
  %3303 = vmatprep.subr.mxu0 0.0
  %3304 = vmatpush1.msra.mxu0 %v2389
  %3305 = vmatprep.subr.mxu0 0.0
  %3306 = vmatpush2.msra.mxu0 0.0
  %3307 = vmatprep.subr.mxu0 0.0
  %3308 = vmatpush2.msra.mxu0 0.0
  %3309 = vmatprep.subr.mxu0 0.0
  %3310 = vmatpush2.msra.mxu0 0.0
  %3311 = vmatprep.subr.mxu0 0.0
  %3312 = vmatpush2.msra.mxu0 0.0
  %3313 = vmatprep.subr.mxu0 0.0
  %3314 = vmatpush2.msra.mxu0 0.0
  %3315 = vmatprep.subr.mxu0 0.0
  %3316 = vmatpush2.msra.mxu0 0.0
  %3317 = vmatprep.subr.mxu0 0.0
  %3318 = vmatpush2.msra.mxu0 0.0
  %3319 = vmatprep.subr.mxu0 0.0
  %3320 = vmatpush2.msra.mxu0 0.0
  %3321 = vmatprep.subr.mxu0 0.0
  %3322 = vmatpush2.msra.mxu0 0.0
  %3323 = vmatprep.subr.mxu0 0.0
  %3324 = vmatpush2.msra.mxu0 0.0
  %3325 = vmatprep.subr.mxu0 0.0
  %3326 = vmatpush2.msra.mxu0 0.0
  %3327 = vmatprep.subr.mxu0 0.0
  %3328 = vmatpush2.msra.mxu0 0.0
  %3329 = vmatprep.subr.mxu0 0.0
  %3330 = vmatpush2.msra.mxu0 0.0
  %3331 = vmatprep.subr.mxu0 0.0
  %3332 = vmatpush2.msra.mxu0 0.0
  %3333 = vmatprep.subr.mxu0 0.0
  %3334 = vmatpush2.msra.mxu0 0.0
  %3335 = vmatprep.subr.mxu0 0.0
  %3336 = vmatpush2.msra.mxu0 0.0
  %3337 = vmatprep.mubr.f32.mxu0 0.0
  %3338 = vmatmul.mubr.f32.gmra.mxu0 %v3113
  %v3339 = vpop.f32.mrf.mxu0
  %v3340 = vadd.f32 0.0, %v3339
  %v3341 = vpop.f32.mrf.mxu0
  %3342 = vdwg.mxu0
  %v3343 = vadd.f32 %v3272, %v3340
  %v3344 = vmul.f32 %v3343, %v2386
  %v3345 = vtanh.pop %v3344
  %v3346 = vmul.f32 %v3345, 0.5
  %v3347 = vadd.f32 %v3346, 0.5
  %v3348 = vsel %vm2385, %v3345, %v3347
  %3349 = vrot.lane.b32.xlu0 %v3348, 96
  %v3350 = vpop.permute.xlu0 %3349
  %3351 = vrot.lane.b32.xlu0 %v3348, 64
  %v3352 = vpop.permute.xlu0 %3351
  %3353 = vrot.lane.b32.xlu0 %v3348, 32
  %v3354 = vpop.permute.xlu0 %3353
  %v3355 = vmul.f32 %v3350, %v3111
  %v3356 = vmul.f32 %v3348, %v3352
  %v3357 = vadd.f32 %v3355, %v3356
  %v3358 = vtanh.pop %v3357
  %v3359 = vmul.f32 %v3354, %v3358
  %3360 = vmatprep.subr.mxu0 0.0
  %3361 = vmatpush1.msra.mxu0 %v2613
  %3362 = vmatprep.subr.mxu0 0.0
  %3363 = vmatpush1.msra.mxu0 %v2612
  %3364 = vmatprep.subr.mxu0 0.0
  %3365 = vmatpush1.msra.mxu0 %v2611
  %3366 = vmatprep.subr.mxu0 0.0
  %3367 = vmatpush1.msra.mxu0 %v2610
  %3368 = vmatprep.subr.mxu0 0.0
  %3369 = vmatpush1.msra.mxu0 %v2609
  %3370 = vmatprep.subr.mxu0 0.0
  %3371 = vmatpush1.msra.mxu0 %v2608
  %3372 = vmatprep.subr.mxu0 0.0
  %3373 = vmatpush1.msra.mxu0 %v2607
  %3374 = vmatprep.subr.mxu0 0.0
  %3375 = vmatpush1.msra.mxu0 %v2606
  %3376 = vmatprep.subr.mxu0 0.0
  %3377 = vmatpush1.msra.mxu0 %v2605
  %3378 = vmatprep.subr.mxu0 0.0
  %3379 = vmatpush1.msra.mxu0 %v2604
  %3380 = vmatprep.subr.mxu0 0.0
  %3381 = vmatpush1.msra.mxu0 %v2603
  %3382 = vmatprep.subr.mxu0 0.0
  %3383 = vmatpush1.msra.mxu0 %v2602
  %3384 = vmatprep.subr.mxu0 0.0
  %3385 = vmatpush1.msra.mxu0 %v2601
  %3386 = vmatprep.subr.mxu0 0.0
  %3387 = vmatpush1.msra.mxu0 %v2600
  %3388 = vmatprep.subr.mxu0 0.0
  %3389 = vmatpush1.msra.mxu0 %v2599
  %3390 = vmatprep.subr.mxu0 0.0
  %3391 = vmatpush1.msra.mxu0 %v2598
  %3392 = vmatprep.subr.mxu0 0.0
  %3393 = vmatpush2.msra.mxu0 0.0
  %3394 = vmatprep.subr.mxu0 0.0
  %3395 = vmatpush2.msra.mxu0 0.0
  %3396 = vmatprep.subr.mxu0 0.0
  %3397 = vmatpush2.msra.mxu0 0.0
  %3398 = vmatprep.subr.mxu0 0.0
  %3399 = vmatpush2.msra.mxu0 0.0
  %3400 = vmatprep.subr.mxu0 0.0
  %3401 = vmatpush2.msra.mxu0 0.0
  %3402 = vmatprep.subr.mxu0 0.0
  %3403 = vmatpush2.msra.mxu0 0.0
  %3404 = vmatprep.subr.mxu0 0.0
  %3405 = vmatpush2.msra.mxu0 0.0
  %3406 = vmatprep.subr.mxu0 0.0
  %3407 = vmatpush2.msra.mxu0 0.0
  %3408 = vmatprep.subr.mxu0 0.0
  %3409 = vmatpush2.msra.mxu0 0.0
  %3410 = vmatprep.subr.mxu0 0.0
  %3411 = vmatpush2.msra.mxu0 0.0
  %3412 = vmatprep.subr.mxu0 0.0
  %3413 = vmatpush2.msra.mxu0 0.0
  %3414 = vmatprep.subr.mxu0 0.0
  %3415 = vmatpush2.msra.mxu0 0.0
  %3416 = vmatprep.subr.mxu0 0.0
  %3417 = vmatpush2.msra.mxu0 0.0
  %3418 = vmatprep.subr.mxu0 0.0
  %3419 = vmatpush2.msra.mxu0 0.0
  %3420 = vmatprep.subr.mxu0 0.0
  %3421 = vmatpush2.msra.mxu0 0.0
  %3422 = vmatprep.subr.mxu0 0.0
  %3423 = vmatpush2.msra.mxu0 0.0
  %3424 = vmatprep.mubr.f32.mxu0 0.0
  %3425 = vmatmul.mubr.f32.gmra.mxu0 %v3270
  %v3426 = vpop.f32.mrf.mxu0
  %v3427 = vadd.f32 0.0, %v3426
  %v3428 = vpop.f32.mrf.mxu0
  %3429 = vdwg.mxu0
  %3430 = vmatprep.subr.mxu0 0.0
  %3431 = vmatpush1.msra.mxu0 %v2596
  %3432 = vmatprep.subr.mxu0 0.0
  %3433 = vmatpush1.msra.mxu0 %v2595
  %3434 = vmatprep.subr.mxu0 0.0
  %3435 = vmatpush1.msra.mxu0 %v2594
  %3436 = vmatprep.subr.mxu0 0.0
  %3437 = vmatpush1.msra.mxu0 %v2593
  %3438 = vmatprep.subr.mxu0 0.0
  %3439 = vmatpush1.msra.mxu0 %v2592
  %3440 = vmatprep.subr.mxu0 0.0
  %3441 = vmatpush1.msra.mxu0 %v2591
  %3442 = vmatprep.subr.mxu0 0.0
  %3443 = vmatpush1.msra.mxu0 %v2590
  %3444 = vmatprep.subr.mxu0 0.0
  %3445 = vmatpush1.msra.mxu0 %v2589
  %3446 = vmatprep.subr.mxu0 0.0
  %3447 = vmatpush1.msra.mxu0 %v2588
  %3448 = vmatprep.subr.mxu0 0.0
  %3449 = vmatpush1.msra.mxu0 %v2587
  %3450 = vmatprep.subr.mxu0 0.0
  %3451 = vmatpush1.msra.mxu0 %v2586
  %3452 = vmatprep.subr.mxu0 0.0
  %3453 = vmatpush1.msra.mxu0 %v2585
  %3454 = vmatprep.subr.mxu0 0.0
  %3455 = vmatpush1.msra.mxu0 %v2584
  %3456 = vmatprep.subr.mxu0 0.0
  %3457 = vmatpush1.msra.mxu0 %v2583
  %3458 = vmatprep.subr.mxu0 0.0
  %3459 = vmatpush1.msra.mxu0 %v2582
  %3460 = vmatprep.subr.mxu0 0.0
  %3461 = vmatpush1.msra.mxu0 %v2581
  %3462 = vmatprep.subr.mxu0 0.0
  %3463 = vmatpush2.msra.mxu0 0.0
  %3464 = vmatprep.subr.mxu0 0.0
  %3465 = vmatpush2.msra.mxu0 0.0
  %3466 = vmatprep.subr.mxu0 0.0
  %3467 = vmatpush2.msra.mxu0 0.0
  %3468 = vmatprep.subr.mxu0 0.0
  %3469 = vmatpush2.msra.mxu0 0.0
  %3470 = vmatprep.subr.mxu0 0.0
  %3471 = vmatpush2.msra.mxu0 0.0
  %3472 = vmatprep.subr.mxu0 0.0
  %3473 = vmatpush2.msra.mxu0 0.0
  %3474 = vmatprep.subr.mxu0 0.0
  %3475 = vmatpush2.msra.mxu0 0.0
  %3476 = vmatprep.subr.mxu0 0.0
  %3477 = vmatpush2.msra.mxu0 0.0
  %3478 = vmatprep.subr.mxu0 0.0
  %3479 = vmatpush2.msra.mxu0 0.0
  %3480 = vmatprep.subr.mxu0 0.0
  %3481 = vmatpush2.msra.mxu0 0.0
  %3482 = vmatprep.subr.mxu0 0.0
  %3483 = vmatpush2.msra.mxu0 0.0
  %3484 = vmatprep.subr.mxu0 0.0
  %3485 = vmatpush2.msra.mxu0 0.0
  %3486 = vmatprep.subr.mxu0 0.0
  %3487 = vmatpush2.msra.mxu0 0.0
  %3488 = vmatprep.subr.mxu0 0.0
  %3489 = vmatpush2.msra.mxu0 0.0
  %3490 = vmatprep.subr.mxu0 0.0
  %3491 = vmatpush2.msra.mxu0 0.0
  %3492 = vmatprep.subr.mxu0 0.0
  %3493 = vmatpush2.msra.mxu0 0.0
  %3494 = vmatprep.mubr.f32.mxu0 0.0
  %3495 = vmatmul.mubr.f32.gmra.mxu0 %v3113
  %v3496 = vpop.f32.mrf.mxu0
  %v3497 = vadd.f32 %v3427, %v3496
  %v3498 = vpop.f32.mrf.mxu0
  %3499 = vdwg.mxu0
  %v3500 = vadd.f32 %v3497, %v2760
  %v3501 = vmul.f32 %v3500, %v2386
  %v3502 = vtanh.pop %v3501
  %v3503 = vmul.f32 %v3502, 0.5
  %v3504 = vadd.f32 %v3503, 0.5
  %v3505 = vsel %vm2385, %v3502, %v3504
  %3506 = vrot.lane.b32.xlu0 %v3505, 96
  %v3507 = vpop.permute.xlu0 %3506
  %3508 = vrot.lane.b32.xlu0 %v3505, 64
  %v3509 = vpop.permute.xlu0 %3508
  %3510 = vrot.lane.b32.xlu0 %v3505, 32
  %v3511 = vpop.permute.xlu0 %3510
  %v3512 = vmul.f32 %v3507, %v3268
  %v3513 = vmul.f32 %v3505, %v3509
  %v3514 = vadd.f32 %v3512, %v3513
  %v3515 = vtanh.pop %v3514
  %v3516 = vmul.f32 %v3511, %v3515
  %v3517 = vld [vmem:[#allocation2 + $0x28] sm:$0xff]
  %v3518 = vadd.f32 %v3517, %v2227
  %3519 = vmatprep.subr.mxu0 0.0
  %3520 = vmatpush1.msra.mxu0 %v2404
  %3521 = vmatprep.subr.mxu0 0.0
  %3522 = vmatpush1.msra.mxu0 %v2403
  %3523 = vmatprep.subr.mxu0 0.0
  %3524 = vmatpush1.msra.mxu0 %v2402
  %3525 = vmatprep.subr.mxu0 0.0
  %3526 = vmatpush1.msra.mxu0 %v2401
  %3527 = vmatprep.subr.mxu0 0.0
  %3528 = vmatpush1.msra.mxu0 %v2400
  %3529 = vmatprep.subr.mxu0 0.0
  %3530 = vmatpush1.msra.mxu0 %v2399
  %3531 = vmatprep.subr.mxu0 0.0
  %3532 = vmatpush1.msra.mxu0 %v2398
  %3533 = vmatprep.subr.mxu0 0.0
  %3534 = vmatpush1.msra.mxu0 %v2397
  %3535 = vmatprep.subr.mxu0 0.0
  %3536 = vmatpush1.msra.mxu0 %v2396
  %3537 = vmatprep.subr.mxu0 0.0
  %3538 = vmatpush1.msra.mxu0 %v2395
  %3539 = vmatprep.subr.mxu0 0.0
  %3540 = vmatpush1.msra.mxu0 %v2394
  %3541 = vmatprep.subr.mxu0 0.0
  %3542 = vmatpush1.msra.mxu0 %v2393
  %3543 = vmatprep.subr.mxu0 0.0
  %3544 = vmatpush1.msra.mxu0 %v2392
  %3545 = vmatprep.subr.mxu0 0.0
  %3546 = vmatpush1.msra.mxu0 %v2391
  %3547 = vmatprep.subr.mxu0 0.0
  %3548 = vmatpush1.msra.mxu0 %v2390
  %3549 = vmatprep.subr.mxu0 0.0
  %3550 = vmatpush1.msra.mxu0 %v2389
  %3551 = vmatprep.subr.mxu0 0.0
  %3552 = vmatpush2.msra.mxu0 0.0
  %3553 = vmatprep.subr.mxu0 0.0
  %3554 = vmatpush2.msra.mxu0 0.0
  %3555 = vmatprep.subr.mxu0 0.0
  %3556 = vmatpush2.msra.mxu0 0.0
  %3557 = vmatprep.subr.mxu0 0.0
  %3558 = vmatpush2.msra.mxu0 0.0
  %3559 = vmatprep.subr.mxu0 0.0
  %3560 = vmatpush2.msra.mxu0 0.0
  %3561 = vmatprep.subr.mxu0 0.0
  %3562 = vmatpush2.msra.mxu0 0.0
  %3563 = vmatprep.subr.mxu0 0.0
  %3564 = vmatpush2.msra.mxu0 0.0
  %3565 = vmatprep.subr.mxu0 0.0
  %3566 = vmatpush2.msra.mxu0 0.0
  %3567 = vmatprep.subr.mxu0 0.0
  %3568 = vmatpush2.msra.mxu0 0.0
  %3569 = vmatprep.subr.mxu0 0.0
  %3570 = vmatpush2.msra.mxu0 0.0
  %3571 = vmatprep.subr.mxu0 0.0
  %3572 = vmatpush2.msra.mxu0 0.0
  %3573 = vmatprep.subr.mxu0 0.0
  %3574 = vmatpush2.msra.mxu0 0.0
  %3575 = vmatprep.subr.mxu0 0.0
  %3576 = vmatpush2.msra.mxu0 0.0
  %3577 = vmatprep.subr.mxu0 0.0
  %3578 = vmatpush2.msra.mxu0 0.0
  %3579 = vmatprep.subr.mxu0 0.0
  %3580 = vmatpush2.msra.mxu0 0.0
  %3581 = vmatprep.subr.mxu0 0.0
  %3582 = vmatpush2.msra.mxu0 0.0
  %3583 = vmatprep.mubr.f32.mxu0 0.0
  %3584 = vmatmul.mubr.f32.gmra.mxu0 %v3359
  %v3585 = vpop.f32.mrf.mxu0
  %v3586 = vadd.f32 0.0, %v3585
  %v3587 = vpop.f32.mrf.mxu0
  %3588 = vdwg.mxu0
  %v3589 = vadd.f32 %v3518, %v3586
  %v3590 = vmul.f32 %v3589, %v2386
  %v3591 = vtanh.pop %v3590
  %v3592 = vmul.f32 %v3591, 0.5
  %v3593 = vadd.f32 %v3592, 0.5
  %v3594 = vsel %vm2385, %v3591, %v3593
  %3595 = vrot.lane.b32.xlu0 %v3594, 96
  %v3596 = vpop.permute.xlu0 %3595
  %3597 = vrot.lane.b32.xlu0 %v3594, 64
  %v3598 = vpop.permute.xlu0 %3597
  %3599 = vrot.lane.b32.xlu0 %v3594, 32
  %v3600 = vpop.permute.xlu0 %3599
  %v3601 = vmul.f32 %v3596, %v3357
  %v3602 = vmul.f32 %v3594, %v3598
  %v3603 = vadd.f32 %v3601, %v3602
  %v3604 = vtanh.pop %v3603
  %v3605 = vmul.f32 %v3600, %v3604
  %3606 = vmatprep.subr.mxu0 0.0
  %3607 = vmatpush1.msra.mxu0 %v2613
  %3608 = vmatprep.subr.mxu0 0.0
  %3609 = vmatpush1.msra.mxu0 %v2612
  %3610 = vmatprep.subr.mxu0 0.0
  %3611 = vmatpush1.msra.mxu0 %v2611
  %3612 = vmatprep.subr.mxu0 0.0
  %3613 = vmatpush1.msra.mxu0 %v2610
  %3614 = vmatprep.subr.mxu0 0.0
  %3615 = vmatpush1.msra.mxu0 %v2609
  %3616 = vmatprep.subr.mxu0 0.0
  %3617 = vmatpush1.msra.mxu0 %v2608
  %3618 = vmatprep.subr.mxu0 0.0
  %3619 = vmatpush1.msra.mxu0 %v2607
  %3620 = vmatprep.subr.mxu0 0.0
  %3621 = vmatpush1.msra.mxu0 %v2606
  %3622 = vmatprep.subr.mxu0 0.0
  %3623 = vmatpush1.msra.mxu0 %v2605
  %3624 = vmatprep.subr.mxu0 0.0
  %3625 = vmatpush1.msra.mxu0 %v2604
  %3626 = vmatprep.subr.mxu0 0.0
  %3627 = vmatpush1.msra.mxu0 %v2603
  %3628 = vmatprep.subr.mxu0 0.0
  %3629 = vmatpush1.msra.mxu0 %v2602
  %3630 = vmatprep.subr.mxu0 0.0
  %3631 = vmatpush1.msra.mxu0 %v2601
  %3632 = vmatprep.subr.mxu0 0.0
  %3633 = vmatpush1.msra.mxu0 %v2600
  %3634 = vmatprep.subr.mxu0 0.0
  %3635 = vmatpush1.msra.mxu0 %v2599
  %3636 = vmatprep.subr.mxu0 0.0
  %3637 = vmatpush1.msra.mxu0 %v2598
  %3638 = vmatprep.subr.mxu0 0.0
  %3639 = vmatpush2.msra.mxu0 0.0
  %3640 = vmatprep.subr.mxu0 0.0
  %3641 = vmatpush2.msra.mxu0 0.0
  %3642 = vmatprep.subr.mxu0 0.0
  %3643 = vmatpush2.msra.mxu0 0.0
  %3644 = vmatprep.subr.mxu0 0.0
  %3645 = vmatpush2.msra.mxu0 0.0
  %3646 = vmatprep.subr.mxu0 0.0
  %3647 = vmatpush2.msra.mxu0 0.0
  %3648 = vmatprep.subr.mxu0 0.0
  %3649 = vmatpush2.msra.mxu0 0.0
  %3650 = vmatprep.subr.mxu0 0.0
  %3651 = vmatpush2.msra.mxu0 0.0
  %3652 = vmatprep.subr.mxu0 0.0
  %3653 = vmatpush2.msra.mxu0 0.0
  %3654 = vmatprep.subr.mxu0 0.0
  %3655 = vmatpush2.msra.mxu0 0.0
  %3656 = vmatprep.subr.mxu0 0.0
  %3657 = vmatpush2.msra.mxu0 0.0
  %3658 = vmatprep.subr.mxu0 0.0
  %3659 = vmatpush2.msra.mxu0 0.0
  %3660 = vmatprep.subr.mxu0 0.0
  %3661 = vmatpush2.msra.mxu0 0.0
  %3662 = vmatprep.subr.mxu0 0.0
  %3663 = vmatpush2.msra.mxu0 0.0
  %3664 = vmatprep.subr.mxu0 0.0
  %3665 = vmatpush2.msra.mxu0 0.0
  %3666 = vmatprep.subr.mxu0 0.0
  %3667 = vmatpush2.msra.mxu0 0.0
  %3668 = vmatprep.subr.mxu0 0.0
  %3669 = vmatpush2.msra.mxu0 0.0
  %3670 = vmatprep.mubr.f32.mxu0 0.0
  %3671 = vmatmul.mubr.f32.gmra.mxu0 %v3516
  %v3672 = vpop.f32.mrf.mxu0
  %v3673 = vadd.f32 0.0, %v3672
  %v3674 = vpop.f32.mrf.mxu0
  %3675 = vdwg.mxu0
  %3676 = vmatprep.subr.mxu0 0.0
  %3677 = vmatpush1.msra.mxu0 %v2596
  %3678 = vmatprep.subr.mxu0 0.0
  %3679 = vmatpush1.msra.mxu0 %v2595
  %3680 = vmatprep.subr.mxu0 0.0
  %3681 = vmatpush1.msra.mxu0 %v2594
  %3682 = vmatprep.subr.mxu0 0.0
  %3683 = vmatpush1.msra.mxu0 %v2593
  %3684 = vmatprep.subr.mxu0 0.0
  %3685 = vmatpush1.msra.mxu0 %v2592
  %3686 = vmatprep.subr.mxu0 0.0
  %3687 = vmatpush1.msra.mxu0 %v2591
  %3688 = vmatprep.subr.mxu0 0.0
  %3689 = vmatpush1.msra.mxu0 %v2590
  %3690 = vmatprep.subr.mxu0 0.0
  %3691 = vmatpush1.msra.mxu0 %v2589
  %3692 = vmatprep.subr.mxu0 0.0
  %3693 = vmatpush1.msra.mxu0 %v2588
  %3694 = vmatprep.subr.mxu0 0.0
  %3695 = vmatpush1.msra.mxu0 %v2587
  %3696 = vmatprep.subr.mxu0 0.0
  %3697 = vmatpush1.msra.mxu0 %v2586
  %3698 = vmatprep.subr.mxu0 0.0
  %3699 = vmatpush1.msra.mxu0 %v2585
  %3700 = vmatprep.subr.mxu0 0.0
  %3701 = vmatpush1.msra.mxu0 %v2584
  %3702 = vmatprep.subr.mxu0 0.0
  %3703 = vmatpush1.msra.mxu0 %v2583
  %3704 = vmatprep.subr.mxu0 0.0
  %3705 = vmatpush1.msra.mxu0 %v2582
  %3706 = vmatprep.subr.mxu0 0.0
  %3707 = vmatpush1.msra.mxu0 %v2581
  %3708 = vmatprep.subr.mxu0 0.0
  %3709 = vmatpush2.msra.mxu0 0.0
  %3710 = vmatprep.subr.mxu0 0.0
  %3711 = vmatpush2.msra.mxu0 0.0
  %3712 = vmatprep.subr.mxu0 0.0
  %3713 = vmatpush2.msra.mxu0 0.0
  %3714 = vmatprep.subr.mxu0 0.0
  %3715 = vmatpush2.msra.mxu0 0.0
  %3716 = vmatprep.subr.mxu0 0.0
  %3717 = vmatpush2.msra.mxu0 0.0
  %3718 = vmatprep.subr.mxu0 0.0
  %3719 = vmatpush2.msra.mxu0 0.0
  %3720 = vmatprep.subr.mxu0 0.0
  %3721 = vmatpush2.msra.mxu0 0.0
  %3722 = vmatprep.subr.mxu0 0.0
  %3723 = vmatpush2.msra.mxu0 0.0
  %3724 = vmatprep.subr.mxu0 0.0
  %3725 = vmatpush2.msra.mxu0 0.0
  %3726 = vmatprep.subr.mxu0 0.0
  %3727 = vmatpush2.msra.mxu0 0.0
  %3728 = vmatprep.subr.mxu0 0.0
  %3729 = vmatpush2.msra.mxu0 0.0
  %3730 = vmatprep.subr.mxu0 0.0
  %3731 = vmatpush2.msra.mxu0 0.0
  %3732 = vmatprep.subr.mxu0 0.0
  %3733 = vmatpush2.msra.mxu0 0.0
  %3734 = vmatprep.subr.mxu0 0.0
  %3735 = vmatpush2.msra.mxu0 0.0
  %3736 = vmatprep.subr.mxu0 0.0
  %3737 = vmatpush2.msra.mxu0 0.0
  %3738 = vmatprep.subr.mxu0 0.0
  %3739 = vmatpush2.msra.mxu0 0.0
  %3740 = vmatprep.mubr.f32.mxu0 0.0
  %3741 = vmatmul.mubr.f32.gmra.mxu0 %v3359
  %v3742 = vpop.f32.mrf.mxu0
  %v3743 = vadd.f32 %v3673, %v3742
  %v3744 = vpop.f32.mrf.mxu0
  %3745 = vdwg.mxu0
  %v3746 = vadd.f32 %v3743, %v2760
  %v3747 = vmul.f32 %v3746, %v2386
  %v3748 = vtanh.pop %v3747
  %v3749 = vmul.f32 %v3748, 0.5
  %v3750 = vadd.f32 %v3749, 0.5
  %v3751 = vsel %vm2385, %v3748, %v3750
  %3752 = vrot.lane.b32.xlu0 %v3751, 96
  %v3753 = vpop.permute.xlu0 %3752
  %3754 = vrot.lane.b32.xlu0 %v3751, 64
  %v3755 = vpop.permute.xlu0 %3754
  %3756 = vrot.lane.b32.xlu0 %v3751, 32
  %v3757 = vpop.permute.xlu0 %3756
  %v3758 = vmul.f32 %v3753, %v3514
  %v3759 = vmul.f32 %v3751, %v3755
  %v3760 = vadd.f32 %v3758, %v3759
  %v3761 = vtanh.pop %v3760
  %v3762 = vmul.f32 %v3757, %v3761
  %v3763 = vld [vmem:[#allocation2 + $0x30] sm:$0xff]
  %v3764 = vadd.f32 %v3763, %v2227
  %3765 = vmatprep.subr.mxu0 0.0
  %3766 = vmatpush1.msra.mxu0 %v2404
  %3767 = vmatprep.subr.mxu0 0.0
  %3768 = vmatpush1.msra.mxu0 %v2403
  %3769 = vmatprep.subr.mxu0 0.0
  %3770 = vmatpush1.msra.mxu0 %v2402
  %3771 = vmatprep.subr.mxu0 0.0
  %3772 = vmatpush1.msra.mxu0 %v2401
  %3773 = vmatprep.subr.mxu0 0.0
  %3774 = vmatpush1.msra.mxu0 %v2400
  %3775 = vmatprep.subr.mxu0 0.0
  %3776 = vmatpush1.msra.mxu0 %v2399
  %3777 = vmatprep.subr.mxu0 0.0
  %3778 = vmatpush1.msra.mxu0 %v2398
  %3779 = vmatprep.subr.mxu0 0.0
  %3780 = vmatpush1.msra.mxu0 %v2397
  %3781 = vmatprep.subr.mxu0 0.0
  %3782 = vmatpush1.msra.mxu0 %v2396
  %3783 = vmatprep.subr.mxu0 0.0
  %3784 = vmatpush1.msra.mxu0 %v2395
  %3785 = vmatprep.subr.mxu0 0.0
  %3786 = vmatpush1.msra.mxu0 %v2394
  %3787 = vmatprep.subr.mxu0 0.0
  %3788 = vmatpush1.msra.mxu0 %v2393
  %3789 = vmatprep.subr.mxu0 0.0
  %3790 = vmatpush1.msra.mxu0 %v2392
  %3791 = vmatprep.subr.mxu0 0.0
  %3792 = vmatpush1.msra.mxu0 %v2391
  %3793 = vmatprep.subr.mxu0 0.0
  %3794 = vmatpush1.msra.mxu0 %v2390
  %3795 = vmatprep.subr.mxu0 0.0
  %3796 = vmatpush1.msra.mxu0 %v2389
  %3797 = vmatprep.subr.mxu0 0.0
  %3798 = vmatpush2.msra.mxu0 0.0
  %3799 = vmatprep.subr.mxu0 0.0
  %3800 = vmatpush2.msra.mxu0 0.0
  %3801 = vmatprep.subr.mxu0 0.0
  %3802 = vmatpush2.msra.mxu0 0.0
  %3803 = vmatprep.subr.mxu0 0.0
  %3804 = vmatpush2.msra.mxu0 0.0
  %3805 = vmatprep.subr.mxu0 0.0
  %3806 = vmatpush2.msra.mxu0 0.0
  %3807 = vmatprep.subr.mxu0 0.0
  %3808 = vmatpush2.msra.mxu0 0.0
  %3809 = vmatprep.subr.mxu0 0.0
  %3810 = vmatpush2.msra.mxu0 0.0
  %3811 = vmatprep.subr.mxu0 0.0
  %3812 = vmatpush2.msra.mxu0 0.0
  %3813 = vmatprep.subr.mxu0 0.0
  %3814 = vmatpush2.msra.mxu0 0.0
  %3815 = vmatprep.subr.mxu0 0.0
  %3816 = vmatpush2.msra.mxu0 0.0
  %3817 = vmatprep.subr.mxu0 0.0
  %3818 = vmatpush2.msra.mxu0 0.0
  %3819 = vmatprep.subr.mxu0 0.0
  %3820 = vmatpush2.msra.mxu0 0.0
  %3821 = vmatprep.subr.mxu0 0.0
  %3822 = vmatpush2.msra.mxu0 0.0
  %3823 = vmatprep.subr.mxu0 0.0
  %3824 = vmatpush2.msra.mxu0 0.0
  %3825 = vmatprep.subr.mxu0 0.0
  %3826 = vmatpush2.msra.mxu0 0.0
  %3827 = vmatprep.subr.mxu0 0.0
  %3828 = vmatpush2.msra.mxu0 0.0
  %3829 = vmatprep.mubr.f32.mxu0 0.0
  %3830 = vmatmul.mubr.f32.gmra.mxu0 %v3605
  %v3831 = vpop.f32.mrf.mxu0
  %v3832 = vadd.f32 0.0, %v3831
  %v3833 = vpop.f32.mrf.mxu0
  %3834 = vdwg.mxu0
  %v3835 = vadd.f32 %v3764, %v3832
  %v3836 = vmul.f32 %v3835, %v2386
  %v3837 = vtanh.pop %v3836
  %v3838 = vmul.f32 %v3837, 0.5
  %v3839 = vadd.f32 %v3838, 0.5
  %v3840 = vsel %vm2385, %v3837, %v3839
  %3841 = vrot.lane.b32.xlu0 %v3840, 96
  %v3842 = vpop.permute.xlu0 %3841
  %3843 = vrot.lane.b32.xlu0 %v3840, 64
  %v3844 = vpop.permute.xlu0 %3843
  %3845 = vrot.lane.b32.xlu0 %v3840, 32
  %v3846 = vpop.permute.xlu0 %3845
  %v3847 = vmul.f32 %v3842, %v3603
  %v3848 = vmul.f32 %v3840, %v3844
  %v3849 = vadd.f32 %v3847, %v3848
  %v3850 = vtanh.pop %v3849
  %v3851 = vmul.f32 %v3846, %v3850
  %3852 = vmatprep.subr.mxu0 0.0
  %3853 = vmatpush1.msra.mxu0 %v2613
  %3854 = vmatprep.subr.mxu0 0.0
  %3855 = vmatpush1.msra.mxu0 %v2612
  %3856 = vmatprep.subr.mxu0 0.0
  %3857 = vmatpush1.msra.mxu0 %v2611
  %3858 = vmatprep.subr.mxu0 0.0
  %3859 = vmatpush1.msra.mxu0 %v2610
  %3860 = vmatprep.subr.mxu0 0.0
  %3861 = vmatpush1.msra.mxu0 %v2609
  %3862 = vmatprep.subr.mxu0 0.0
  %3863 = vmatpush1.msra.mxu0 %v2608
  %3864 = vmatprep.subr.mxu0 0.0
  %3865 = vmatpush1.msra.mxu0 %v2607
  %3866 = vmatprep.subr.mxu0 0.0
  %3867 = vmatpush1.msra.mxu0 %v2606
  %3868 = vmatprep.subr.mxu0 0.0
  %3869 = vmatpush1.msra.mxu0 %v2605
  %3870 = vmatprep.subr.mxu0 0.0
  %3871 = vmatpush1.msra.mxu0 %v2604
  %3872 = vmatprep.subr.mxu0 0.0
  %3873 = vmatpush1.msra.mxu0 %v2603
  %3874 = vmatprep.subr.mxu0 0.0
  %3875 = vmatpush1.msra.mxu0 %v2602
  %3876 = vmatprep.subr.mxu0 0.0
  %3877 = vmatpush1.msra.mxu0 %v2601
  %3878 = vmatprep.subr.mxu0 0.0
  %3879 = vmatpush1.msra.mxu0 %v2600
  %3880 = vmatprep.subr.mxu0 0.0
  %3881 = vmatpush1.msra.mxu0 %v2599
  %3882 = vmatprep.subr.mxu0 0.0
  %3883 = vmatpush1.msra.mxu0 %v2598
  %3884 = vmatprep.subr.mxu0 0.0
  %3885 = vmatpush2.msra.mxu0 0.0
  %3886 = vmatprep.subr.mxu0 0.0
  %3887 = vmatpush2.msra.mxu0 0.0
  %3888 = vmatprep.subr.mxu0 0.0
  %3889 = vmatpush2.msra.mxu0 0.0
  %3890 = vmatprep.subr.mxu0 0.0
  %3891 = vmatpush2.msra.mxu0 0.0
  %3892 = vmatprep.subr.mxu0 0.0
  %3893 = vmatpush2.msra.mxu0 0.0
  %3894 = vmatprep.subr.mxu0 0.0
  %3895 = vmatpush2.msra.mxu0 0.0
  %3896 = vmatprep.subr.mxu0 0.0
  %3897 = vmatpush2.msra.mxu0 0.0
  %3898 = vmatprep.subr.mxu0 0.0
  %3899 = vmatpush2.msra.mxu0 0.0
  %3900 = vmatprep.subr.mxu0 0.0
  %3901 = vmatpush2.msra.mxu0 0.0
  %3902 = vmatprep.subr.mxu0 0.0
  %3903 = vmatpush2.msra.mxu0 0.0
  %3904 = vmatprep.subr.mxu0 0.0
  %3905 = vmatpush2.msra.mxu0 0.0
  %3906 = vmatprep.subr.mxu0 0.0
  %3907 = vmatpush2.msra.mxu0 0.0
  %3908 = vmatprep.subr.mxu0 0.0
  %3909 = vmatpush2.msra.mxu0 0.0
  %3910 = vmatprep.subr.mxu0 0.0
  %3911 = vmatpush2.msra.mxu0 0.0
  %3912 = vmatprep.subr.mxu0 0.0
  %3913 = vmatpush2.msra.mxu0 0.0
  %3914 = vmatprep.subr.mxu0 0.0
  %3915 = vmatpush2.msra.mxu0 0.0
  %3916 = vmatprep.mubr.f32.mxu0 0.0
  %3917 = vmatmul.mubr.f32.gmra.mxu0 %v3762
  %v3918 = vpop.f32.mrf.mxu0
  %v3919 = vadd.f32 0.0, %v3918
  %v3920 = vpop.f32.mrf.mxu0
  %3921 = vdwg.mxu0
  %3922 = vmatprep.subr.mxu0 0.0
  %3923 = vmatpush1.msra.mxu0 %v2596
  %3924 = vmatprep.subr.mxu0 0.0
  %3925 = vmatpush1.msra.mxu0 %v2595
  %3926 = vmatprep.subr.mxu0 0.0
  %3927 = vmatpush1.msra.mxu0 %v2594
  %3928 = vmatprep.subr.mxu0 0.0
  %3929 = vmatpush1.msra.mxu0 %v2593
  %3930 = vmatprep.subr.mxu0 0.0
  %3931 = vmatpush1.msra.mxu0 %v2592
  %3932 = vmatprep.subr.mxu0 0.0
  %3933 = vmatpush1.msra.mxu0 %v2591
  %3934 = vmatprep.subr.mxu0 0.0
  %3935 = vmatpush1.msra.mxu0 %v2590
  %3936 = vmatprep.subr.mxu0 0.0
  %3937 = vmatpush1.msra.mxu0 %v2589
  %3938 = vmatprep.subr.mxu0 0.0
  %3939 = vmatpush1.msra.mxu0 %v2588
  %3940 = vmatprep.subr.mxu0 0.0
  %3941 = vmatpush1.msra.mxu0 %v2587
  %3942 = vmatprep.subr.mxu0 0.0
  %3943 = vmatpush1.msra.mxu0 %v2586
  %3944 = vmatprep.subr.mxu0 0.0
  %3945 = vmatpush1.msra.mxu0 %v2585
  %3946 = vmatprep.subr.mxu0 0.0
  %3947 = vmatpush1.msra.mxu0 %v2584
  %3948 = vmatprep.subr.mxu0 0.0
  %3949 = vmatpush1.msra.mxu0 %v2583
  %3950 = vmatprep.subr.mxu0 0.0
  %3951 = vmatpush1.msra.mxu0 %v2582
  %3952 = vmatprep.subr.mxu0 0.0
  %3953 = vmatpush1.msra.mxu0 %v2581
  %3954 = vmatprep.subr.mxu0 0.0
  %3955 = vmatpush2.msra.mxu0 0.0
  %3956 = vmatprep.subr.mxu0 0.0
  %3957 = vmatpush2.msra.mxu0 0.0
  %3958 = vmatprep.subr.mxu0 0.0
  %3959 = vmatpush2.msra.mxu0 0.0
  %3960 = vmatprep.subr.mxu0 0.0
  %3961 = vmatpush2.msra.mxu0 0.0
  %3962 = vmatprep.subr.mxu0 0.0
  %3963 = vmatpush2.msra.mxu0 0.0
  %3964 = vmatprep.subr.mxu0 0.0
  %3965 = vmatpush2.msra.mxu0 0.0
  %3966 = vmatprep.subr.mxu0 0.0
  %3967 = vmatpush2.msra.mxu0 0.0
  %3968 = vmatprep.subr.mxu0 0.0
  %3969 = vmatpush2.msra.mxu0 0.0
  %3970 = vmatprep.subr.mxu0 0.0
  %3971 = vmatpush2.msra.mxu0 0.0
  %3972 = vmatprep.subr.mxu0 0.0
  %3973 = vmatpush2.msra.mxu0 0.0
  %3974 = vmatprep.subr.mxu0 0.0
  %3975 = vmatpush2.msra.mxu0 0.0
  %3976 = vmatprep.subr.mxu0 0.0
  %3977 = vmatpush2.msra.mxu0 0.0
  %3978 = vmatprep.subr.mxu0 0.0
  %3979 = vmatpush2.msra.mxu0 0.0
  %3980 = vmatprep.subr.mxu0 0.0
  %3981 = vmatpush2.msra.mxu0 0.0
  %3982 = vmatprep.subr.mxu0 0.0
  %3983 = vmatpush2.msra.mxu0 0.0
  %3984 = vmatprep.subr.mxu0 0.0
  %3985 = vmatpush2.msra.mxu0 0.0
  %3986 = vmatprep.mubr.f32.mxu0 0.0
  %3987 = vmatmul.mubr.f32.gmra.mxu0 %v3605
  %v3988 = vpop.f32.mrf.mxu0
  %v3989 = vadd.f32 %v3919, %v3988
  %v3990 = vpop.f32.mrf.mxu0
  %3991 = vdwg.mxu0
  %v3992 = vadd.f32 %v3989, %v2760
  %v3993 = vmul.f32 %v3992, %v2386
  %v3994 = vtanh.pop %v3993
  %v3995 = vmul.f32 %v3994, 0.5
  %v3996 = vadd.f32 %v3995, 0.5
  %v3997 = vsel %vm2385, %v3994, %v3996
  %3998 = vrot.lane.b32.xlu0 %v3997, 96
  %v3999 = vpop.permute.xlu0 %3998
  %4000 = vrot.lane.b32.xlu0 %v3997, 64
  %v4001 = vpop.permute.xlu0 %4000
  %4002 = vrot.lane.b32.xlu0 %v3997, 32
  %v4003 = vpop.permute.xlu0 %4002
  %v4004 = vmul.f32 %v3999, %v3760
  %v4005 = vmul.f32 %v3997, %v4001
  %v4006 = vadd.f32 %v4004, %v4005
  %v4007 = vtanh.pop %v4006
  %v4008 = vmul.f32 %v4003, %v4007
  %v4009 = vld [vmem:[#allocation2 + $0x38] sm:$0xff]
  %v4010 = vadd.f32 %v4009, %v2227
  %4011 = vmatprep.subr.mxu0 0.0
  %4012 = vmatpush1.msra.mxu0 %v2404
  %4013 = vmatprep.subr.mxu0 0.0
  %4014 = vmatpush1.msra.mxu0 %v2403
  %4015 = vmatprep.subr.mxu0 0.0
  %4016 = vmatpush1.msra.mxu0 %v2402
  %4017 = vmatprep.subr.mxu0 0.0
  %4018 = vmatpush1.msra.mxu0 %v2401
  %4019 = vmatprep.subr.mxu0 0.0
  %4020 = vmatpush1.msra.mxu0 %v2400
  %4021 = vmatprep.subr.mxu0 0.0
  %4022 = vmatpush1.msra.mxu0 %v2399
  %4023 = vmatprep.subr.mxu0 0.0
  %4024 = vmatpush1.msra.mxu0 %v2398
  %4025 = vmatprep.subr.mxu0 0.0
  %4026 = vmatpush1.msra.mxu0 %v2397
  %4027 = vmatprep.subr.mxu0 0.0
  %4028 = vmatpush1.msra.mxu0 %v2396
  %4029 = vmatprep.subr.mxu0 0.0
  %4030 = vmatpush1.msra.mxu0 %v2395
  %4031 = vmatprep.subr.mxu0 0.0
  %4032 = vmatpush1.msra.mxu0 %v2394
  %4033 = vmatprep.subr.mxu0 0.0
  %4034 = vmatpush1.msra.mxu0 %v2393
  %4035 = vmatprep.subr.mxu0 0.0
  %4036 = vmatpush1.msra.mxu0 %v2392
  %4037 = vmatprep.subr.mxu0 0.0
  %4038 = vmatpush1.msra.mxu0 %v2391
  %4039 = vmatprep.subr.mxu0 0.0
  %4040 = vmatpush1.msra.mxu0 %v2390
  %4041 = vmatprep.subr.mxu0 0.0
  %4042 = vmatpush1.msra.mxu0 %v2389
  %4043 = vmatprep.subr.mxu0 0.0
  %4044 = vmatpush2.msra.mxu0 0.0
  %4045 = vmatprep.subr.mxu0 0.0
  %4046 = vmatpush2.msra.mxu0 0.0
  %4047 = vmatprep.subr.mxu0 0.0
  %4048 = vmatpush2.msra.mxu0 0.0
  %4049 = vmatprep.subr.mxu0 0.0
  %4050 = vmatpush2.msra.mxu0 0.0
  %4051 = vmatprep.subr.mxu0 0.0
  %4052 = vmatpush2.msra.mxu0 0.0
  %4053 = vmatprep.subr.mxu0 0.0
  %4054 = vmatpush2.msra.mxu0 0.0
  %4055 = vmatprep.subr.mxu0 0.0
  %4056 = vmatpush2.msra.mxu0 0.0
  %4057 = vmatprep.subr.mxu0 0.0
  %4058 = vmatpush2.msra.mxu0 0.0
  %4059 = vmatprep.subr.mxu0 0.0
  %4060 = vmatpush2.msra.mxu0 0.0
  %4061 = vmatprep.subr.mxu0 0.0
  %4062 = vmatpush2.msra.mxu0 0.0
  %4063 = vmatprep.subr.mxu0 0.0
  %4064 = vmatpush2.msra.mxu0 0.0
  %4065 = vmatprep.subr.mxu0 0.0
  %4066 = vmatpush2.msra.mxu0 0.0
  %4067 = vmatprep.subr.mxu0 0.0
  %4068 = vmatpush2.msra.mxu0 0.0
  %4069 = vmatprep.subr.mxu0 0.0
  %4070 = vmatpush2.msra.mxu0 0.0
  %4071 = vmatprep.subr.mxu0 0.0
  %4072 = vmatpush2.msra.mxu0 0.0
  %4073 = vmatprep.subr.mxu0 0.0
  %4074 = vmatpush2.msra.mxu0 0.0
  %4075 = vmatprep.mubr.f32.mxu0 0.0
  %4076 = vmatmul.mubr.f32.gmra.mxu0 %v3851
  %v4077 = vpop.f32.mrf.mxu0
  %v4078 = vadd.f32 0.0, %v4077
  %v4079 = vpop.f32.mrf.mxu0
  %4080 = vdwg.mxu0
  %v4081 = vadd.f32 %v4010, %v4078
  %v4082 = vmul.f32 %v4081, %v2386
  %v4083 = vtanh.pop %v4082
  %v4084 = vmul.f32 %v4083, 0.5
  %v4085 = vadd.f32 %v4084, 0.5
  %v4086 = vsel %vm2385, %v4083, %v4085
  %4087 = vrot.lane.b32.xlu0 %v4086, 96
  %v4088 = vpop.permute.xlu0 %4087
  %4089 = vrot.lane.b32.xlu0 %v4086, 64
  %v4090 = vpop.permute.xlu0 %4089
  %4091 = vrot.lane.b32.xlu0 %v4086, 32
  %v4092 = vpop.permute.xlu0 %4091
  %v4093 = vmul.f32 %v4088, %v3849
  %v4094 = vmul.f32 %v4086, %v4090
  %v4095 = vadd.f32 %v4093, %v4094
  %v4096 = vtanh.pop %v4095
  %v4097 = vmul.f32 %v4092, %v4096
  %4098 = vmatprep.subr.mxu0 0.0
  %4099 = vmatpush1.msra.mxu0 %v2613
  %4100 = vmatprep.subr.mxu0 0.0
  %4101 = vmatpush1.msra.mxu0 %v2612
  %4102 = vmatprep.subr.mxu0 0.0
  %4103 = vmatpush1.msra.mxu0 %v2611
  %4104 = vmatprep.subr.mxu0 0.0
  %4105 = vmatpush1.msra.mxu0 %v2610
  %4106 = vmatprep.subr.mxu0 0.0
  %4107 = vmatpush1.msra.mxu0 %v2609
  %4108 = vmatprep.subr.mxu0 0.0
  %4109 = vmatpush1.msra.mxu0 %v2608
  %4110 = vmatprep.subr.mxu0 0.0
  %4111 = vmatpush1.msra.mxu0 %v2607
  %4112 = vmatprep.subr.mxu0 0.0
  %4113 = vmatpush1.msra.mxu0 %v2606
  %4114 = vmatprep.subr.mxu0 0.0
  %4115 = vmatpush1.msra.mxu0 %v2605
  %4116 = vmatprep.subr.mxu0 0.0
  %4117 = vmatpush1.msra.mxu0 %v2604
  %4118 = vmatprep.subr.mxu0 0.0
  %4119 = vmatpush1.msra.mxu0 %v2603
  %4120 = vmatprep.subr.mxu0 0.0
  %4121 = vmatpush1.msra.mxu0 %v2602
  %4122 = vmatprep.subr.mxu0 0.0
  %4123 = vmatpush1.msra.mxu0 %v2601
  %4124 = vmatprep.subr.mxu0 0.0
  %4125 = vmatpush1.msra.mxu0 %v2600
  %4126 = vmatprep.subr.mxu0 0.0
  %4127 = vmatpush1.msra.mxu0 %v2599
  %4128 = vmatprep.subr.mxu0 0.0
  %4129 = vmatpush1.msra.mxu0 %v2598
  %4130 = vmatprep.subr.mxu0 0.0
  %4131 = vmatpush2.msra.mxu0 0.0
  %4132 = vmatprep.subr.mxu0 0.0
  %4133 = vmatpush2.msra.mxu0 0.0
  %4134 = vmatprep.subr.mxu0 0.0
  %4135 = vmatpush2.msra.mxu0 0.0
  %4136 = vmatprep.subr.mxu0 0.0
  %4137 = vmatpush2.msra.mxu0 0.0
  %4138 = vmatprep.subr.mxu0 0.0
  %4139 = vmatpush2.msra.mxu0 0.0
  %4140 = vmatprep.subr.mxu0 0.0
  %4141 = vmatpush2.msra.mxu0 0.0
  %4142 = vmatprep.subr.mxu0 0.0
  %4143 = vmatpush2.msra.mxu0 0.0
  %4144 = vmatprep.subr.mxu0 0.0
  %4145 = vmatpush2.msra.mxu0 0.0
  %4146 = vmatprep.subr.mxu0 0.0
  %4147 = vmatpush2.msra.mxu0 0.0
  %4148 = vmatprep.subr.mxu0 0.0
  %4149 = vmatpush2.msra.mxu0 0.0
  %4150 = vmatprep.subr.mxu0 0.0
  %4151 = vmatpush2.msra.mxu0 0.0
  %4152 = vmatprep.subr.mxu0 0.0
  %4153 = vmatpush2.msra.mxu0 0.0
  %4154 = vmatprep.subr.mxu0 0.0
  %4155 = vmatpush2.msra.mxu0 0.0
  %4156 = vmatprep.subr.mxu0 0.0
  %4157 = vmatpush2.msra.mxu0 0.0
  %4158 = vmatprep.subr.mxu0 0.0
  %4159 = vmatpush2.msra.mxu0 0.0
  %4160 = vmatprep.subr.mxu0 0.0
  %4161 = vmatpush2.msra.mxu0 0.0
  %4162 = vmatprep.mubr.f32.mxu0 0.0
  %4163 = vmatmul.mubr.f32.gmra.mxu0 %v4008
  %v4164 = vpop.f32.mrf.mxu0
  %v4165 = vadd.f32 0.0, %v4164
  %v4166 = vpop.f32.mrf.mxu0
  %4167 = vdwg.mxu0
  %4168 = vmatprep.subr.mxu0 0.0
  %4169 = vmatpush1.msra.mxu0 %v2596
  %4170 = vmatprep.subr.mxu0 0.0
  %4171 = vmatpush1.msra.mxu0 %v2595
  %4172 = vmatprep.subr.mxu0 0.0
  %4173 = vmatpush1.msra.mxu0 %v2594
  %4174 = vmatprep.subr.mxu0 0.0
  %4175 = vmatpush1.msra.mxu0 %v2593
  %4176 = vmatprep.subr.mxu0 0.0
  %4177 = vmatpush1.msra.mxu0 %v2592
  %4178 = vmatprep.subr.mxu0 0.0
  %4179 = vmatpush1.msra.mxu0 %v2591
  %4180 = vmatprep.subr.mxu0 0.0
  %4181 = vmatpush1.msra.mxu0 %v2590
  %4182 = vmatprep.subr.mxu0 0.0
  %4183 = vmatpush1.msra.mxu0 %v2589
  %4184 = vmatprep.subr.mxu0 0.0
  %4185 = vmatpush1.msra.mxu0 %v2588
  %4186 = vmatprep.subr.mxu0 0.0
  %4187 = vmatpush1.msra.mxu0 %v2587
  %4188 = vmatprep.subr.mxu0 0.0
  %4189 = vmatpush1.msra.mxu0 %v2586
  %4190 = vmatprep.subr.mxu0 0.0
  %4191 = vmatpush1.msra.mxu0 %v2585
  %4192 = vmatprep.subr.mxu0 0.0
  %4193 = vmatpush1.msra.mxu0 %v2584
  %4194 = vmatprep.subr.mxu0 0.0
  %4195 = vmatpush1.msra.mxu0 %v2583
  %4196 = vmatprep.subr.mxu0 0.0
  %4197 = vmatpush1.msra.mxu0 %v2582
  %4198 = vmatprep.subr.mxu0 0.0
  %4199 = vmatpush1.msra.mxu0 %v2581
  %4200 = vmatprep.subr.mxu0 0.0
  %4201 = vmatpush2.msra.mxu0 0.0
  %4202 = vmatprep.subr.mxu0 0.0
  %4203 = vmatpush2.msra.mxu0 0.0
  %4204 = vmatprep.subr.mxu0 0.0
  %4205 = vmatpush2.msra.mxu0 0.0
  %4206 = vmatprep.subr.mxu0 0.0
  %4207 = vmatpush2.msra.mxu0 0.0
  %4208 = vmatprep.subr.mxu0 0.0
  %4209 = vmatpush2.msra.mxu0 0.0
  %4210 = vmatprep.subr.mxu0 0.0
  %4211 = vmatpush2.msra.mxu0 0.0
  %4212 = vmatprep.subr.mxu0 0.0
  %4213 = vmatpush2.msra.mxu0 0.0
  %4214 = vmatprep.subr.mxu0 0.0
  %4215 = vmatpush2.msra.mxu0 0.0
  %4216 = vmatprep.subr.mxu0 0.0
  %4217 = vmatpush2.msra.mxu0 0.0
  %4218 = vmatprep.subr.mxu0 0.0
  %4219 = vmatpush2.msra.mxu0 0.0
  %4220 = vmatprep.subr.mxu0 0.0
  %4221 = vmatpush2.msra.mxu0 0.0
  %4222 = vmatprep.subr.mxu0 0.0
  %4223 = vmatpush2.msra.mxu0 0.0
  %4224 = vmatprep.subr.mxu0 0.0
  %4225 = vmatpush2.msra.mxu0 0.0
  %4226 = vmatprep.subr.mxu0 0.0
  %4227 = vmatpush2.msra.mxu0 0.0
  %4228 = vmatprep.subr.mxu0 0.0
  %4229 = vmatpush2.msra.mxu0 0.0
  %4230 = vmatprep.subr.mxu0 0.0
  %4231 = vmatpush2.msra.mxu0 0.0
  %4232 = vmatprep.mubr.f32.mxu0 0.0
  %4233 = vmatmul.mubr.f32.gmra.mxu0 %v3851
  %v4234 = vpop.f32.mrf.mxu0
  %v4235 = vadd.f32 %v4165, %v4234
  %v4236 = vpop.f32.mrf.mxu0
  %4237 = vdwg.mxu0
  %v4238 = vadd.f32 %v4235, %v2760
  %v4239 = vmul.f32 %v4238, %v2386
  %v4240 = vtanh.pop %v4239
  %v4241 = vmul.f32 %v4240, 0.5
  %v4242 = vadd.f32 %v4241, 0.5
  %v4243 = vsel %vm2385, %v4240, %v4242
  %4244 = vrot.lane.b32.xlu0 %v4243, 96
  %v4245 = vpop.permute.xlu0 %4244
  %4246 = vrot.lane.b32.xlu0 %v4243, 64
  %v4247 = vpop.permute.xlu0 %4246
  %4248 = vrot.lane.b32.xlu0 %v4243, 32
  %v4249 = vpop.permute.xlu0 %4248
  %v4250 = vmul.f32 %v4245, %v4006
  %v4251 = vmul.f32 %v4243, %v4247
  %v4252 = vadd.f32 %v4250, %v4251
  %v4253 = vtanh.pop %v4252
  %v4254 = vmul.f32 %v4249, %v4253
  %4255 = vmatprep.subr.mxu0 0.0
  %4256 = vmatpush1.msra.mxu0 %v2613
  %4257 = vmatprep.subr.mxu0 0.0
  %4258 = vmatpush1.msra.mxu0 %v2612
  %4259 = vmatprep.subr.mxu0 0.0
  %4260 = vmatpush1.msra.mxu0 %v2611
  %4261 = vmatprep.subr.mxu0 0.0
  %4262 = vmatpush1.msra.mxu0 %v2610
  %4263 = vmatprep.subr.mxu0 0.0
  %4264 = vmatpush1.msra.mxu0 %v2609
  %4265 = vmatprep.subr.mxu0 0.0
  %4266 = vmatpush1.msra.mxu0 %v2608
  %4267 = vmatprep.subr.mxu0 0.0
  %4268 = vmatpush1.msra.mxu0 %v2607
  %4269 = vmatprep.subr.mxu0 0.0
  %4270 = vmatpush1.msra.mxu0 %v2606
  %4271 = vmatprep.subr.mxu0 0.0
  %4272 = vmatpush1.msra.mxu0 %v2605
  %4273 = vmatprep.subr.mxu0 0.0
  %4274 = vmatpush1.msra.mxu0 %v2604
  %4275 = vmatprep.subr.mxu0 0.0
  %4276 = vmatpush1.msra.mxu0 %v2603
  %4277 = vmatprep.subr.mxu0 0.0
  %4278 = vmatpush1.msra.mxu0 %v2602
  %4279 = vmatprep.subr.mxu0 0.0
  %4280 = vmatpush1.msra.mxu0 %v2601
  %4281 = vmatprep.subr.mxu0 0.0
  %4282 = vmatpush1.msra.mxu0 %v2600
  %4283 = vmatprep.subr.mxu0 0.0
  %4284 = vmatpush1.msra.mxu0 %v2599
  %4285 = vmatprep.subr.mxu0 0.0
  %4286 = vmatpush1.msra.mxu0 %v2598
  %4287 = vmatprep.subr.mxu0 0.0
  %4288 = vmatpush2.msra.mxu0 0.0
  %4289 = vmatprep.subr.mxu0 0.0
  %4290 = vmatpush2.msra.mxu0 0.0
  %4291 = vmatprep.subr.mxu0 0.0
  %4292 = vmatpush2.msra.mxu0 0.0
  %4293 = vmatprep.subr.mxu0 0.0
  %4294 = vmatpush2.msra.mxu0 0.0
  %4295 = vmatprep.subr.mxu0 0.0
  %4296 = vmatpush2.msra.mxu0 0.0
  %4297 = vmatprep.subr.mxu0 0.0
  %4298 = vmatpush2.msra.mxu0 0.0
  %4299 = vmatprep.subr.mxu0 0.0
  %4300 = vmatpush2.msra.mxu0 0.0
  %4301 = vmatprep.subr.mxu0 0.0
  %4302 = vmatpush2.msra.mxu0 0.0
  %4303 = vmatprep.subr.mxu0 0.0
  %4304 = vmatpush2.msra.mxu0 0.0
  %4305 = vmatprep.subr.mxu0 0.0
  %4306 = vmatpush2.msra.mxu0 0.0
  %4307 = vmatprep.subr.mxu0 0.0
  %4308 = vmatpush2.msra.mxu0 0.0
  %4309 = vmatprep.subr.mxu0 0.0
  %4310 = vmatpush2.msra.mxu0 0.0
  %4311 = vmatprep.subr.mxu0 0.0
  %4312 = vmatpush2.msra.mxu0 0.0
  %4313 = vmatprep.subr.mxu0 0.0
  %4314 = vmatpush2.msra.mxu0 0.0
  %4315 = vmatprep.subr.mxu0 0.0
  %4316 = vmatpush2.msra.mxu0 0.0
  %4317 = vmatprep.subr.mxu0 0.0
  %4318 = vmatpush2.msra.mxu0 0.0
  %4319 = vmatprep.mubr.f32.mxu0 0.0
  %4320 = vmatmul.mubr.f32.gmra.mxu0 %v4254
  %v4321 = vpop.f32.mrf.mxu0
  %v4322 = vadd.f32 0.0, %v4321
  %v4323 = vpop.f32.mrf.mxu0
  %4324 = vdwg.mxu0
  %4325 = vmatprep.subr.mxu0 0.0
  %4326 = vmatpush1.msra.mxu0 %v2596
  %4327 = vmatprep.subr.mxu0 0.0
  %4328 = vmatpush1.msra.mxu0 %v2595
  %4329 = vmatprep.subr.mxu0 0.0
  %4330 = vmatpush1.msra.mxu0 %v2594
  %4331 = vmatprep.subr.mxu0 0.0
  %4332 = vmatpush1.msra.mxu0 %v2593
  %4333 = vmatprep.subr.mxu0 0.0
  %4334 = vmatpush1.msra.mxu0 %v2592
  %4335 = vmatprep.subr.mxu0 0.0
  %4336 = vmatpush1.msra.mxu0 %v2591
  %4337 = vmatprep.subr.mxu0 0.0
  %4338 = vmatpush1.msra.mxu0 %v2590
  %4339 = vmatprep.subr.mxu0 0.0
  %4340 = vmatpush1.msra.mxu0 %v2589
  %4341 = vmatprep.subr.mxu0 0.0
  %4342 = vmatpush1.msra.mxu0 %v2588
  %4343 = vmatprep.subr.mxu0 0.0
  %4344 = vmatpush1.msra.mxu0 %v2587
  %4345 = vmatprep.subr.mxu0 0.0
  %4346 = vmatpush1.msra.mxu0 %v2586
  %4347 = vmatprep.subr.mxu0 0.0
  %4348 = vmatpush1.msra.mxu0 %v2585
  %4349 = vmatprep.subr.mxu0 0.0
  %4350 = vmatpush1.msra.mxu0 %v2584
  %4351 = vmatprep.subr.mxu0 0.0
  %4352 = vmatpush1.msra.mxu0 %v2583
  %4353 = vmatprep.subr.mxu0 0.0
  %4354 = vmatpush1.msra.mxu0 %v2582
  %4355 = vmatprep.subr.mxu0 0.0
  %4356 = vmatpush1.msra.mxu0 %v2581
  %4357 = vmatprep.subr.mxu0 0.0
  %4358 = vmatpush2.msra.mxu0 0.0
  %4359 = vmatprep.subr.mxu0 0.0
  %4360 = vmatpush2.msra.mxu0 0.0
  %4361 = vmatprep.subr.mxu0 0.0
  %4362 = vmatpush2.msra.mxu0 0.0
  %4363 = vmatprep.subr.mxu0 0.0
  %4364 = vmatpush2.msra.mxu0 0.0
  %4365 = vmatprep.subr.mxu0 0.0
  %4366 = vmatpush2.msra.mxu0 0.0
  %4367 = vmatprep.subr.mxu0 0.0
  %4368 = vmatpush2.msra.mxu0 0.0
  %4369 = vmatprep.subr.mxu0 0.0
  %4370 = vmatpush2.msra.mxu0 0.0
  %4371 = vmatprep.subr.mxu0 0.0
  %4372 = vmatpush2.msra.mxu0 0.0
  %4373 = vmatprep.subr.mxu0 0.0
  %4374 = vmatpush2.msra.mxu0 0.0
  %4375 = vmatprep.subr.mxu0 0.0
  %4376 = vmatpush2.msra.mxu0 0.0
  %4377 = vmatprep.subr.mxu0 0.0
  %4378 = vmatpush2.msra.mxu0 0.0
  %4379 = vmatprep.subr.mxu0 0.0
  %4380 = vmatpush2.msra.mxu0 0.0
  %4381 = vmatprep.subr.mxu0 0.0
  %4382 = vmatpush2.msra.mxu0 0.0
  %4383 = vmatprep.subr.mxu0 0.0
  %4384 = vmatpush2.msra.mxu0 0.0
  %4385 = vmatprep.subr.mxu0 0.0
  %4386 = vmatpush2.msra.mxu0 0.0
  %4387 = vmatprep.subr.mxu0 0.0
  %4388 = vmatpush2.msra.mxu0 0.0
  %4389 = vmatprep.mubr.f32.mxu0 0.0
  %4390 = vmatmul.mubr.f32.gmra.mxu0 %v4097
  %v4391 = vpop.f32.mrf.mxu0
  %v4392 = vadd.f32 %v4322, %v4391
  %v4393 = vpop.f32.mrf.mxu0
  %4394 = vdwg.mxu0
  %v4395 = vadd.f32 %v4392, %v2760
  %v4396 = vmul.f32 %v4395, %v2386
  %v4397 = vtanh.pop %v4396
  %v4398 = vmul.f32 %v4397, 0.5
  %v4399 = vadd.f32 %v4398, 0.5
  %v4400 = vsel %vm2385, %v4397, %v4399
  %4401 = vrot.lane.b32.xlu0 %v4400, 96
  %v4402 = vpop.permute.xlu0 %4401
  %4403 = vrot.lane.b32.xlu0 %v4400, 64
  %v4404 = vpop.permute.xlu0 %4403
  %4405 = vrot.lane.b32.xlu0 %v4400, 32
  %v4406 = vpop.permute.xlu0 %4405
  %v4407 = vmul.f32 %v4402, %v4252
  %v4408 = vmul.f32 %v4400, %v4404
  %v4409 = vadd.f32 %v4407, %v4408
  %v4410 = vtanh.pop %v4409
  %v4411 = vmul.f32 %v4406, %v4410
  %v4412 = vld [vmem:[%s20] sm:$0xff]
  %v4413 = vld [vmem:[%s20 + $0x8] sm:$0xff]
  %v4414 = vld [vmem:[%s20 + $0x10] sm:$0xff]
  %v4415 = vld [vmem:[%s20 + $0x18] sm:$0xff]
  %v4416 = vld [vmem:[%s20 + $0x20] sm:$0xff]
  %v4417 = vld [vmem:[%s20 + $0x28] sm:$0xff]
  %v4418 = vld [vmem:[%s20 + $0x30] sm:$0xff]
  %v4419 = vld [vmem:[%s20 + $0x38] sm:$0xff]
  %v4420 = vld [vmem:[%s20 + $0x40] sm:$0xff]
  %v4421 = vld [vmem:[%s20 + $0x48] sm:$0xff]
  %v4422 = vld [vmem:[%s20 + $0x50] sm:$0xff]
  %v4423 = vld [vmem:[%s20 + $0x58] sm:$0xff]
  %v4424 = vld [vmem:[%s20 + $0x60] sm:$0xff]
  %v4425 = vld [vmem:[%s20 + $0x68] sm:$0xff]
  %v4426 = vld [vmem:[%s20 + $0x70] sm:$0xff]
  %v4427 = vld [vmem:[%s20 + $0x78] sm:$0xff]
  %v4428 = vld [vmem:[%s21] sm:$0x1]
  %v4430 = vlaneseq
  %v4431 = vshrl.u32 %v4430, 7
  %v4432 = vsub.s32 0, %v4431
  %v4433 = vrot.slane %v4428, %v4432
  %4435 = vmatprep.subr.mxu0 0.0
  %4436 = vmatpush1.msra.mxu0 %v4427
  %4437 = vmatprep.subr.mxu0 0.0
  %4438 = vmatpush1.msra.mxu0 %v4426
  %4439 = vmatprep.subr.mxu0 0.0
  %4440 = vmatpush1.msra.mxu0 %v4425
  %4441 = vmatprep.subr.mxu0 0.0
  %4442 = vmatpush1.msra.mxu0 %v4424
  %4443 = vmatprep.subr.mxu0 0.0
  %4444 = vmatpush1.msra.mxu0 %v4423
  %4445 = vmatprep.subr.mxu0 0.0
  %4446 = vmatpush1.msra.mxu0 %v4422
  %4447 = vmatprep.subr.mxu0 0.0
  %4448 = vmatpush1.msra.mxu0 %v4421
  %4449 = vmatprep.subr.mxu0 0.0
  %4450 = vmatpush1.msra.mxu0 %v4420
  %4451 = vmatprep.subr.mxu0 0.0
  %4452 = vmatpush1.msra.mxu0 %v4419
  %4453 = vmatprep.subr.mxu0 0.0
  %4454 = vmatpush1.msra.mxu0 %v4418
  %4455 = vmatprep.subr.mxu0 0.0
  %4456 = vmatpush1.msra.mxu0 %v4417
  %4457 = vmatprep.subr.mxu0 0.0
  %4458 = vmatpush1.msra.mxu0 %v4416
  %4459 = vmatprep.subr.mxu0 0.0
  %4460 = vmatpush1.msra.mxu0 %v4415
  %4461 = vmatprep.subr.mxu0 0.0
  %4462 = vmatpush1.msra.mxu0 %v4414
  %4463 = vmatprep.subr.mxu0 0.0
  %4464 = vmatpush1.msra.mxu0 %v4413
  %4465 = vmatprep.subr.mxu0 0.0
  %4466 = vmatpush1.msra.mxu0 %v4412
  %4467 = vmatprep.subr.mxu0 0.0
  %4468 = vmatpush2.msra.mxu0 0.0
  %4469 = vmatprep.subr.mxu0 0.0
  %4470 = vmatpush2.msra.mxu0 0.0
  %4471 = vmatprep.subr.mxu0 0.0
  %4472 = vmatpush2.msra.mxu0 0.0
  %4473 = vmatprep.subr.mxu0 0.0
  %4474 = vmatpush2.msra.mxu0 0.0
  %4475 = vmatprep.subr.mxu0 0.0
  %4476 = vmatpush2.msra.mxu0 0.0
  %4477 = vmatprep.subr.mxu0 0.0
  %4478 = vmatpush2.msra.mxu0 0.0
  %4479 = vmatprep.subr.mxu0 0.0
  %4480 = vmatpush2.msra.mxu0 0.0
  %4481 = vmatprep.subr.mxu0 0.0
  %4482 = vmatpush2.msra.mxu0 0.0
  %4483 = vmatprep.subr.mxu0 0.0
  %4484 = vmatpush2.msra.mxu0 0.0
  %4485 = vmatprep.subr.mxu0 0.0
  %4486 = vmatpush2.msra.mxu0 0.0
  %4487 = vmatprep.subr.mxu0 0.0
  %4488 = vmatpush2.msra.mxu0 0.0
  %4489 = vmatprep.subr.mxu0 0.0
  %4490 = vmatpush2.msra.mxu0 0.0
  %4491 = vmatprep.subr.mxu0 0.0
  %4492 = vmatpush2.msra.mxu0 0.0
  %4493 = vmatprep.subr.mxu0 0.0
  %4494 = vmatpush2.msra.mxu0 0.0
  %4495 = vmatprep.subr.mxu0 0.0
  %4496 = vmatpush2.msra.mxu0 0.0
  %4497 = vmatprep.subr.mxu0 0.0
  %4498 = vmatpush2.msra.mxu0 0.0
  %4499 = vmatprep.mubr.f32.mxu0 0.0
  %4500 = vmatmul.mubr.f32.gmra.mxu0 %v4411
  %v4501 = vpop.f32.mrf.mxu0
  %v4502 = vadd.f32 %v4433, %v4501
  %v4503 = vpop.f32.mrf.mxu0
  %4504 = vdwg.mxu0
  %4505 = vst [vmem:[%s22] sm:$0xff] %v4502
  // Predicated region
  $region90: #{gat_lstm_forward.1} parent=0 // pred_check
    _
  $region91: #{gat_lstm_forward.1} parent=0 // pred_check_branch
    %4507 = sbr.rel (0) target = $region93
  $region92: #{gat_lstm_forward.1} parent=0 // pred_region
    _
  $region93: #{gat_lstm_forward.1} parent=0 // pred_fallthru
    _
  // Predicated region
  $region94: #{gat_lstm_forward.1} parent=0 // pred_check
    _
  $region95: #{gat_lstm_forward.1} parent=0 // pred_check_branch
    %4509 = sbr.rel (0) target = $region97
  $region96: #{gat_lstm_forward.1} parent=0 // pred_region
    _
  $region97: #{gat_lstm_forward.1} parent=0 // pred_fallthru
    _

</llo_original>
